<compile_context>
chip_gen: v7x
topology: tpu7x:2x2x1
jax: 0.10.0
libtpu: 0.0.40
codegen_flags: <defaults>
</compile_context>

<pallas_src>
import math

import jax
import jax.numpy as jnp
from jax.experimental import pallas as pl
from jax.experimental.pallas import tpu as pltpu


def _make_kernel(head_count, dim_per_head, has_mask):
    H, D = head_count, dim_per_head

    def kernel(*refs):
        if has_mask:
            (key_ref, val_ref, qry_ref, mask_ref,
             wk_ref, bk_ref, wv_ref, bv_ref, wq_ref, bq_ref,
             st_ref, sn_ref, stT_ref, snT_ref, scal_ref,
             ctx_ref, attn_ref, qs_scr, ks_scr, vs_scr) = refs
        else:
            (key_ref, val_ref, qry_ref,
             wk_ref, bk_ref, wv_ref, bv_ref, wq_ref, bq_ref,
             st_ref, sn_ref, stT_ref, snT_ref, scal_ref,
             ctx_ref, attn_ref, qs_scr, ks_scr, vs_scr) = refs
            mask_ref = None

        h_idx = pl.program_id(1)

        # ---- Projection pass: runs once per batch (first head step), cached in VMEM. ----
        @pl.when(h_idx == 0)
        def _():
            exp_sk = scal_ref[0]      # exp(scale) of linear_keys
            exp_sv = scal_ref[1]      # exp(scale) of linear_values
            exp_sq = scal_ref[2]      # exp(scale) of linear_query
            inv_scale = scal_ref[3]   # 1 / attention-scale parameter
            st = st_ref[...]          # (M, H) one-hot of each head's time column
            sn = sn_ref[...]          # (M, H) one-hot of each head's narrow columns
            stT = stT_ref[...]        # (H, M)
            snT = snT_ref[...]        # (H, M)

            def lorentz_linear(x, w_ref, b_ref, exp_s):
                # y = x W + b  (lane-dense MXU matmul, f32 accumulate)
                y = jnp.dot(x, w_ref[...], preferred_element_type=jnp.float32)
                y = y + b_ref[...].astype(jnp.float32)
                # Per-head time / ||narrow||^2 via selector matmuls (MXU, no XLU passes).
                t_raw = jnp.dot(y, st, preferred_element_type=jnp.float32)      # (L, H)
                sq = jnp.dot(y * y, sn, preferred_element_type=jnp.float32)     # (L, H)
                time = jax.nn.sigmoid(t_raw) * exp_s + 1.1
                lsq = jnp.sqrt((time * time - 1.0) / jnp.maximum(sq, 1e-8))
                time_full = jnp.dot(time, stT, preferred_element_type=jnp.float32)  # (L, M)
                lsq_full = jnp.dot(lsq, snT, preferred_element_type=jnp.float32)    # (L, M)
                return time_full + y * lsq_full

            kk = lorentz_linear(key_ref[0], wk_ref, bk_ref, exp_sk)   # (Lk, M)
            vv = lorentz_linear(val_ref[0], wv_ref, bv_ref, exp_sv)   # (Lk, M)
            qq = lorentz_linear(qry_ref[0], wq_ref, bq_ref, exp_sq)   # (Lq, M)

            # Fold Lorentz signature (-,+,+,...) and the softmax-invariant 2/scale factor
            # into q once, on the lane-dense (Lq, M) slab.
            time_cols = jnp.sum(stT, axis=0, keepdims=True)           # (1, M): 1 on time cols
            qq = qq * ((1.0 - 2.0 * time_cols) * (2.0 * inv_scale))

            # Head-major staging so later head steps use dynamic *leading*-dim reads only.
            for i in range(H):
                lo = i * D
                qs_scr[i] = qq[:, lo:lo + D]
                ks_scr[i] = kk[:, lo:lo + D]
                vs_scr[i] = vv[:, lo:lo + D]

        # ---- Per-head attention (one head per grid step). ----
        q_h = qs_scr[h_idx]            # (Lq, D), already * sign * 2/scale
        k_h = ks_scr[h_idx]            # (Lk, D)
        v_h = vs_scr[h_idx]            # (Lk, D)

        # logits = 2 * cinner(q, k) / scale   (additive constants dropped: shift-invariant)
        logits = jax.lax.dot_general(q_h, k_h, (((1,), (1,)), ((), ())),
                                     preferred_element_type=jnp.float32)   # (Lq, Lk)
        if has_mask:
            maskf = mask_ref[0].astype(jnp.float32)
            logits = jnp.where(maskf != 0.0, jnp.float32(-1e18), logits)

        # Softmax over the key (lane) axis; denominator via EUP reciprocal.
        m = jnp.max(logits, axis=-1, keepdims=True)
        e = jnp.exp(logits - m)
        p = e * pl.reciprocal(jnp.sum(e, axis=-1, keepdims=True), approx=False)
        attn_ref[0, 0] = p

        # Lorentz mid_point: ave = p @ v, normalised by rsqrt(|<ave, ave>_Lorentz|).
        ave = jnp.dot(p, v_h, preferred_element_type=jnp.float32)          # (Lq, D)
        lane = jax.lax.broadcasted_iota(jnp.int32, (1, D), 1)
        sign_d = jnp.where(lane == 0, -1.0, 1.0).astype(jnp.float32)
        inner = jnp.sum(sign_d * ave * ave, axis=-1, keepdims=True)        # (Lq, 1)
        ctx_h = ave * jax.lax.rsqrt(jnp.maximum(jnp.abs(inner), 1e-8))

        # Write this head's D columns into the resident, lane-dense (Lq, M) ctx block.
        # Static column offsets via pl.when branches (no dynamic lane-dim stores).
        for i in range(H):
            @pl.when(h_idx == i)
            def _(i=i):
                ctx_ref[0, :, i * D:(i + 1) * D] = ctx_h

    return kernel


def _vmem_limit_bytes(Lq, Lk, M, H, D, has_mask, single_buffer_weights):
    """Rough VMEM budget for this kernel, clamped to v7x's 64 MiB physical VMEM."""
    def r(x, m):
        return -(-x // m) * m
    f32 = 4
    scratch = f32 * H * (r(Lq, 8) + 2 * r(Lk, 8)) * r(D, 128)             # q/k/v head-major
    act = 2 * f32 * (r(Lq, 8) + 2 * r(Lk, 8)) * r(M, 128)                 # k/v/q input blocks
    wbuf = 1 if single_buffer_weights else 2
    weights = wbuf * f32 * (3 * r(M, 8) * r(M, 128) + 3 * 8 * r(M, 128)
                            + 2 * r(M, 8) * 128 + 2 * 8 * r(M, 128))
    outs = 2 * f32 * r(Lq, 8) * (r(M, 128) + r(Lk, 128))                  # ctx + attn blocks
    maskb = 2 * r(Lq, 32) * r(Lk, 128) if has_mask else 0                 # int8 mask
    total = scratch + act + weights + outs + maskb
    return int(min(max(int(total * 1.5) + (4 << 20), 32 << 20), 64 << 20))


def lorentz_multihead_attention(key_in, value_in, query_in, params, head_count,
                                mask=None, compute_dtype=jnp.float32):
    """key/value: [B, Lk, M]; query: [B, Lq, M]; optional mask: [B, Lq, Lk] (nonzero = masked).

    Returns (context [B, Lq, H, D], attn [B, H, Lq, Lk])."""
    wk, bk, sk, wv, bv, sv, wq, bq, sq_, scale, bias = params
    del bias  # additive bias cancels in softmax; kernel returns post-softmax attn only.
    B, Lk, M = key_in.shape
    Lq = query_in.shape[1]
    H = head_count
    assert M % H == 0
    D = M // H

    # Selector matrices for per-head Lorentz normalisation (tiny constants, kept f32).
    cols = jnp.arange(M)
    head_oh = (cols // D)[:, None] == jnp.arange(H)[None, :]     # (M, H)
    is_time = ((cols % D) == 0)[:, None]                         # (M, 1)
    st = (head_oh & is_time).astype(jnp.float32)                 # (M, H)
    sn = (head_oh & (~is_time)).astype(jnp.float32)              # (M, H)
    stT, snT = st.T, sn.T                                        # (H, M)

    scale_f = jnp.squeeze(jnp.asarray(scale, jnp.float32))
    scal = jnp.stack([jnp.exp(jnp.asarray(sk, jnp.float32)),
                      jnp.exp(jnp.asarray(sv, jnp.float32)),
                      jnp.exp(jnp.asarray(sq_, jnp.float32)),
                      1.0 / scale_f]).astype(jnp.float32)        # (4,) -> SMEM

    has_mask = mask is not None
    kernel = _make_kernel(H, D, has_mask)

    tensor_inputs = [key_in.astype(compute_dtype),
                     value_in.astype(compute_dtype),
                     query_in.astype(compute_dtype)]
    tensor_specs = [pl.BlockSpec((1, Lk, M), lambda b, h: (b, 0, 0)),
                    pl.BlockSpec((1, Lk, M), lambda b, h: (b, 0, 0)),
                    pl.BlockSpec((1, Lq, M), lambda b, h: (b, 0, 0))]
    if has_mask:
        # int8 mask: 4x less HBM/VMEM traffic than f32; exact `!= 0` semantics preserved.
        tensor_inputs.append((mask != 0).astype(jnp.int8))
        tensor_specs.append(pl.BlockSpec((1, Lq, Lk), lambda b, h: (b, 0, 0)))

    weight_inputs = [wk.astype(compute_dtype), bk.astype(compute_dtype),
                     wv.astype(compute_dtype), bv.astype(compute_dtype),
                     wq.astype(compute_dtype), bq.astype(compute_dtype),
                     st, sn, stT, snT, scal]

    out_shapes = (jax.ShapeDtypeStruct((B, Lq, M), jnp.float32),
                  jax.ShapeDtypeStruct((B, H, Lq, Lk), jnp.float32))
    out_specs = [pl.BlockSpec((1, Lq, M), lambda b, h: (b, 0, 0)),       # resident across h
                 pl.BlockSpec((1, 1, Lq, Lk), lambda b, h: (b, h, 0, 0))]
    scratch_shapes = [pltpu.VMEM((H, Lq, D), jnp.float32),   # q (signed, pre-scaled)
                      pltpu.VMEM((H, Lk, D), jnp.float32),   # k
                      pltpu.VMEM((H, Lk, D), jnp.float32)]   # v

    cost = pl.CostEstimate(
        flops=int(2 * B * ((Lq + 2 * Lk) * M * M + 2 * H * Lq * Lk * D)),
        transcendentals=int(B * H * Lq * Lk + B * (Lq + 2 * Lk) * H),
        bytes_accessed=int(4 * (B * (Lq + 2 * Lk) * M + 3 * M * M
                                + B * Lq * M + B * H * Lq * Lk)
                           + (B * Lq * Lk if has_mask else 0)),
    )

    def build(single_buffer_weights):
        def cspec(shape):
            # Constant blocks (index_map never changes): single-buffer to save VMEM.
            if single_buffer_weights:
                return pl.BlockSpec(shape, lambda b, h: (0, 0),
                                    pipeline_mode=pl.Buffered(1))
            return pl.BlockSpec(shape, lambda b, h: (0, 0))

        weight_specs = [cspec((M, M)), cspec((1, M)),
                        cspec((M, M)), cspec((1, M)),
                        cspec((M, M)), cspec((1, M)),
                        cspec((M, H)), cspec((M, H)),
                        cspec((H, M)), cspec((H, M)),
                        pl.BlockSpec(memory_space=pltpu.MemorySpace.SMEM)]

        return pl.pallas_call(
            kernel,
            out_shape=out_shapes,
            grid_spec=pltpu.PrefetchScalarGridSpec(
                num_scalar_prefetch=0,
                grid=(B, H),
                in_specs=tensor_specs + weight_specs,
                out_specs=out_specs,
                scratch_shapes=scratch_shapes),
            compiler_params=pltpu.CompilerParams(
                # Batch axis is independent (megacore-shardable); the head axis carries
                # the per-batch projection scratch so it must stay "arbitrary".
                dimension_semantics=("parallel", "arbitrary"),
                vmem_limit_bytes=_vmem_limit_bytes(Lq, Lk, M, H, D, has_mask,
                                                   single_buffer_weights)),
            cost_estimate=cost,
        )

    args = tensor_inputs + weight_inputs
    try:
        ctx, attn = build(single_buffer_weights=True)(*args)
    except Exception:
        # pipeline_mode=pl.Buffered(1) unsupported on this jax/libtpu: fall back to the
        # default double-buffering of the (constant) weight blocks.
        ctx, attn = build(single_buffer_weights=False)(*args)

    return ctx.reshape(B, Lq, H, D), attn


def init_params(key0, model_dim):
    """Deterministic synthetic init mirroring the module's parameter shapes."""
    ks = jax.random.split(key0, 6)
    std = 1.0 / math.sqrt(model_dim)

    def lin(kw, kb):
        w = jax.random.uniform(kw, (model_dim, model_dim), jnp.float32, -std, std)
        b = jax.random.uniform(kb, (1, model_dim), jnp.float32, -std, std)
        return w, b

    wk, bk = lin(ks[0], ks[1])
    wv, bv = lin(ks[2], ks[3])
    wq, bq = lin(ks[4], ks[5])
    sk = jnp.float32(math.log(10.0))    # LorentzLinear scale init = log(10)
    sv = jnp.float32(math.log(10.0))
    sq_ = jnp.float32(math.log(10.0))
    scale = jnp.float32(math.sqrt(model_dim))   # self.scale init
    bias = jnp.float32(0.0)                     # self.bias init
    return wk, bk, sk, wv, bv, sv, wq, bq, sq_, scale, bias


def reference_forward(key_in, value_in, query_in, params, head_count, mask=None):
    """Pure-JAX mirror of the PyTorch forward (eval mode, no layer_cache)."""
    wk, bk, sk, wv, bv, sv, wq, bq, sq_, scale, bias = params
    B, Lk, M = key_in.shape
    D = M // head_count

    def lorentz_linear(x, w, b, s):
        y = x @ w + b
        y = y.reshape(B, -1, head_count, D)
        time = jax.nn.sigmoid(y[..., :1]) * jnp.exp(s) + 1.1
        narrow = y[..., 1:]
        sc = (time * time - 1.0) / jnp.maximum(
            jnp.sum(narrow * narrow, axis=-1, keepdims=True), 1e-8)
        return jnp.concatenate([time, narrow * jnp.sqrt(sc)], axis=-1)

    k = jnp.transpose(lorentz_linear(key_in, wk, bk, sk), (0, 2, 1, 3))
    v = jnp.transpose(lorentz_linear(value_in, wv, bv, sv), (0, 2, 1, 3))
    q = jnp.transpose(lorentz_linear(query_in, wq, bq, sq_), (0, 2, 1, 3))

    sign = jnp.where(jnp.arange(D) == 0, -1.0, 1.0)
    cin = jnp.einsum('bhqd,bhkd->bhqk', q * sign, k)
    attn = (2.0 + 2.0 * cin) / scale + bias
    if mask is not None:
        attn = jnp.where(mask[:, None, :, :] != 0.0, -1e18, attn)
    p = jax.nn.softmax(attn, axis=-1)
    ave = jnp.einsum('bhqk,bhkd->bhqd', p, v)
    inner = -ave[..., :1] ** 2 + jnp.sum(ave[..., 1:] ** 2, axis=-1, keepdims=True)
    denom = jnp.sqrt(jnp.maximum(jnp.abs(inner), 1e-8))
    ctx = jnp.transpose(ave / denom, (0, 2, 1, 3))
    return ctx, p


if __name__ == "__main__":
    B, L, M, H = 2, 8, 32, 4   # batch, seq, model_dim, heads  (dim_per_head = 8)
    key0 = jax.random.PRNGKey(0)
    kx1, kx2, kx3, kp = jax.random.split(key0, 4)
    key_in = jax.random.normal(kx1, (B, L, M), jnp.float32)
    value_in = jax.random.normal(kx2, (B, L, M), jnp.float32)
    query_in = jax.random.normal(kx3, (B, L, M), jnp.float32)
    params = init_params(kp, M)

    # --- no-mask variant (mask input specialized away) ---
    ctx, attn = lorentz_multihead_attention(key_in, value_in, query_in, params, H, mask=None)
    ctx = jax.block_until_ready(ctx)
    ctx_exp, attn_exp = reference_forward(key_in, value_in, query_in, params, H, mask=None)
    assert ctx.shape == (B, L, H, M // H), ctx.shape
    assert attn.shape == (B, H, L, L), attn.shape
    assert jnp.allclose(ctx, ctx_exp, rtol=1e-4, atol=1e-4)
    assert jnp.allclose(attn, attn_exp, rtol=1e-4, atol=1e-4)

    # --- masked variant (mask last 3 keys of batch 1) ---
    lens = jnp.array([L, L - 3])
    mask = (jnp.arange(L)[None, None, :] >= lens[:, None, None]).astype(jnp.float32)
    mask = jnp.broadcast_to(mask, (B, L, L))
    ctx_m, attn_m = lorentz_multihead_attention(key_in, value_in, query_in, params, H, mask=mask)
    ctx_m = jax.block_until_ready(ctx_m)
    ctx_exp_m, attn_exp_m = reference_forward(key_in, value_in, query_in, params, H, mask=mask)
    assert jnp.allclose(ctx_m, ctx_exp_m, rtol=1e-4, atol=1e-4)
    assert jnp.allclose(attn_m, attn_exp_m, rtol=1e-4, atol=1e-4)

    print("KERNEL_OK")
</pallas_src>

<mosaic_0001>
module attributes {stable_mosaic.version = 11 : i64} {
  func.func @kernel(%arg0: i32, %arg1: i32, %arg2: memref<1x8x32xf32, #tpu.memory_space<vmem>>, %arg3: memref<1x8x32xf32, #tpu.memory_space<vmem>>, %arg4: memref<1x8x32xf32, #tpu.memory_space<vmem>>, %arg5: memref<32x32xf32, #tpu.memory_space<vmem>>, %arg6: memref<1x32xf32, #tpu.memory_space<vmem>>, %arg7: memref<32x32xf32, #tpu.memory_space<vmem>>, %arg8: memref<1x32xf32, #tpu.memory_space<vmem>>, %arg9: memref<32x32xf32, #tpu.memory_space<vmem>>, %arg10: memref<1x32xf32, #tpu.memory_space<vmem>>, %arg11: memref<32x4xf32, #tpu.memory_space<vmem>>, %arg12: memref<32x4xf32, #tpu.memory_space<vmem>>, %arg13: memref<4x32xf32, #tpu.memory_space<vmem>>, %arg14: memref<4x32xf32, #tpu.memory_space<vmem>>, %arg15: memref<4xf32, #tpu.memory_space<smem>>, %arg16: memref<1x8x32xf32, #tpu.memory_space<vmem>>, %arg17: memref<1x1x8x8xf32, #tpu.memory_space<vmem>>, %arg18: memref<4x8x8xf32, #tpu.memory_space<vmem>>, %arg19: memref<4x8x8xf32, #tpu.memory_space<vmem>>, %arg20: memref<4x8x8xf32, #tpu.memory_space<vmem>>) attributes {dimension_semantics = [#tpu.dimension_semantics<parallel>, #tpu.dimension_semantics<arbitrary>], iteration_bounds = array<i64: 2, 4>, scalar_prefetch = 0 : i64, scratch_operands = 3 : i64, tpu.core_type = #tpu.core_type<tc>, window_params = [{transform_indices = @transform_0, window_bounds = array<i64: 1, 8, 32>}, {transform_indices = @transform_1, window_bounds = array<i64: 1, 8, 32>}, {transform_indices = @transform_2, window_bounds = array<i64: 1, 8, 32>}, {pipeline_mode = #tpu.pipeline_mode<synchronous>, transform_indices = @transform_3, window_bounds = array<i64: 32, 32>}, {pipeline_mode = #tpu.pipeline_mode<synchronous>, transform_indices = @transform_4, window_bounds = array<i64: 1, 32>}, {pipeline_mode = #tpu.pipeline_mode<synchronous>, transform_indices = @transform_5, window_bounds = array<i64: 32, 32>}, {pipeline_mode = #tpu.pipeline_mode<synchronous>, transform_indices = @transform_6, window_bounds = array<i64: 1, 32>}, {pipeline_mode = #tpu.pipeline_mode<synchronous>, transform_indices = @transform_7, window_bounds = array<i64: 32, 32>}, {pipeline_mode = #tpu.pipeline_mode<synchronous>, transform_indices = @transform_8, window_bounds = array<i64: 1, 32>}, {pipeline_mode = #tpu.pipeline_mode<synchronous>, transform_indices = @transform_9, window_bounds = array<i64: 32, 4>}, {pipeline_mode = #tpu.pipeline_mode<synchronous>, transform_indices = @transform_10, window_bounds = array<i64: 32, 4>}, {pipeline_mode = #tpu.pipeline_mode<synchronous>, transform_indices = @transform_11, window_bounds = array<i64: 4, 32>}, {pipeline_mode = #tpu.pipeline_mode<synchronous>, transform_indices = @transform_12, window_bounds = array<i64: 4, 32>}, {transform_indices = @transform_13, window_bounds = array<i64: 4>}, {transform_indices = @transform_14, window_bounds = array<i64: 1, 8, 32>}, {transform_indices = @transform_15, window_bounds = array<i64: 1, 1, 8, 8>}]} {
    %c0_i32 = arith.constant 0 : i32
    %0 = arith.cmpi eq, %arg1, %c0_i32 : i32
    %1 = arith.extui %0 : i1 to i32
    %c0_i32_0 = arith.constant 0 : i32
    %2 = arith.cmpi ne, %1, %c0_i32_0 : i32
    scf.if %2 {
      %c0_23 = arith.constant 0 : index
      %56 = memref.load %arg15[%c0_23] : memref<4xf32, #tpu.memory_space<smem>>
      %c1 = arith.constant 1 : index
      %57 = memref.load %arg15[%c1] : memref<4xf32, #tpu.memory_space<smem>>
      %c2 = arith.constant 2 : index
      %58 = memref.load %arg15[%c2] : memref<4xf32, #tpu.memory_space<smem>>
      %c3 = arith.constant 3 : index
      %59 = memref.load %arg15[%c3] : memref<4xf32, #tpu.memory_space<smem>>
      %c0_24 = arith.constant 0 : index
      %c0_25 = arith.constant 0 : index
      %60 = vector.load %arg11[%c0_24, %c0_25] : memref<32x4xf32, #tpu.memory_space<vmem>>, vector<32x4xf32>
      %c0_26 = arith.constant 0 : index
      %c0_27 = arith.constant 0 : index
      %61 = vector.load %arg12[%c0_26, %c0_27] : memref<32x4xf32, #tpu.memory_space<vmem>>, vector<32x4xf32>
      %c0_28 = arith.constant 0 : index
      %c0_29 = arith.constant 0 : index
      %62 = vector.load %arg13[%c0_28, %c0_29] : memref<4x32xf32, #tpu.memory_space<vmem>>, vector<4x32xf32>
      %c0_30 = arith.constant 0 : index
      %c0_31 = arith.constant 0 : index
      %63 = vector.load %arg14[%c0_30, %c0_31] : memref<4x32xf32, #tpu.memory_space<vmem>>, vector<4x32xf32>
      %c0_32 = arith.constant 0 : index
      %c0_33 = arith.constant 0 : index
      %c0_34 = arith.constant 0 : index
      %64 = vector.load %arg2[%c0_32, %c0_33, %c0_34] : memref<1x8x32xf32, #tpu.memory_space<vmem>>, vector<1x8x32xf32>
      %65 = vector.shape_cast %64 : vector<1x8x32xf32> to vector<8x32xf32>
      %c0_35 = arith.constant 0 : index
      %c0_36 = arith.constant 0 : index
      %66 = vector.load %arg5[%c0_35, %c0_36] : memref<32x32xf32, #tpu.memory_space<vmem>>, vector<32x32xf32>
      %cst_37 = arith.constant dense<0.000000e+00> : vector<8x32xf32>
      %67 = tpu.matmul %65, %66, %cst_37 {dimension_numbers = #tpu.dot_dimension_numbers<[1], [0], [0], [1], [0, 0, 1, 1], [], []>} : vector<8x32xf32>, vector<32x32xf32>, vector<8x32xf32> -> vector<8x32xf32>
      %c0_38 = arith.constant 0 : index
      %c0_39 = arith.constant 0 : index
      %68 = vector.load %arg6[%c0_38, %c0_39] : memref<1x32xf32, #tpu.memory_space<vmem>>, vector<1x32xf32>
      %69 = vector.broadcast %68 : vector<1x32xf32> to vector<8x32xf32>
      %70 = arith.addf %67, %69 : vector<8x32xf32>
      %cst_40 = arith.constant dense<0.000000e+00> : vector<8x4xf32>
      %71 = tpu.matmul %70, %60, %cst_40 {dimension_numbers = #tpu.dot_dimension_numbers<[1], [0], [0], [1], [0, 0, 1, 1], [], []>} : vector<8x32xf32>, vector<32x4xf32>, vector<8x4xf32> -> vector<8x4xf32>
      %72 = arith.mulf %70, %70 : vector<8x32xf32>
      %cst_41 = arith.constant dense<0.000000e+00> : vector<8x4xf32>
      %73 = tpu.matmul %72, %61, %cst_41 {dimension_numbers = #tpu.dot_dimension_numbers<[1], [0], [0], [1], [0, 0, 1, 1], [], []>} : vector<8x32xf32>, vector<32x4xf32>, vector<8x4xf32> -> vector<8x4xf32>
      %74 = arith.negf %71 : vector<8x4xf32>
      %75 = math.exp %74 : vector<8x4xf32>
      %cst_42 = arith.constant 1.000000e+00 : f32
      %76 = vector.broadcast %cst_42 : f32 to vector<8x4xf32>
      %77 = arith.addf %76, %75 : vector<8x4xf32>
      %78 = arith.divf %76, %77 : vector<8x4xf32>
      %79 = vector.broadcast %56 : f32 to vector<8x4xf32>
      %80 = arith.mulf %78, %79 : vector<8x4xf32>
      %cst_43 = arith.constant 1.100000e+00 : f32
      %81 = vector.broadcast %cst_43 : f32 to vector<8x4xf32>
      %82 = arith.addf %80, %81 : vector<8x4xf32>
      %83 = arith.mulf %82, %82 : vector<8x4xf32>
      %cst_44 = arith.constant 1.000000e+00 : f32
      %84 = vector.broadcast %cst_44 : f32 to vector<8x4xf32>
      %85 = arith.subf %83, %84 : vector<8x4xf32>
      %cst_45 = arith.constant 9.99999993E-9 : f32
      %86 = vector.broadcast %cst_45 : f32 to vector<8x4xf32>
      %87 = arith.maximumf %73, %86 : vector<8x4xf32>
      %88 = arith.divf %85, %87 : vector<8x4xf32>
      %89 = math.sqrt %88 : vector<8x4xf32>
      %cst_46 = arith.constant dense<0.000000e+00> : vector<8x32xf32>
      %90 = tpu.matmul %82, %62, %cst_46 {dimension_numbers = #tpu.dot_dimension_numbers<[1], [0], [0], [1], [0, 0, 1, 1], [], []>} : vector<8x4xf32>, vector<4x32xf32>, vector<8x32xf32> -> vector<8x32xf32>
      %cst_47 = arith.constant dense<0.000000e+00> : vector<8x32xf32>
      %91 = tpu.matmul %89, %63, %cst_47 {dimension_numbers = #tpu.dot_dimension_numbers<[1], [0], [0], [1], [0, 0, 1, 1], [], []>} : vector<8x4xf32>, vector<4x32xf32>, vector<8x32xf32> -> vector<8x32xf32>
      %92 = arith.mulf %70, %91 : vector<8x32xf32>
      %93 = arith.addf %90, %92 : vector<8x32xf32>
      %c0_48 = arith.constant 0 : index
      %c0_49 = arith.constant 0 : index
      %c0_50 = arith.constant 0 : index
      %94 = vector.load %arg3[%c0_48, %c0_49, %c0_50] : memref<1x8x32xf32, #tpu.memory_space<vmem>>, vector<1x8x32xf32>
      %95 = vector.shape_cast %94 : vector<1x8x32xf32> to vector<8x32xf32>
      %c0_51 = arith.constant 0 : index
      %c0_52 = arith.constant 0 : index
      %96 = vector.load %arg7[%c0_51, %c0_52] : memref<32x32xf32, #tpu.memory_space<vmem>>, vector<32x32xf32>
      %cst_53 = arith.constant dense<0.000000e+00> : vector<8x32xf32>
      %97 = tpu.matmul %95, %96, %cst_53 {dimension_numbers = #tpu.dot_dimension_numbers<[1], [0], [0], [1], [0, 0, 1, 1], [], []>} : vector<8x32xf32>, vector<32x32xf32>, vector<8x32xf32> -> vector<8x32xf32>
      %c0_54 = arith.constant 0 : index
      %c0_55 = arith.constant 0 : index
      %98 = vector.load %arg8[%c0_54, %c0_55] : memref<1x32xf32, #tpu.memory_space<vmem>>, vector<1x32xf32>
      %99 = vector.broadcast %98 : vector<1x32xf32> to vector<8x32xf32>
      %100 = arith.addf %97, %99 : vector<8x32xf32>
      %cst_56 = arith.constant dense<0.000000e+00> : vector<8x4xf32>
      %101 = tpu.matmul %100, %60, %cst_56 {dimension_numbers = #tpu.dot_dimension_numbers<[1], [0], [0], [1], [0, 0, 1, 1], [], []>} : vector<8x32xf32>, vector<32x4xf32>, vector<8x4xf32> -> vector<8x4xf32>
      %102 = arith.mulf %100, %100 : vector<8x32xf32>
      %cst_57 = arith.constant dense<0.000000e+00> : vector<8x4xf32>
      %103 = tpu.matmul %102, %61, %cst_57 {dimension_numbers = #tpu.dot_dimension_numbers<[1], [0], [0], [1], [0, 0, 1, 1], [], []>} : vector<8x32xf32>, vector<32x4xf32>, vector<8x4xf32> -> vector<8x4xf32>
      %104 = arith.negf %101 : vector<8x4xf32>
      %105 = math.exp %104 : vector<8x4xf32>
      %cst_58 = arith.constant 1.000000e+00 : f32
      %106 = vector.broadcast %cst_58 : f32 to vector<8x4xf32>
      %107 = arith.addf %106, %105 : vector<8x4xf32>
      %108 = arith.divf %106, %107 : vector<8x4xf32>
      %109 = vector.broadcast %57 : f32 to vector<8x4xf32>
      %110 = arith.mulf %108, %109 : vector<8x4xf32>
      %cst_59 = arith.constant 1.100000e+00 : f32
      %111 = vector.broadcast %cst_59 : f32 to vector<8x4xf32>
      %112 = arith.addf %110, %111 : vector<8x4xf32>
      %113 = arith.mulf %112, %112 : vector<8x4xf32>
      %cst_60 = arith.constant 1.000000e+00 : f32
      %114 = vector.broadcast %cst_60 : f32 to vector<8x4xf32>
      %115 = arith.subf %113, %114 : vector<8x4xf32>
      %cst_61 = arith.constant 9.99999993E-9 : f32
      %116 = vector.broadcast %cst_61 : f32 to vector<8x4xf32>
      %117 = arith.maximumf %103, %116 : vector<8x4xf32>
      %118 = arith.divf %115, %117 : vector<8x4xf32>
      %119 = math.sqrt %118 : vector<8x4xf32>
      %cst_62 = arith.constant dense<0.000000e+00> : vector<8x32xf32>
      %120 = tpu.matmul %112, %62, %cst_62 {dimension_numbers = #tpu.dot_dimension_numbers<[1], [0], [0], [1], [0, 0, 1, 1], [], []>} : vector<8x4xf32>, vector<4x32xf32>, vector<8x32xf32> -> vector<8x32xf32>
      %cst_63 = arith.constant dense<0.000000e+00> : vector<8x32xf32>
      %121 = tpu.matmul %119, %63, %cst_63 {dimension_numbers = #tpu.dot_dimension_numbers<[1], [0], [0], [1], [0, 0, 1, 1], [], []>} : vector<8x4xf32>, vector<4x32xf32>, vector<8x32xf32> -> vector<8x32xf32>
      %122 = arith.mulf %100, %121 : vector<8x32xf32>
      %123 = arith.addf %120, %122 : vector<8x32xf32>
      %c0_64 = arith.constant 0 : index
      %c0_65 = arith.constant 0 : index
      %c0_66 = arith.constant 0 : index
      %124 = vector.load %arg4[%c0_64, %c0_65, %c0_66] : memref<1x8x32xf32, #tpu.memory_space<vmem>>, vector<1x8x32xf32>
      %125 = vector.shape_cast %124 : vector<1x8x32xf32> to vector<8x32xf32>
      %c0_67 = arith.constant 0 : index
      %c0_68 = arith.constant 0 : index
      %126 = vector.load %arg9[%c0_67, %c0_68] : memref<32x32xf32, #tpu.memory_space<vmem>>, vector<32x32xf32>
      %cst_69 = arith.constant dense<0.000000e+00> : vector<8x32xf32>
      %127 = tpu.matmul %125, %126, %cst_69 {dimension_numbers = #tpu.dot_dimension_numbers<[1], [0], [0], [1], [0, 0, 1, 1], [], []>} : vector<8x32xf32>, vector<32x32xf32>, vector<8x32xf32> -> vector<8x32xf32>
      %c0_70 = arith.constant 0 : index
      %c0_71 = arith.constant 0 : index
      %128 = vector.load %arg10[%c0_70, %c0_71] : memref<1x32xf32, #tpu.memory_space<vmem>>, vector<1x32xf32>
      %129 = vector.broadcast %128 : vector<1x32xf32> to vector<8x32xf32>
      %130 = arith.addf %127, %129 : vector<8x32xf32>
      %cst_72 = arith.constant dense<0.000000e+00> : vector<8x4xf32>
      %131 = tpu.matmul %130, %60, %cst_72 {dimension_numbers = #tpu.dot_dimension_numbers<[1], [0], [0], [1], [0, 0, 1, 1], [], []>} : vector<8x32xf32>, vector<32x4xf32>, vector<8x4xf32> -> vector<8x4xf32>
      %132 = arith.mulf %130, %130 : vector<8x32xf32>
      %cst_73 = arith.constant dense<0.000000e+00> : vector<8x4xf32>
      %133 = tpu.matmul %132, %61, %cst_73 {dimension_numbers = #tpu.dot_dimension_numbers<[1], [0], [0], [1], [0, 0, 1, 1], [], []>} : vector<8x32xf32>, vector<32x4xf32>, vector<8x4xf32> -> vector<8x4xf32>
      %134 = arith.negf %131 : vector<8x4xf32>
      %135 = math.exp %134 : vector<8x4xf32>
      %cst_74 = arith.constant 1.000000e+00 : f32
      %136 = vector.broadcast %cst_74 : f32 to vector<8x4xf32>
      %137 = arith.addf %136, %135 : vector<8x4xf32>
      %138 = arith.divf %136, %137 : vector<8x4xf32>
      %139 = vector.broadcast %58 : f32 to vector<8x4xf32>
      %140 = arith.mulf %138, %139 : vector<8x4xf32>
      %cst_75 = arith.constant 1.100000e+00 : f32
      %141 = vector.broadcast %cst_75 : f32 to vector<8x4xf32>
      %142 = arith.addf %140, %141 : vector<8x4xf32>
      %143 = arith.mulf %142, %142 : vector<8x4xf32>
      %cst_76 = arith.constant 1.000000e+00 : f32
      %144 = vector.broadcast %cst_76 : f32 to vector<8x4xf32>
      %145 = arith.subf %143, %144 : vector<8x4xf32>
      %cst_77 = arith.constant 9.99999993E-9 : f32
      %146 = vector.broadcast %cst_77 : f32 to vector<8x4xf32>
      %147 = arith.maximumf %133, %146 : vector<8x4xf32>
      %148 = arith.divf %145, %147 : vector<8x4xf32>
      %149 = math.sqrt %148 : vector<8x4xf32>
      %cst_78 = arith.constant dense<0.000000e+00> : vector<8x32xf32>
      %150 = tpu.matmul %142, %62, %cst_78 {dimension_numbers = #tpu.dot_dimension_numbers<[1], [0], [0], [1], [0, 0, 1, 1], [], []>} : vector<8x4xf32>, vector<4x32xf32>, vector<8x32xf32> -> vector<8x32xf32>
      %cst_79 = arith.constant dense<0.000000e+00> : vector<8x32xf32>
      %151 = tpu.matmul %149, %63, %cst_79 {dimension_numbers = #tpu.dot_dimension_numbers<[1], [0], [0], [1], [0, 0, 1, 1], [], []>} : vector<8x4xf32>, vector<4x32xf32>, vector<8x32xf32> -> vector<8x32xf32>
      %152 = arith.mulf %130, %151 : vector<8x32xf32>
      %153 = arith.addf %150, %152 : vector<8x32xf32>
      %cst_80 = arith.constant dense<0.000000e+00> : vector<32xf32>
      %154 = vector.multi_reduction <add>, %62, %cst_80 [0] : vector<4x32xf32> to vector<32xf32>
      %155 = vector.shape_cast %154 : vector<32xf32> to vector<1x32xf32>
      %cst_81 = arith.constant 2.000000e+00 : f32
      %156 = vector.broadcast %cst_81 : f32 to vector<1x32xf32>
      %157 = arith.mulf %156, %155 : vector<1x32xf32>
      %cst_82 = arith.constant 1.000000e+00 : f32
      %158 = vector.broadcast %cst_82 : f32 to vector<1x32xf32>
      %159 = arith.subf %158, %157 : vector<1x32xf32>
      %cst_83 = arith.constant 2.000000e+00 : f32
      %160 = arith.mulf %cst_83, %59 : f32
      %161 = vector.broadcast %160 : f32 to vector<1x32xf32>
      %162 = arith.mulf %159, %161 : vector<1x32xf32>
      %163 = vector.broadcast %162 : vector<1x32xf32> to vector<8x32xf32>
      %164 = arith.mulf %153, %163 : vector<8x32xf32>
      %165 = vector.extract_strided_slice %164 {offsets = [0, 0], sizes = [8, 8], strides = [1, 1]} : vector<8x32xf32> to vector<8x8xf32>
      %c0_84 = arith.constant 0 : index
      %c0_85 = arith.constant 0 : index
      %c0_86 = arith.constant 0 : index
      %166 = vector.load %arg18[%c0_84, %c0_85, %c0_86] : memref<4x8x8xf32, #tpu.memory_space<vmem>>, vector<1x8x8xf32>
      %167 = vector.shape_cast %166 : vector<1x8x8xf32> to vector<8x8xf32>
      %168 = vector.shape_cast %165 : vector<8x8xf32> to vector<1x8x8xf32>
      tpu.vector_store %arg18[%c0_84, %c0_85, %c0_86], %168 {strides = array<i32>} : memref<4x8x8xf32, #tpu.memory_space<vmem>>, vector<1x8x8xf32>,
      %169 = vector.extract_strided_slice %93 {offsets = [0, 0], sizes = [8, 8], strides = [1, 1]} : vector<8x32xf32> to vector<8x8xf32>
      %c0_87 = arith.constant 0 : index
      %c0_88 = arith.constant 0 : index
      %c0_89 = arith.constant 0 : index
      %170 = vector.load %arg19[%c0_87, %c0_88, %c0_89] : memref<4x8x8xf32, #tpu.memory_space<vmem>>, vector<1x8x8xf32>
      %171 = vector.shape_cast %170 : vector<1x8x8xf32> to vector<8x8xf32>
      %172 = vector.shape_cast %169 : vector<8x8xf32> to vector<1x8x8xf32>
      tpu.vector_store %arg19[%c0_87, %c0_88, %c0_89], %172 {strides = array<i32>} : memref<4x8x8xf32, #tpu.memory_space<vmem>>, vector<1x8x8xf32>,
      %173 = vector.extract_strided_slice %123 {offsets = [0, 0], sizes = [8, 8], strides = [1, 1]} : vector<8x32xf32> to vector<8x8xf32>
      %c0_90 = arith.constant 0 : index
      %c0_91 = arith.constant 0 : index
      %c0_92 = arith.constant 0 : index
      %174 = vector.load %arg20[%c0_90, %c0_91, %c0_92] : memref<4x8x8xf32, #tpu.memory_space<vmem>>, vector<1x8x8xf32>
      %175 = vector.shape_cast %174 : vector<1x8x8xf32> to vector<8x8xf32>
      %176 = vector.shape_cast %173 : vector<8x8xf32> to vector<1x8x8xf32>
      tpu.vector_store %arg20[%c0_90, %c0_91, %c0_92], %176 {strides = array<i32>} : memref<4x8x8xf32, #tpu.memory_space<vmem>>, vector<1x8x8xf32>,
      %177 = vector.extract_strided_slice %164 {offsets = [0, 8], sizes = [8, 8], strides = [1, 1]} : vector<8x32xf32> to vector<8x8xf32>
      %c1_93 = arith.constant 1 : index
      %c0_94 = arith.constant 0 : index
      %c0_95 = arith.constant 0 : index
      %178 = vector.load %arg18[%c1_93, %c0_94, %c0_95] : memref<4x8x8xf32, #tpu.memory_space<vmem>>, vector<1x8x8xf32>
      %179 = vector.shape_cast %178 : vector<1x8x8xf32> to vector<8x8xf32>
      %180 = vector.shape_cast %177 : vector<8x8xf32> to vector<1x8x8xf32>
      tpu.vector_store %arg18[%c1_93, %c0_94, %c0_95], %180 {strides = array<i32>} : memref<4x8x8xf32, #tpu.memory_space<vmem>>, vector<1x8x8xf32>,
      %181 = vector.extract_strided_slice %93 {offsets = [0, 8], sizes = [8, 8], strides = [1, 1]} : vector<8x32xf32> to vector<8x8xf32>
      %c1_96 = arith.constant 1 : index
      %c0_97 = arith.constant 0 : index
      %c0_98 = arith.constant 0 : index
      %182 = vector.load %arg19[%c1_96, %c0_97, %c0_98] : memref<4x8x8xf32, #tpu.memory_space<vmem>>, vector<1x8x8xf32>
      %183 = vector.shape_cast %182 : vector<1x8x8xf32> to vector<8x8xf32>
      %184 = vector.shape_cast %181 : vector<8x8xf32> to vector<1x8x8xf32>
      tpu.vector_store %arg19[%c1_96, %c0_97, %c0_98], %184 {strides = array<i32>} : memref<4x8x8xf32, #tpu.memory_space<vmem>>, vector<1x8x8xf32>,
      %185 = vector.extract_strided_slice %123 {offsets = [0, 8], sizes = [8, 8], strides = [1, 1]} : vector<8x32xf32> to vector<8x8xf32>
      %c1_99 = arith.constant 1 : index
      %c0_100 = arith.constant 0 : index
      %c0_101 = arith.constant 0 : index
      %186 = vector.load %arg20[%c1_99, %c0_100, %c0_101] : memref<4x8x8xf32, #tpu.memory_space<vmem>>, vector<1x8x8xf32>
      %187 = vector.shape_cast %186 : vector<1x8x8xf32> to vector<8x8xf32>
      %188 = vector.shape_cast %185 : vector<8x8xf32> to vector<1x8x8xf32>
      tpu.vector_store %arg20[%c1_99, %c0_100, %c0_101], %188 {strides = array<i32>} : memref<4x8x8xf32, #tpu.memory_space<vmem>>, vector<1x8x8xf32>,
      %189 = vector.extract_strided_slice %164 {offsets = [0, 16], sizes = [8, 8], strides = [1, 1]} : vector<8x32xf32> to vector<8x8xf32>
      %c2_102 = arith.constant 2 : index
      %c0_103 = arith.constant 0 : index
      %c0_104 = arith.constant 0 : index
      %190 = vector.load %arg18[%c2_102, %c0_103, %c0_104] : memref<4x8x8xf32, #tpu.memory_space<vmem>>, vector<1x8x8xf32>
      %191 = vector.shape_cast %190 : vector<1x8x8xf32> to vector<8x8xf32>
      %192 = vector.shape_cast %189 : vector<8x8xf32> to vector<1x8x8xf32>
      tpu.vector_store %arg18[%c2_102, %c0_103, %c0_104], %192 {strides = array<i32>} : memref<4x8x8xf32, #tpu.memory_space<vmem>>, vector<1x8x8xf32>,
      %193 = vector.extract_strided_slice %93 {offsets = [0, 16], sizes = [8, 8], strides = [1, 1]} : vector<8x32xf32> to vector<8x8xf32>
      %c2_105 = arith.constant 2 : index
      %c0_106 = arith.constant 0 : index
      %c0_107 = arith.constant 0 : index
      %194 = vector.load %arg19[%c2_105, %c0_106, %c0_107] : memref<4x8x8xf32, #tpu.memory_space<vmem>>, vector<1x8x8xf32>
      %195 = vector.shape_cast %194 : vector<1x8x8xf32> to vector<8x8xf32>
      %196 = vector.shape_cast %193 : vector<8x8xf32> to vector<1x8x8xf32>
      tpu.vector_store %arg19[%c2_105, %c0_106, %c0_107], %196 {strides = array<i32>} : memref<4x8x8xf32, #tpu.memory_space<vmem>>, vector<1x8x8xf32>,
      %197 = vector.extract_strided_slice %123 {offsets = [0, 16], sizes = [8, 8], strides = [1, 1]} : vector<8x32xf32> to vector<8x8xf32>
      %c2_108 = arith.constant 2 : index
      %c0_109 = arith.constant 0 : index
      %c0_110 = arith.constant 0 : index
      %198 = vector.load %arg20[%c2_108, %c0_109, %c0_110] : memref<4x8x8xf32, #tpu.memory_space<vmem>>, vector<1x8x8xf32>
      %199 = vector.shape_cast %198 : vector<1x8x8xf32> to vector<8x8xf32>
      %200 = vector.shape_cast %197 : vector<8x8xf32> to vector<1x8x8xf32>
      tpu.vector_store %arg20[%c2_108, %c0_109, %c0_110], %200 {strides = array<i32>} : memref<4x8x8xf32, #tpu.memory_space<vmem>>, vector<1x8x8xf32>,
      %201 = vector.extract_strided_slice %164 {offsets = [0, 24], sizes = [8, 8], strides = [1, 1]} : vector<8x32xf32> to vector<8x8xf32>
      %c3_111 = arith.constant 3 : index
      %c0_112 = arith.constant 0 : index
      %c0_113 = arith.constant 0 : index
      %202 = vector.load %arg18[%c3_111, %c0_112, %c0_113] : memref<4x8x8xf32, #tpu.memory_space<vmem>>, vector<1x8x8xf32>
      %203 = vector.shape_cast %202 : vector<1x8x8xf32> to vector<8x8xf32>
      %204 = vector.shape_cast %201 : vector<8x8xf32> to vector<1x8x8xf32>
      tpu.vector_store %arg18[%c3_111, %c0_112, %c0_113], %204 {strides = array<i32>} : memref<4x8x8xf32, #tpu.memory_space<vmem>>, vector<1x8x8xf32>,
      %205 = vector.extract_strided_slice %93 {offsets = [0, 24], sizes = [8, 8], strides = [1, 1]} : vector<8x32xf32> to vector<8x8xf32>
      %c3_114 = arith.constant 3 : index
      %c0_115 = arith.constant 0 : index
      %c0_116 = arith.constant 0 : index
      %206 = vector.load %arg19[%c3_114, %c0_115, %c0_116] : memref<4x8x8xf32, #tpu.memory_space<vmem>>, vector<1x8x8xf32>
      %207 = vector.shape_cast %206 : vector<1x8x8xf32> to vector<8x8xf32>
      %208 = vector.shape_cast %205 : vector<8x8xf32> to vector<1x8x8xf32>
      tpu.vector_store %arg19[%c3_114, %c0_115, %c0_116], %208 {strides = array<i32>} : memref<4x8x8xf32, #tpu.memory_space<vmem>>, vector<1x8x8xf32>,
      %209 = vector.extract_strided_slice %123 {offsets = [0, 24], sizes = [8, 8], strides = [1, 1]} : vector<8x32xf32> to vector<8x8xf32>
      %c3_117 = arith.constant 3 : index
      %c0_118 = arith.constant 0 : index
      %c0_119 = arith.constant 0 : index
      %210 = vector.load %arg20[%c3_117, %c0_118, %c0_119] : memref<4x8x8xf32, #tpu.memory_space<vmem>>, vector<1x8x8xf32>
      %211 = vector.shape_cast %210 : vector<1x8x8xf32> to vector<8x8xf32>
      %212 = vector.shape_cast %209 : vector<8x8xf32> to vector<1x8x8xf32>
      tpu.vector_store %arg20[%c3_117, %c0_118, %c0_119], %212 {strides = array<i32>} : memref<4x8x8xf32, #tpu.memory_space<vmem>>, vector<1x8x8xf32>,
    } else {
    }
    %3 = arith.index_cast %arg1 : i32 to index
    %c0 = arith.constant 0 : index
    %c0_1 = arith.constant 0 : index
    %4 = vector.load %arg18[%3, %c0, %c0_1] : memref<4x8x8xf32, #tpu.memory_space<vmem>>, vector<1x8x8xf32>
    %5 = vector.shape_cast %4 : vector<1x8x8xf32> to vector<8x8xf32>
    %6 = arith.index_cast %arg1 : i32 to index
    %c0_2 = arith.constant 0 : index
    %c0_3 = arith.constant 0 : index
    %7 = vector.load %arg19[%6, %c0_2, %c0_3] : memref<4x8x8xf32, #tpu.memory_space<vmem>>, vector<1x8x8xf32>
    %8 = vector.shape_cast %7 : vector<1x8x8xf32> to vector<8x8xf32>
    %9 = arith.index_cast %arg1 : i32 to index
    %c0_4 = arith.constant 0 : index
    %c0_5 = arith.constant 0 : index
    %10 = vector.load %arg20[%9, %c0_4, %c0_5] : memref<4x8x8xf32, #tpu.memory_space<vmem>>, vector<1x8x8xf32>
    %11 = vector.shape_cast %10 : vector<1x8x8xf32> to vector<8x8xf32>
    %cst = arith.constant dense<0.000000e+00> : vector<8x8xf32>
    %12 = tpu.matmul %5, %8, %cst {dimension_numbers = #tpu.dot_dimension_numbers<[1], [1], [0], [0], [0, 0, 1, 0], [], []>} : vector<8x8xf32>, vector<8x8xf32>, vector<8x8xf32> -> vector<8x8xf32>
    %cst_6 = arith.constant dense<0xFF800000> : vector<8xf32>
    %13 = vector.multi_reduction <maximumf>, %12, %cst_6 [1] : vector<8x8xf32> to vector<8xf32>
    %14 = vector.shape_cast %13 : vector<8xf32> to vector<8x1xf32>
    %15 = vector.broadcast %14 : vector<8x1xf32> to vector<8x8xf32>
    %16 = arith.subf %12, %15 : vector<8x8xf32>
    %17 = math.exp %16 : vector<8x8xf32>
    %cst_7 = arith.constant dense<0.000000e+00> : vector<8xf32>
    %18 = vector.multi_reduction <add>, %17, %cst_7 [1] : vector<8x8xf32> to vector<8xf32>
    %19 = vector.shape_cast %18 : vector<8xf32> to vector<8x1xf32>
    %20 = tpu.reciprocal %19 : vector<8x1xf32> -> vector<8x1xf32>
    %21 = vector.broadcast %20 : vector<8x1xf32> to vector<8x8xf32>
    %22 = arith.mulf %17, %21 : vector<8x8xf32>
    %c0_8 = arith.constant 0 : index
    %c0_9 = arith.constant 0 : index
    %c0_10 = arith.constant 0 : index
    %c0_11 = arith.constant 0 : index
    %23 = vector.load %arg17[%c0_8, %c0_9, %c0_10, %c0_11] : memref<1x1x8x8xf32, #tpu.memory_space<vmem>>, vector<1x1x8x8xf32>
    %24 = vector.shape_cast %23 : vector<1x1x8x8xf32> to vector<8x8xf32>
    %25 = vector.shape_cast %22 : vector<8x8xf32> to vector<1x1x8x8xf32>
    tpu.vector_store %arg17[%c0_8, %c0_9, %c0_10, %c0_11], %25 {strides = array<i32>} : memref<1x1x8x8xf32, #tpu.memory_space<vmem>>, vector<1x1x8x8xf32>,
    %cst_12 = arith.constant dense<0.000000e+00> : vector<8x8xf32>
    %26 = tpu.matmul %22, %11, %cst_12 {dimension_numbers = #tpu.dot_dimension_numbers<[1], [0], [0], [1], [0, 0, 1, 1], [], []>} : vector<8x8xf32>, vector<8x8xf32>, vector<8x8xf32> -> vector<8x8xf32>
    %27 = tpu.iota {dimensions = array<i32: 1>} : vector<1x8xi32>
    %c0_i32_13 = arith.constant 0 : i32
    %28 = vector.broadcast %c0_i32_13 : i32 to vector<1x8xi32>
    %29 = arith.cmpi eq, %27, %28 : vector<1x8xi32>
    %cst_14 = arith.constant -1.000000e+00 : f32
    %cst_15 = arith.constant 1.000000e+00 : f32
    %30 = vector.broadcast %cst_14 : f32 to vector<1x8xf32>
    %31 = vector.broadcast %cst_15 : f32 to vector<1x8xf32>
    %32 = arith.select %29, %30, %31 : vector<1x8xi1>, vector<1x8xf32>
    %33 = vector.broadcast %32 : vector<1x8xf32> to vector<8x8xf32>
    %34 = arith.mulf %33, %26 : vector<8x8xf32>
    %35 = arith.mulf %34, %26 : vector<8x8xf32>
    %cst_16 = arith.constant dense<0.000000e+00> : vector<8xf32>
    %36 = vector.multi_reduction <add>, %35, %cst_16 [1] : vector<8x8xf32> to vector<8xf32>
    %37 = vector.shape_cast %36 : vector<8xf32> to vector<8x1xf32>
    %38 = math.absf %37 : vector<8x1xf32>
    %cst_17 = arith.constant 9.99999993E-9 : f32
    %39 = vector.broadcast %cst_17 : f32 to vector<8x1xf32>
    %40 = arith.maximumf %38, %39 : vector<8x1xf32>
    %41 = math.rsqrt %40 : vector<8x1xf32>
    %42 = vector.broadcast %41 : vector<8x1xf32> to vector<8x8xf32>
    %43 = arith.mulf %26, %42 : vector<8x8xf32>
    %c0_i32_18 = arith.constant 0 : i32
    %44 = arith.cmpi eq, %arg1, %c0_i32_18 : i32
    %45 = arith.extui %44 : i1 to i32
    %c0_i32_19 = arith.constant 0 : i32
    %46 = arith.cmpi ne, %45, %c0_i32_19 : i32
    scf.if %46 {
      %c0_23 = arith.constant 0 : index
      %c0_24 = arith.constant 0 : index
      %c0_25 = arith.constant 0 : index
      %56 = vector.load %arg16[%c0_23, %c0_24, %c0_25] : memref<1x8x32xf32, #tpu.memory_space<vmem>>, vector<1x8x8xf32>
      %57 = vector.shape_cast %56 : vector<1x8x8xf32> to vector<8x8xf32>
      %58 = vector.shape_cast %43 : vector<8x8xf32> to vector<1x8x8xf32>
      tpu.vector_store %arg16[%c0_23, %c0_24, %c0_25], %58 {strides = array<i32>} : memref<1x8x32xf32, #tpu.memory_space<vmem>>, vector<1x8x8xf32>,
    } else {
    }
    %c1_i32 = arith.constant 1 : i32
    %47 = arith.cmpi eq, %arg1, %c1_i32 : i32
    %48 = arith.extui %47 : i1 to i32
    %c0_i32_20 = arith.constant 0 : i32
    %49 = arith.cmpi ne, %48, %c0_i32_20 : i32
    scf.if %49 {
      %c0_23 = arith.constant 0 : index
      %c0_24 = arith.constant 0 : index
      %c8 = arith.constant 8 : index
      %56 = vector.load %arg16[%c0_23, %c0_24, %c8] : memref<1x8x32xf32, #tpu.memory_space<vmem>>, vector<1x8x8xf32>
      %57 = vector.shape_cast %56 : vector<1x8x8xf32> to vector<8x8xf32>
      %58 = vector.shape_cast %43 : vector<8x8xf32> to vector<1x8x8xf32>
      tpu.vector_store %arg16[%c0_23, %c0_24, %c8], %58 {strides = array<i32>} : memref<1x8x32xf32, #tpu.memory_space<vmem>>, vector<1x8x8xf32>,
    } else {
    }
    %c2_i32 = arith.constant 2 : i32
    %50 = arith.cmpi eq, %arg1, %c2_i32 : i32
    %51 = arith.extui %50 : i1 to i32
    %c0_i32_21 = arith.constant 0 : i32
    %52 = arith.cmpi ne, %51, %c0_i32_21 : i32
    scf.if %52 {
      %c0_23 = arith.constant 0 : index
      %c0_24 = arith.constant 0 : index
      %c16 = arith.constant 16 : index
      %56 = vector.load %arg16[%c0_23, %c0_24, %c16] : memref<1x8x32xf32, #tpu.memory_space<vmem>>, vector<1x8x8xf32>
      %57 = vector.shape_cast %56 : vector<1x8x8xf32> to vector<8x8xf32>
      %58 = vector.shape_cast %43 : vector<8x8xf32> to vector<1x8x8xf32>
      tpu.vector_store %arg16[%c0_23, %c0_24, %c16], %58 {strides = array<i32>} : memref<1x8x32xf32, #tpu.memory_space<vmem>>, vector<1x8x8xf32>,
    } else {
    }
    %c3_i32 = arith.constant 3 : i32
    %53 = arith.cmpi eq, %arg1, %c3_i32 : i32
    %54 = arith.extui %53 : i1 to i32
    %c0_i32_22 = arith.constant 0 : i32
    %55 = arith.cmpi ne, %54, %c0_i32_22 : i32
    scf.if %55 {
      %c0_23 = arith.constant 0 : index
      %c0_24 = arith.constant 0 : index
      %c24 = arith.constant 24 : index
      %56 = vector.load %arg16[%c0_23, %c0_24, %c24] : memref<1x8x32xf32, #tpu.memory_space<vmem>>, vector<1x8x8xf32>
      %57 = vector.shape_cast %56 : vector<1x8x8xf32> to vector<8x8xf32>
      %58 = vector.shape_cast %43 : vector<8x8xf32> to vector<1x8x8xf32>
      tpu.vector_store %arg16[%c0_23, %c0_24, %c24], %58 {strides = array<i32>} : memref<1x8x32xf32, #tpu.memory_space<vmem>>, vector<1x8x8xf32>,
    } else {
    }
    return
  }
  func.func @transform_0(%arg0: i32, %arg1: i32) -> (i32, i32, i32) {
    %c0_i32 = arith.constant 0 : i32
    %c0_i32_0 = arith.constant 0 : i32
    %c0_i32_1 = arith.constant 0 : i32
    return %arg0, %c0_i32, %c0_i32_0 : i32, i32, i32
  }
  func.func @transform_1(%arg0: i32, %arg1: i32) -> (i32, i32, i32) {
    %c0_i32 = arith.constant 0 : i32
    %c0_i32_0 = arith.constant 0 : i32
    %c0_i32_1 = arith.constant 0 : i32
    return %arg0, %c0_i32, %c0_i32_0 : i32, i32, i32
  }
  func.func @transform_2(%arg0: i32, %arg1: i32) -> (i32, i32, i32) {
    %c0_i32 = arith.constant 0 : i32
    %c0_i32_0 = arith.constant 0 : i32
    %c0_i32_1 = arith.constant 0 : i32
    return %arg0, %c0_i32, %c0_i32_0 : i32, i32, i32
  }
  func.func @transform_3(%arg0: i32, %arg1: i32) -> (i32, i32) {
    %c0_i32 = arith.constant 0 : i32
    %c0_i32_0 = arith.constant 0 : i32
    %c0_i32_1 = arith.constant 0 : i32
    return %c0_i32, %c0_i32_0 : i32, i32
  }
  func.func @transform_4(%arg0: i32, %arg1: i32) -> (i32, i32) {
    %c0_i32 = arith.constant 0 : i32
    %c0_i32_0 = arith.constant 0 : i32
    %c0_i32_1 = arith.constant 0 : i32
    return %c0_i32, %c0_i32_0 : i32, i32
  }
  func.func @transform_5(%arg0: i32, %arg1: i32) -> (i32, i32) {
    %c0_i32 = arith.constant 0 : i32
    %c0_i32_0 = arith.constant 0 : i32
    %c0_i32_1 = arith.constant 0 : i32
    return %c0_i32, %c0_i32_0 : i32, i32
  }
  func.func @transform_6(%arg0: i32, %arg1: i32) -> (i32, i32) {
    %c0_i32 = arith.constant 0 : i32
    %c0_i32_0 = arith.constant 0 : i32
    %c0_i32_1 = arith.constant 0 : i32
    return %c0_i32, %c0_i32_0 : i32, i32
  }
  func.func @transform_7(%arg0: i32, %arg1: i32) -> (i32, i32) {
    %c0_i32 = arith.constant 0 : i32
    %c0_i32_0 = arith.constant 0 : i32
    %c0_i32_1 = arith.constant 0 : i32
    return %c0_i32, %c0_i32_0 : i32, i32
  }
  func.func @transform_8(%arg0: i32, %arg1: i32) -> (i32, i32) {
    %c0_i32 = arith.constant 0 : i32
    %c0_i32_0 = arith.constant 0 : i32
    %c0_i32_1 = arith.constant 0 : i32
    return %c0_i32, %c0_i32_0 : i32, i32
  }
  func.func @transform_9(%arg0: i32, %arg1: i32) -> (i32, i32) {
    %c0_i32 = arith.constant 0 : i32
    %c0_i32_0 = arith.constant 0 : i32
    %c0_i32_1 = arith.constant 0 : i32
    return %c0_i32, %c0_i32_0 : i32, i32
  }
  func.func @transform_10(%arg0: i32, %arg1: i32) -> (i32, i32) {
    %c0_i32 = arith.constant 0 : i32
    %c0_i32_0 = arith.constant 0 : i32
    %c0_i32_1 = arith.constant 0 : i32
    return %c0_i32, %c0_i32_0 : i32, i32
  }
  func.func @transform_11(%arg0: i32, %arg1: i32) -> (i32, i32) {
    %c0_i32 = arith.constant 0 : i32
    %c0_i32_0 = arith.constant 0 : i32
    %c0_i32_1 = arith.constant 0 : i32
    return %c0_i32, %c0_i32_0 : i32, i32
  }
  func.func @transform_12(%arg0: i32, %arg1: i32) -> (i32, i32) {
    %c0_i32 = arith.constant 0 : i32
    %c0_i32_0 = arith.constant 0 : i32
    %c0_i32_1 = arith.constant 0 : i32
    return %c0_i32, %c0_i32_0 : i32, i32
  }
  func.func @transform_13(%arg0: i32, %arg1: i32) -> i32 {
    %c0_i32 = arith.constant 0 : i32
    %c0_i32_0 = arith.constant 0 : i32
    return %c0_i32 : i32
  }
  func.func @transform_14(%arg0: i32, %arg1: i32) -> (i32, i32, i32) {
    %c0_i32 = arith.constant 0 : i32
    %c0_i32_0 = arith.constant 0 : i32
    %c0_i32_1 = arith.constant 0 : i32
    return %arg0, %c0_i32, %c0_i32_0 : i32, i32, i32
  }
  func.func @transform_15(%arg0: i32, %arg1: i32) -> (i32, i32, i32, i32) {
    %c0_i32 = arith.constant 0 : i32
    %c0_i32_0 = arith.constant 0 : i32
    %c0_i32_1 = arith.constant 0 : i32
    return %arg0, %arg1, %c0_i32, %c0_i32_0 : i32, i32, i32, i32
  }
}

module attributes {stable_mosaic.version = 11 : i64} {
  func.func @kernel(%arg0: i32, %arg1: i32, %arg2: memref<1x8x32xf32, #tpu.memory_space<vmem>>, %arg3: memref<1x8x32xf32, #tpu.memory_space<vmem>>, %arg4: memref<1x8x32xf32, #tpu.memory_space<vmem>>, %arg5: memref<32x32xf32, #tpu.memory_space<vmem>>, %arg6: memref<1x32xf32, #tpu.memory_space<vmem>>, %arg7: memref<32x32xf32, #tpu.memory_space<vmem>>, %arg8: memref<1x32xf32, #tpu.memory_space<vmem>>, %arg9: memref<32x32xf32, #tpu.memory_space<vmem>>, %arg10: memref<1x32xf32, #tpu.memory_space<vmem>>, %arg11: memref<32x4xf32, #tpu.memory_space<vmem>>, %arg12: memref<32x4xf32, #tpu.memory_space<vmem>>, %arg13: memref<4x32xf32, #tpu.memory_space<vmem>>, %arg14: memref<4x32xf32, #tpu.memory_space<vmem>>, %arg15: memref<4xf32, #tpu.memory_space<smem>>, %arg16: memref<1x8x32xf32, #tpu.memory_space<vmem>>, %arg17: memref<1x1x8x8xf32, #tpu.memory_space<vmem>>, %arg18: memref<4x8x8xf32, #tpu.memory_space<vmem>>, %arg19: memref<4x8x8xf32, #tpu.memory_space<vmem>>, %arg20: memref<4x8x8xf32, #tpu.memory_space<vmem>>) attributes {dimension_semantics = [#tpu.dimension_semantics<parallel>, #tpu.dimension_semantics<arbitrary>], iteration_bounds = array<i64: 2, 4>, scalar_prefetch = 0 : i64, scratch_operands = 3 : i64, tpu.core_type = #tpu.core_type<tc>, window_params = [{transform_indices = @transform_0, window_bounds = array<i64: 1, 8, 32>}, {transform_indices = @transform_1, window_bounds = array<i64: 1, 8, 32>}, {transform_indices = @transform_2, window_bounds = array<i64: 1, 8, 32>}, {pipeline_mode = #tpu.pipeline_mode<synchronous>, transform_indices = @transform_3, window_bounds = array<i64: 32, 32>}, {pipeline_mode = #tpu.pipeline_mode<synchronous>, transform_indices = @transform_4, window_bounds = array<i64: 1, 32>}, {pipeline_mode = #tpu.pipeline_mode<synchronous>, transform_indices = @transform_5, window_bounds = array<i64: 32, 32>}, {pipeline_mode = #tpu.pipeline_mode<synchronous>, transform_indices = @transform_6, window_bounds = array<i64: 1, 32>}, {pipeline_mode = #tpu.pipeline_mode<synchronous>, transform_indices = @transform_7, window_bounds = array<i64: 32, 32>}, {pipeline_mode = #tpu.pipeline_mode<synchronous>, transform_indices = @transform_8, window_bounds = array<i64: 1, 32>}, {pipeline_mode = #tpu.pipeline_mode<synchronous>, transform_indices = @transform_9, window_bounds = array<i64: 32, 4>}, {pipeline_mode = #tpu.pipeline_mode<synchronous>, transform_indices = @transform_10, window_bounds = array<i64: 32, 4>}, {pipeline_mode = #tpu.pipeline_mode<synchronous>, transform_indices = @transform_11, window_bounds = array<i64: 4, 32>}, {pipeline_mode = #tpu.pipeline_mode<synchronous>, transform_indices = @transform_12, window_bounds = array<i64: 4, 32>}, {transform_indices = @transform_13, window_bounds = array<i64: 4>}, {transform_indices = @transform_14, window_bounds = array<i64: 1, 8, 32>}, {transform_indices = @transform_15, window_bounds = array<i64: 1, 1, 8, 8>}]} {
    %c0_i32 = arith.constant 0 : i32
    %0 = arith.cmpi eq, %arg1, %c0_i32 : i32
    %1 = arith.extui %0 : i1 to i32
    %c0_i32_0 = arith.constant 0 : i32
    %2 = arith.cmpi ne, %1, %c0_i32_0 : i32
    scf.if %2 {
      %c0_23 = arith.constant 0 : index
      %56 = memref.load %arg15[%c0_23] : memref<4xf32, #tpu.memory_space<smem>>
      %c1 = arith.constant 1 : index
      %57 = memref.load %arg15[%c1] : memref<4xf32, #tpu.memory_space<smem>>
      %c2 = arith.constant 2 : index
      %58 = memref.load %arg15[%c2] : memref<4xf32, #tpu.memory_space<smem>>
      %c3 = arith.constant 3 : index
      %59 = memref.load %arg15[%c3] : memref<4xf32, #tpu.memory_space<smem>>
      %c0_24 = arith.constant 0 : index
      %c0_25 = arith.constant 0 : index
      %60 = vector.load %arg11[%c0_24, %c0_25] : memref<32x4xf32, #tpu.memory_space<vmem>>, vector<32x4xf32>
      %c0_26 = arith.constant 0 : index
      %c0_27 = arith.constant 0 : index
      %61 = vector.load %arg12[%c0_26, %c0_27] : memref<32x4xf32, #tpu.memory_space<vmem>>, vector<32x4xf32>
      %c0_28 = arith.constant 0 : index
      %c0_29 = arith.constant 0 : index
      %62 = vector.load %arg13[%c0_28, %c0_29] : memref<4x32xf32, #tpu.memory_space<vmem>>, vector<4x32xf32>
      %c0_30 = arith.constant 0 : index
      %c0_31 = arith.constant 0 : index
      %63 = vector.load %arg14[%c0_30, %c0_31] : memref<4x32xf32, #tpu.memory_space<vmem>>, vector<4x32xf32>
      %c0_32 = arith.constant 0 : index
      %c0_33 = arith.constant 0 : index
      %c0_34 = arith.constant 0 : index
      %64 = vector.load %arg2[%c0_32, %c0_33, %c0_34] : memref<1x8x32xf32, #tpu.memory_space<vmem>>, vector<1x8x32xf32>
      %65 = vector.shape_cast %64 : vector<1x8x32xf32> to vector<8x32xf32>
      %c0_35 = arith.constant 0 : index
      %c0_36 = arith.constant 0 : index
      %66 = vector.load %arg5[%c0_35, %c0_36] : memref<32x32xf32, #tpu.memory_space<vmem>>, vector<32x32xf32>
      %cst_37 = arith.constant dense<0.000000e+00> : vector<8x32xf32>
      %67 = tpu.matmul %65, %66, %cst_37 {dimension_numbers = #tpu.dot_dimension_numbers<[1], [0], [0], [1], [0, 0, 1, 1], [], []>} : vector<8x32xf32>, vector<32x32xf32>, vector<8x32xf32> -> vector<8x32xf32>
      %c0_38 = arith.constant 0 : index
      %c0_39 = arith.constant 0 : index
      %68 = vector.load %arg6[%c0_38, %c0_39] : memref<1x32xf32, #tpu.memory_space<vmem>>, vector<1x32xf32>
      %69 = vector.broadcast %68 : vector<1x32xf32> to vector<8x32xf32>
      %70 = arith.addf %67, %69 : vector<8x32xf32>
      %cst_40 = arith.constant dense<0.000000e+00> : vector<8x4xf32>
      %71 = tpu.matmul %70, %60, %cst_40 {dimension_numbers = #tpu.dot_dimension_numbers<[1], [0], [0], [1], [0, 0, 1, 1], [], []>} : vector<8x32xf32>, vector<32x4xf32>, vector<8x4xf32> -> vector<8x4xf32>
      %72 = arith.mulf %70, %70 : vector<8x32xf32>
      %cst_41 = arith.constant dense<0.000000e+00> : vector<8x4xf32>
      %73 = tpu.matmul %72, %61, %cst_41 {dimension_numbers = #tpu.dot_dimension_numbers<[1], [0], [0], [1], [0, 0, 1, 1], [], []>} : vector<8x32xf32>, vector<32x4xf32>, vector<8x4xf32> -> vector<8x4xf32>
      %74 = arith.negf %71 : vector<8x4xf32>
      %75 = math.exp %74 : vector<8x4xf32>
      %cst_42 = arith.constant 1.000000e+00 : f32
      %76 = vector.broadcast %cst_42 : f32 to vector<8x4xf32>
      %77 = arith.addf %76, %75 : vector<8x4xf32>
      %78 = arith.divf %76, %77 : vector<8x4xf32>
      %79 = vector.broadcast %56 : f32 to vector<8x4xf32>
      %80 = arith.mulf %78, %79 : vector<8x4xf32>
      %cst_43 = arith.constant 1.100000e+00 : f32
      %81 = vector.broadcast %cst_43 : f32 to vector<8x4xf32>
      %82 = arith.addf %80, %81 : vector<8x4xf32>
      %83 = arith.mulf %82, %82 : vector<8x4xf32>
      %cst_44 = arith.constant 1.000000e+00 : f32
      %84 = vector.broadcast %cst_44 : f32 to vector<8x4xf32>
      %85 = arith.subf %83, %84 : vector<8x4xf32>
      %cst_45 = arith.constant 9.99999993E-9 : f32
      %86 = vector.broadcast %cst_45 : f32 to vector<8x4xf32>
      %87 = arith.maximumf %73, %86 : vector<8x4xf32>
      %88 = arith.divf %85, %87 : vector<8x4xf32>
      %89 = math.sqrt %88 : vector<8x4xf32>
      %cst_46 = arith.constant dense<0.000000e+00> : vector<8x32xf32>
      %90 = tpu.matmul %82, %62, %cst_46 {dimension_numbers = #tpu.dot_dimension_numbers<[1], [0], [0], [1], [0, 0, 1, 1], [], []>} : vector<8x4xf32>, vector<4x32xf32>, vector<8x32xf32> -> vector<8x32xf32>
      %cst_47 = arith.constant dense<0.000000e+00> : vector<8x32xf32>
      %91 = tpu.matmul %89, %63, %cst_47 {dimension_numbers = #tpu.dot_dimension_numbers<[1], [0], [0], [1], [0, 0, 1, 1], [], []>} : vector<8x4xf32>, vector<4x32xf32>, vector<8x32xf32> -> vector<8x32xf32>
      %92 = arith.mulf %70, %91 : vector<8x32xf32>
      %93 = arith.addf %90, %92 : vector<8x32xf32>
      %c0_48 = arith.constant 0 : index
      %c0_49 = arith.constant 0 : index
      %c0_50 = arith.constant 0 : index
      %94 = vector.load %arg3[%c0_48, %c0_49, %c0_50] : memref<1x8x32xf32, #tpu.memory_space<vmem>>, vector<1x8x32xf32>
      %95 = vector.shape_cast %94 : vector<1x8x32xf32> to vector<8x32xf32>
      %c0_51 = arith.constant 0 : index
      %c0_52 = arith.constant 0 : index
      %96 = vector.load %arg7[%c0_51, %c0_52] : memref<32x32xf32, #tpu.memory_space<vmem>>, vector<32x32xf32>
      %cst_53 = arith.constant dense<0.000000e+00> : vector<8x32xf32>
      %97 = tpu.matmul %95, %96, %cst_53 {dimension_numbers = #tpu.dot_dimension_numbers<[1], [0], [0], [1], [0, 0, 1, 1], [], []>} : vector<8x32xf32>, vector<32x32xf32>, vector<8x32xf32> -> vector<8x32xf32>
      %c0_54 = arith.constant 0 : index
      %c0_55 = arith.constant 0 : index
      %98 = vector.load %arg8[%c0_54, %c0_55] : memref<1x32xf32, #tpu.memory_space<vmem>>, vector<1x32xf32>
      %99 = vector.broadcast %98 : vector<1x32xf32> to vector<8x32xf32>
      %100 = arith.addf %97, %99 : vector<8x32xf32>
      %cst_56 = arith.constant dense<0.000000e+00> : vector<8x4xf32>
      %101 = tpu.matmul %100, %60, %cst_56 {dimension_numbers = #tpu.dot_dimension_numbers<[1], [0], [0], [1], [0, 0, 1, 1], [], []>} : vector<8x32xf32>, vector<32x4xf32>, vector<8x4xf32> -> vector<8x4xf32>
      %102 = arith.mulf %100, %100 : vector<8x32xf32>
      %cst_57 = arith.constant dense<0.000000e+00> : vector<8x4xf32>
      %103 = tpu.matmul %102, %61, %cst_57 {dimension_numbers = #tpu.dot_dimension_numbers<[1], [0], [0], [1], [0, 0, 1, 1], [], []>} : vector<8x32xf32>, vector<32x4xf32>, vector<8x4xf32> -> vector<8x4xf32>
      %104 = arith.negf %101 : vector<8x4xf32>
      %105 = math.exp %104 : vector<8x4xf32>
      %cst_58 = arith.constant 1.000000e+00 : f32
      %106 = vector.broadcast %cst_58 : f32 to vector<8x4xf32>
      %107 = arith.addf %106, %105 : vector<8x4xf32>
      %108 = arith.divf %106, %107 : vector<8x4xf32>
      %109 = vector.broadcast %57 : f32 to vector<8x4xf32>
      %110 = arith.mulf %108, %109 : vector<8x4xf32>
      %cst_59 = arith.constant 1.100000e+00 : f32
      %111 = vector.broadcast %cst_59 : f32 to vector<8x4xf32>
      %112 = arith.addf %110, %111 : vector<8x4xf32>
      %113 = arith.mulf %112, %112 : vector<8x4xf32>
      %cst_60 = arith.constant 1.000000e+00 : f32
      %114 = vector.broadcast %cst_60 : f32 to vector<8x4xf32>
      %115 = arith.subf %113, %114 : vector<8x4xf32>
      %cst_61 = arith.constant 9.99999993E-9 : f32
      %116 = vector.broadcast %cst_61 : f32 to vector<8x4xf32>
      %117 = arith.maximumf %103, %116 : vector<8x4xf32>
      %118 = arith.divf %115, %117 : vector<8x4xf32>
      %119 = math.sqrt %118 : vector<8x4xf32>
      %cst_62 = arith.constant dense<0.000000e+00> : vector<8x32xf32>
      %120 = tpu.matmul %112, %62, %cst_62 {dimension_numbers = #tpu.dot_dimension_numbers<[1], [0], [0], [1], [0, 0, 1, 1], [], []>} : vector<8x4xf32>, vector<4x32xf32>, vector<8x32xf32> -> vector<8x32xf32>
      %cst_63 = arith.constant dense<0.000000e+00> : vector<8x32xf32>
      %121 = tpu.matmul %119, %63, %cst_63 {dimension_numbers = #tpu.dot_dimension_numbers<[1], [0], [0], [1], [0, 0, 1, 1], [], []>} : vector<8x4xf32>, vector<4x32xf32>, vector<8x32xf32> -> vector<8x32xf32>
      %122 = arith.mulf %100, %121 : vector<8x32xf32>
      %123 = arith.addf %120, %122 : vector<8x32xf32>
      %c0_64 = arith.constant 0 : index
      %c0_65 = arith.constant 0 : index
      %c0_66 = arith.constant 0 : index
      %124 = vector.load %arg4[%c0_64, %c0_65, %c0_66] : memref<1x8x32xf32, #tpu.memory_space<vmem>>, vector<1x8x32xf32>
      %125 = vector.shape_cast %124 : vector<1x8x32xf32> to vector<8x32xf32>
      %c0_67 = arith.constant 0 : index
      %c0_68 = arith.constant 0 : index
      %126 = vector.load %arg9[%c0_67, %c0_68] : memref<32x32xf32, #tpu.memory_space<vmem>>, vector<32x32xf32>
      %cst_69 = arith.constant dense<0.000000e+00> : vector<8x32xf32>
      %127 = tpu.matmul %125, %126, %cst_69 {dimension_numbers = #tpu.dot_dimension_numbers<[1], [0], [0], [1], [0, 0, 1, 1], [], []>} : vector<8x32xf32>, vector<32x32xf32>, vector<8x32xf32> -> vector<8x32xf32>
      %c0_70 = arith.constant 0 : index
      %c0_71 = arith.constant 0 : index
      %128 = vector.load %arg10[%c0_70, %c0_71] : memref<1x32xf32, #tpu.memory_space<vmem>>, vector<1x32xf32>
      %129 = vector.broadcast %128 : vector<1x32xf32> to vector<8x32xf32>
      %130 = arith.addf %127, %129 : vector<8x32xf32>
      %cst_72 = arith.constant dense<0.000000e+00> : vector<8x4xf32>
      %131 = tpu.matmul %130, %60, %cst_72 {dimension_numbers = #tpu.dot_dimension_numbers<[1], [0], [0], [1], [0, 0, 1, 1], [], []>} : vector<8x32xf32>, vector<32x4xf32>, vector<8x4xf32> -> vector<8x4xf32>
      %132 = arith.mulf %130, %130 : vector<8x32xf32>
      %cst_73 = arith.constant dense<0.000000e+00> : vector<8x4xf32>
      %133 = tpu.matmul %132, %61, %cst_73 {dimension_numbers = #tpu.dot_dimension_numbers<[1], [0], [0], [1], [0, 0, 1, 1], [], []>} : vector<8x32xf32>, vector<32x4xf32>, vector<8x4xf32> -> vector<8x4xf32>
      %134 = arith.negf %131 : vector<8x4xf32>
      %135 = math.exp %134 : vector<8x4xf32>
      %cst_74 = arith.constant 1.000000e+00 : f32
      %136 = vector.broadcast %cst_74 : f32 to vector<8x4xf32>
      %137 = arith.addf %136, %135 : vector<8x4xf32>
      %138 = arith.divf %136, %137 : vector<8x4xf32>
      %139 = vector.broadcast %58 : f32 to vector<8x4xf32>
      %140 = arith.mulf %138, %139 : vector<8x4xf32>
      %cst_75 = arith.constant 1.100000e+00 : f32
      %141 = vector.broadcast %cst_75 : f32 to vector<8x4xf32>
      %142 = arith.addf %140, %141 : vector<8x4xf32>
      %143 = arith.mulf %142, %142 : vector<8x4xf32>
      %cst_76 = arith.constant 1.000000e+00 : f32
      %144 = vector.broadcast %cst_76 : f32 to vector<8x4xf32>
      %145 = arith.subf %143, %144 : vector<8x4xf32>
      %cst_77 = arith.constant 9.99999993E-9 : f32
      %146 = vector.broadcast %cst_77 : f32 to vector<8x4xf32>
      %147 = arith.maximumf %133, %146 : vector<8x4xf32>
      %148 = arith.divf %145, %147 : vector<8x4xf32>
      %149 = math.sqrt %148 : vector<8x4xf32>
      %cst_78 = arith.constant dense<0.000000e+00> : vector<8x32xf32>
      %150 = tpu.matmul %142, %62, %cst_78 {dimension_numbers = #tpu.dot_dimension_numbers<[1], [0], [0], [1], [0, 0, 1, 1], [], []>} : vector<8x4xf32>, vector<4x32xf32>, vector<8x32xf32> -> vector<8x32xf32>
      %cst_79 = arith.constant dense<0.000000e+00> : vector<8x32xf32>
      %151 = tpu.matmul %149, %63, %cst_79 {dimension_numbers = #tpu.dot_dimension_numbers<[1], [0], [0], [1], [0, 0, 1, 1], [], []>} : vector<8x4xf32>, vector<4x32xf32>, vector<8x32xf32> -> vector<8x32xf32>
      %152 = arith.mulf %130, %151 : vector<8x32xf32>
      %153 = arith.addf %150, %152 : vector<8x32xf32>
      %cst_80 = arith.constant dense<0.000000e+00> : vector<32xf32>
      %154 = vector.multi_reduction <add>, %62, %cst_80 [0] : vector<4x32xf32> to vector<32xf32>
      %155 = vector.shape_cast %154 : vector<32xf32> to vector<1x32xf32>
      %cst_81 = arith.constant 2.000000e+00 : f32
      %156 = vector.broadcast %cst_81 : f32 to vector<1x32xf32>
      %157 = arith.mulf %156, %155 : vector<1x32xf32>
      %cst_82 = arith.constant 1.000000e+00 : f32
      %158 = vector.broadcast %cst_82 : f32 to vector<1x32xf32>
      %159 = arith.subf %158, %157 : vector<1x32xf32>
      %cst_83 = arith.constant 2.000000e+00 : f32
      %160 = arith.mulf %cst_83, %59 : f32
      %161 = vector.broadcast %160 : f32 to vector<1x32xf32>
      %162 = arith.mulf %159, %161 : vector<1x32xf32>
      %163 = vector.broadcast %162 : vector<1x32xf32> to vector<8x32xf32>
      %164 = arith.mulf %153, %163 : vector<8x32xf32>
      %165 = vector.extract_strided_slice %164 {offsets = [0, 0], sizes = [8, 8], strides = [1, 1]} : vector<8x32xf32> to vector<8x8xf32>
      %c0_84 = arith.constant 0 : index
      %c0_85 = arith.constant 0 : index
      %c0_86 = arith.constant 0 : index
      %166 = vector.load %arg18[%c0_84, %c0_85, %c0_86] : memref<4x8x8xf32, #tpu.memory_space<vmem>>, vector<1x8x8xf32>
      %167 = vector.shape_cast %166 : vector<1x8x8xf32> to vector<8x8xf32>
      %168 = vector.shape_cast %165 : vector<8x8xf32> to vector<1x8x8xf32>
      tpu.vector_store %arg18[%c0_84, %c0_85, %c0_86], %168 {strides = array<i32>} : memref<4x8x8xf32, #tpu.memory_space<vmem>>, vector<1x8x8xf32>,
      %169 = vector.extract_strided_slice %93 {offsets = [0, 0], sizes = [8, 8], strides = [1, 1]} : vector<8x32xf32> to vector<8x8xf32>
      %c0_87 = arith.constant 0 : index
      %c0_88 = arith.constant 0 : index
      %c0_89 = arith.constant 0 : index
      %170 = vector.load %arg19[%c0_87, %c0_88, %c0_89] : memref<4x8x8xf32, #tpu.memory_space<vmem>>, vector<1x8x8xf32>
      %171 = vector.shape_cast %170 : vector<1x8x8xf32> to vector<8x8xf32>
      %172 = vector.shape_cast %169 : vector<8x8xf32> to vector<1x8x8xf32>
      tpu.vector_store %arg19[%c0_87, %c0_88, %c0_89], %172 {strides = array<i32>} : memref<4x8x8xf32, #tpu.memory_space<vmem>>, vector<1x8x8xf32>,
      %173 = vector.extract_strided_slice %123 {offsets = [0, 0], sizes = [8, 8], strides = [1, 1]} : vector<8x32xf32> to vector<8x8xf32>
      %c0_90 = arith.constant 0 : index
      %c0_91 = arith.constant 0 : index
      %c0_92 = arith.constant 0 : index
      %174 = vector.load %arg20[%c0_90, %c0_91, %c0_92] : memref<4x8x8xf32, #tpu.memory_space<vmem>>, vector<1x8x8xf32>
      %175 = vector.shape_cast %174 : vector<1x8x8xf32> to vector<8x8xf32>
      %176 = vector.shape_cast %173 : vector<8x8xf32> to vector<1x8x8xf32>
      tpu.vector_store %arg20[%c0_90, %c0_91, %c0_92], %176 {strides = array<i32>} : memref<4x8x8xf32, #tpu.memory_space<vmem>>, vector<1x8x8xf32>,
      %177 = vector.extract_strided_slice %164 {offsets = [0, 8], sizes = [8, 8], strides = [1, 1]} : vector<8x32xf32> to vector<8x8xf32>
      %c1_93 = arith.constant 1 : index
      %c0_94 = arith.constant 0 : index
      %c0_95 = arith.constant 0 : index
      %178 = vector.load %arg18[%c1_93, %c0_94, %c0_95] : memref<4x8x8xf32, #tpu.memory_space<vmem>>, vector<1x8x8xf32>
      %179 = vector.shape_cast %178 : vector<1x8x8xf32> to vector<8x8xf32>
      %180 = vector.shape_cast %177 : vector<8x8xf32> to vector<1x8x8xf32>
      tpu.vector_store %arg18[%c1_93, %c0_94, %c0_95], %180 {strides = array<i32>} : memref<4x8x8xf32, #tpu.memory_space<vmem>>, vector<1x8x8xf32>,
      %181 = vector.extract_strided_slice %93 {offsets = [0, 8], sizes = [8, 8], strides = [1, 1]} : vector<8x32xf32> to vector<8x8xf32>
      %c1_96 = arith.constant 1 : index
      %c0_97 = arith.constant 0 : index
      %c0_98 = arith.constant 0 : index
      %182 = vector.load %arg19[%c1_96, %c0_97, %c0_98] : memref<4x8x8xf32, #tpu.memory_space<vmem>>, vector<1x8x8xf32>
      %183 = vector.shape_cast %182 : vector<1x8x8xf32> to vector<8x8xf32>
      %184 = vector.shape_cast %181 : vector<8x8xf32> to vector<1x8x8xf32>
      tpu.vector_store %arg19[%c1_96, %c0_97, %c0_98], %184 {strides = array<i32>} : memref<4x8x8xf32, #tpu.memory_space<vmem>>, vector<1x8x8xf32>,
      %185 = vector.extract_strided_slice %123 {offsets = [0, 8], sizes = [8, 8], strides = [1, 1]} : vector<8x32xf32> to vector<8x8xf32>
      %c1_99 = arith.constant 1 : index
      %c0_100 = arith.constant 0 : index
      %c0_101 = arith.constant 0 : index
      %186 = vector.load %arg20[%c1_99, %c0_100, %c0_101] : memref<4x8x8xf32, #tpu.memory_space<vmem>>, vector<1x8x8xf32>
      %187 = vector.shape_cast %186 : vector<1x8x8xf32> to vector<8x8xf32>
      %188 = vector.shape_cast %185 : vector<8x8xf32> to vector<1x8x8xf32>
      tpu.vector_store %arg20[%c1_99, %c0_100, %c0_101], %188 {strides = array<i32>} : memref<4x8x8xf32, #tpu.memory_space<vmem>>, vector<1x8x8xf32>,
      %189 = vector.extract_strided_slice %164 {offsets = [0, 16], sizes = [8, 8], strides = [1, 1]} : vector<8x32xf32> to vector<8x8xf32>
      %c2_102 = arith.constant 2 : index
      %c0_103 = arith.constant 0 : index
      %c0_104 = arith.constant 0 : index
      %190 = vector.load %arg18[%c2_102, %c0_103, %c0_104] : memref<4x8x8xf32, #tpu.memory_space<vmem>>, vector<1x8x8xf32>
      %191 = vector.shape_cast %190 : vector<1x8x8xf32> to vector<8x8xf32>
      %192 = vector.shape_cast %189 : vector<8x8xf32> to vector<1x8x8xf32>
      tpu.vector_store %arg18[%c2_102, %c0_103, %c0_104], %192 {strides = array<i32>} : memref<4x8x8xf32, #tpu.memory_space<vmem>>, vector<1x8x8xf32>,
      %193 = vector.extract_strided_slice %93 {offsets = [0, 16], sizes = [8, 8], strides = [1, 1]} : vector<8x32xf32> to vector<8x8xf32>
      %c2_105 = arith.constant 2 : index
      %c0_106 = arith.constant 0 : index
      %c0_107 = arith.constant 0 : index
      %194 = vector.load %arg19[%c2_105, %c0_106, %c0_107] : memref<4x8x8xf32, #tpu.memory_space<vmem>>, vector<1x8x8xf32>
      %195 = vector.shape_cast %194 : vector<1x8x8xf32> to vector<8x8xf32>
      %196 = vector.shape_cast %193 : vector<8x8xf32> to vector<1x8x8xf32>
      tpu.vector_store %arg19[%c2_105, %c0_106, %c0_107], %196 {strides = array<i32>} : memref<4x8x8xf32, #tpu.memory_space<vmem>>, vector<1x8x8xf32>,
      %197 = vector.extract_strided_slice %123 {offsets = [0, 16], sizes = [8, 8], strides = [1, 1]} : vector<8x32xf32> to vector<8x8xf32>
      %c2_108 = arith.constant 2 : index
      %c0_109 = arith.constant 0 : index
      %c0_110 = arith.constant 0 : index
      %198 = vector.load %arg20[%c2_108, %c0_109, %c0_110] : memref<4x8x8xf32, #tpu.memory_space<vmem>>, vector<1x8x8xf32>
      %199 = vector.shape_cast %198 : vector<1x8x8xf32> to vector<8x8xf32>
      %200 = vector.shape_cast %197 : vector<8x8xf32> to vector<1x8x8xf32>
      tpu.vector_store %arg20[%c2_108, %c0_109, %c0_110], %200 {strides = array<i32>} : memref<4x8x8xf32, #tpu.memory_space<vmem>>, vector<1x8x8xf32>,
      %201 = vector.extract_strided_slice %164 {offsets = [0, 24], sizes = [8, 8], strides = [1, 1]} : vector<8x32xf32> to vector<8x8xf32>
      %c3_111 = arith.constant 3 : index
      %c0_112 = arith.constant 0 : index
      %c0_113 = arith.constant 0 : index
      %202 = vector.load %arg18[%c3_111, %c0_112, %c0_113] : memref<4x8x8xf32, #tpu.memory_space<vmem>>, vector<1x8x8xf32>
      %203 = vector.shape_cast %202 : vector<1x8x8xf32> to vector<8x8xf32>
      %204 = vector.shape_cast %201 : vector<8x8xf32> to vector<1x8x8xf32>
      tpu.vector_store %arg18[%c3_111, %c0_112, %c0_113], %204 {strides = array<i32>} : memref<4x8x8xf32, #tpu.memory_space<vmem>>, vector<1x8x8xf32>,
      %205 = vector.extract_strided_slice %93 {offsets = [0, 24], sizes = [8, 8], strides = [1, 1]} : vector<8x32xf32> to vector<8x8xf32>
      %c3_114 = arith.constant 3 : index
      %c0_115 = arith.constant 0 : index
      %c0_116 = arith.constant 0 : index
      %206 = vector.load %arg19[%c3_114, %c0_115, %c0_116] : memref<4x8x8xf32, #tpu.memory_space<vmem>>, vector<1x8x8xf32>
      %207 = vector.shape_cast %206 : vector<1x8x8xf32> to vector<8x8xf32>
      %208 = vector.shape_cast %205 : vector<8x8xf32> to vector<1x8x8xf32>
      tpu.vector_store %arg19[%c3_114, %c0_115, %c0_116], %208 {strides = array<i32>} : memref<4x8x8xf32, #tpu.memory_space<vmem>>, vector<1x8x8xf32>,
      %209 = vector.extract_strided_slice %123 {offsets = [0, 24], sizes = [8, 8], strides = [1, 1]} : vector<8x32xf32> to vector<8x8xf32>
      %c3_117 = arith.constant 3 : index
      %c0_118 = arith.constant 0 : index
      %c0_119 = arith.constant 0 : index
      %210 = vector.load %arg20[%c3_117, %c0_118, %c0_119] : memref<4x8x8xf32, #tpu.memory_space<vmem>>, vector<1x8x8xf32>
      %211 = vector.shape_cast %210 : vector<1x8x8xf32> to vector<8x8xf32>
      %212 = vector.shape_cast %209 : vector<8x8xf32> to vector<1x8x8xf32>
      tpu.vector_store %arg20[%c3_117, %c0_118, %c0_119], %212 {strides = array<i32>} : memref<4x8x8xf32, #tpu.memory_space<vmem>>, vector<1x8x8xf32>,
    } else {
    }
    %3 = arith.index_cast %arg1 : i32 to index
    %c0 = arith.constant 0 : index
    %c0_1 = arith.constant 0 : index
    %4 = vector.load %arg18[%3, %c0, %c0_1] : memref<4x8x8xf32, #tpu.memory_space<vmem>>, vector<1x8x8xf32>
    %5 = vector.shape_cast %4 : vector<1x8x8xf32> to vector<8x8xf32>
    %6 = arith.index_cast %arg1 : i32 to index
    %c0_2 = arith.constant 0 : index
    %c0_3 = arith.constant 0 : index
    %7 = vector.load %arg19[%6, %c0_2, %c0_3] : memref<4x8x8xf32, #tpu.memory_space<vmem>>, vector<1x8x8xf32>
    %8 = vector.shape_cast %7 : vector<1x8x8xf32> to vector<8x8xf32>
    %9 = arith.index_cast %arg1 : i32 to index
    %c0_4 = arith.constant 0 : index
    %c0_5 = arith.constant 0 : index
    %10 = vector.load %arg20[%9, %c0_4, %c0_5] : memref<4x8x8xf32, #tpu.memory_space<vmem>>, vector<1x8x8xf32>
    %11 = vector.shape_cast %10 : vector<1x8x8xf32> to vector<8x8xf32>
    %cst = arith.constant dense<0.000000e+00> : vector<8x8xf32>
    %12 = tpu.matmul %5, %8, %cst {dimension_numbers = #tpu.dot_dimension_numbers<[1], [1], [0], [0], [0, 0, 1, 0], [], []>} : vector<8x8xf32>, vector<8x8xf32>, vector<8x8xf32> -> vector<8x8xf32>
    %cst_6 = arith.constant dense<0xFF800000> : vector<8xf32>
    %13 = vector.multi_reduction <maximumf>, %12, %cst_6 [1] : vector<8x8xf32> to vector<8xf32>
    %14 = vector.shape_cast %13 : vector<8xf32> to vector<8x1xf32>
    %15 = vector.broadcast %14 : vector<8x1xf32> to vector<8x8xf32>
    %16 = arith.subf %12, %15 : vector<8x8xf32>
    %17 = math.exp %16 : vector<8x8xf32>
    %cst_7 = arith.constant dense<0.000000e+00> : vector<8xf32>
    %18 = vector.multi_reduction <add>, %17, %cst_7 [1] : vector<8x8xf32> to vector<8xf32>
    %19 = vector.shape_cast %18 : vector<8xf32> to vector<8x1xf32>
    %20 = tpu.reciprocal %19 : vector<8x1xf32> -> vector<8x1xf32>
    %21 = vector.broadcast %20 : vector<8x1xf32> to vector<8x8xf32>
    %22 = arith.mulf %17, %21 : vector<8x8xf32>
    %c0_8 = arith.constant 0 : index
    %c0_9 = arith.constant 0 : index
    %c0_10 = arith.constant 0 : index
    %c0_11 = arith.constant 0 : index
    %23 = vector.load %arg17[%c0_8, %c0_9, %c0_10, %c0_11] : memref<1x1x8x8xf32, #tpu.memory_space<vmem>>, vector<1x1x8x8xf32>
    %24 = vector.shape_cast %23 : vector<1x1x8x8xf32> to vector<8x8xf32>
    %25 = vector.shape_cast %22 : vector<8x8xf32> to vector<1x1x8x8xf32>
    tpu.vector_store %arg17[%c0_8, %c0_9, %c0_10, %c0_11], %25 {strides = array<i32>} : memref<1x1x8x8xf32, #tpu.memory_space<vmem>>, vector<1x1x8x8xf32>,
    %cst_12 = arith.constant dense<0.000000e+00> : vector<8x8xf32>
    %26 = tpu.matmul %22, %11, %cst_12 {dimension_numbers = #tpu.dot_dimension_numbers<[1], [0], [0], [1], [0, 0, 1, 1], [], []>} : vector<8x8xf32>, vector<8x8xf32>, vector<8x8xf32> -> vector<8x8xf32>
    %27 = tpu.iota {dimensions = array<i32: 1>} : vector<1x8xi32>
    %c0_i32_13 = arith.constant 0 : i32
    %28 = vector.broadcast %c0_i32_13 : i32 to vector<1x8xi32>
    %29 = arith.cmpi eq, %27, %28 : vector<1x8xi32>
    %cst_14 = arith.constant -1.000000e+00 : f32
    %cst_15 = arith.constant 1.000000e+00 : f32
    %30 = vector.broadcast %cst_14 : f32 to vector<1x8xf32>
    %31 = vector.broadcast %cst_15 : f32 to vector<1x8xf32>
    %32 = arith.select %29, %30, %31 : vector<1x8xi1>, vector<1x8xf32>
    %33 = vector.broadcast %32 : vector<1x8xf32> to vector<8x8xf32>
    %34 = arith.mulf %33, %26 : vector<8x8xf32>
    %35 = arith.mulf %34, %26 : vector<8x8xf32>
    %cst_16 = arith.constant dense<0.000000e+00> : vector<8xf32>
    %36 = vector.multi_reduction <add>, %35, %cst_16 [1] : vector<8x8xf32> to vector<8xf32>
    %37 = vector.shape_cast %36 : vector<8xf32> to vector<8x1xf32>
    %38 = math.absf %37 : vector<8x1xf32>
    %cst_17 = arith.constant 9.99999993E-9 : f32
    %39 = vector.broadcast %cst_17 : f32 to vector<8x1xf32>
    %40 = arith.maximumf %38, %39 : vector<8x1xf32>
    %41 = math.rsqrt %40 : vector<8x1xf32>
    %42 = vector.broadcast %41 : vector<8x1xf32> to vector<8x8xf32>
    %43 = arith.mulf %26, %42 : vector<8x8xf32>
    %c0_i32_18 = arith.constant 0 : i32
    %44 = arith.cmpi eq, %arg1, %c0_i32_18 : i32
    %45 = arith.extui %44 : i1 to i32
    %c0_i32_19 = arith.constant 0 : i32
    %46 = arith.cmpi ne, %45, %c0_i32_19 : i32
    scf.if %46 {
      %c0_23 = arith.constant 0 : index
      %c0_24 = arith.constant 0 : index
      %c0_25 = arith.constant 0 : index
      %56 = vector.load %arg16[%c0_23, %c0_24, %c0_25] : memref<1x8x32xf32, #tpu.memory_space<vmem>>, vector<1x8x8xf32>
      %57 = vector.shape_cast %56 : vector<1x8x8xf32> to vector<8x8xf32>
      %58 = vector.shape_cast %43 : vector<8x8xf32> to vector<1x8x8xf32>
      tpu.vector_store %arg16[%c0_23, %c0_24, %c0_25], %58 {strides = array<i32>} : memref<1x8x32xf32, #tpu.memory_space<vmem>>, vector<1x8x8xf32>,
    } else {
    }
    %c1_i32 = arith.constant 1 : i32
    %47 = arith.cmpi eq, %arg1, %c1_i32 : i32
    %48 = arith.extui %47 : i1 to i32
    %c0_i32_20 = arith.constant 0 : i32
    %49 = arith.cmpi ne, %48, %c0_i32_20 : i32
    scf.if %49 {
      %c0_23 = arith.constant 0 : index
      %c0_24 = arith.constant 0 : index
      %c8 = arith.constant 8 : index
      %56 = vector.load %arg16[%c0_23, %c0_24, %c8] : memref<1x8x32xf32, #tpu.memory_space<vmem>>, vector<1x8x8xf32>
      %57 = vector.shape_cast %56 : vector<1x8x8xf32> to vector<8x8xf32>
      %58 = vector.shape_cast %43 : vector<8x8xf32> to vector<1x8x8xf32>
      tpu.vector_store %arg16[%c0_23, %c0_24, %c8], %58 {strides = array<i32>} : memref<1x8x32xf32, #tpu.memory_space<vmem>>, vector<1x8x8xf32>,
    } else {
    }
    %c2_i32 = arith.constant 2 : i32
    %50 = arith.cmpi eq, %arg1, %c2_i32 : i32
    %51 = arith.extui %50 : i1 to i32
    %c0_i32_21 = arith.constant 0 : i32
    %52 = arith.cmpi ne, %51, %c0_i32_21 : i32
    scf.if %52 {
      %c0_23 = arith.constant 0 : index
      %c0_24 = arith.constant 0 : index
      %c16 = arith.constant 16 : index
      %56 = vector.load %arg16[%c0_23, %c0_24, %c16] : memref<1x8x32xf32, #tpu.memory_space<vmem>>, vector<1x8x8xf32>
      %57 = vector.shape_cast %56 : vector<1x8x8xf32> to vector<8x8xf32>
      %58 = vector.shape_cast %43 : vector<8x8xf32> to vector<1x8x8xf32>
      tpu.vector_store %arg16[%c0_23, %c0_24, %c16], %58 {strides = array<i32>} : memref<1x8x32xf32, #tpu.memory_space<vmem>>, vector<1x8x8xf32>,
    } else {
    }
    %c3_i32 = arith.constant 3 : i32
    %53 = arith.cmpi eq, %arg1, %c3_i32 : i32
    %54 = arith.extui %53 : i1 to i32
    %c0_i32_22 = arith.constant 0 : i32
    %55 = arith.cmpi ne, %54, %c0_i32_22 : i32
    scf.if %55 {
      %c0_23 = arith.constant 0 : index
      %c0_24 = arith.constant 0 : index
      %c24 = arith.constant 24 : index
      %56 = vector.load %arg16[%c0_23, %c0_24, %c24] : memref<1x8x32xf32, #tpu.memory_space<vmem>>, vector<1x8x8xf32>
      %57 = vector.shape_cast %56 : vector<1x8x8xf32> to vector<8x8xf32>
      %58 = vector.shape_cast %43 : vector<8x8xf32> to vector<1x8x8xf32>
      tpu.vector_store %arg16[%c0_23, %c0_24, %c24], %58 {strides = array<i32>} : memref<1x8x32xf32, #tpu.memory_space<vmem>>, vector<1x8x8xf32>,
    } else {
    }
    return
  }
  func.func @transform_0(%arg0: i32, %arg1: i32) -> (i32, i32, i32) {
    %c0_i32 = arith.constant 0 : i32
    %c0_i32_0 = arith.constant 0 : i32
    %c0_i32_1 = arith.constant 0 : i32
    return %arg0, %c0_i32, %c0_i32_0 : i32, i32, i32
  }
  func.func @transform_1(%arg0: i32, %arg1: i32) -> (i32, i32, i32) {
    %c0_i32 = arith.constant 0 : i32
    %c0_i32_0 = arith.constant 0 : i32
    %c0_i32_1 = arith.constant 0 : i32
    return %arg0, %c0_i32, %c0_i32_0 : i32, i32, i32
  }
  func.func @transform_2(%arg0: i32, %arg1: i32) -> (i32, i32, i32) {
    %c0_i32 = arith.constant 0 : i32
    %c0_i32_0 = arith.constant 0 : i32
    %c0_i32_1 = arith.constant 0 : i32
    return %arg0, %c0_i32, %c0_i32_0 : i32, i32, i32
  }
  func.func @transform_3(%arg0: i32, %arg1: i32) -> (i32, i32) {
    %c0_i32 = arith.constant 0 : i32
    %c0_i32_0 = arith.constant 0 : i32
    %c0_i32_1 = arith.constant 0 : i32
    return %c0_i32, %c0_i32_0 : i32, i32
  }
  func.func @transform_4(%arg0: i32, %arg1: i32) -> (i32, i32) {
    %c0_i32 = arith.constant 0 : i32
    %c0_i32_0 = arith.constant 0 : i32
    %c0_i32_1 = arith.constant 0 : i32
    return %c0_i32, %c0_i32_0 : i32, i32
  }
  func.func @transform_5(%arg0: i32, %arg1: i32) -> (i32, i32) {
    %c0_i32 = arith.constant 0 : i32
    %c0_i32_0 = arith.constant 0 : i32
    %c0_i32_1 = arith.constant 0 : i32
    return %c0_i32, %c0_i32_0 : i32, i32
  }
  func.func @transform_6(%arg0: i32, %arg1: i32) -> (i32, i32) {
    %c0_i32 = arith.constant 0 : i32
    %c0_i32_0 = arith.constant 0 : i32
    %c0_i32_1 = arith.constant 0 : i32
    return %c0_i32, %c0_i32_0 : i32, i32
  }
  func.func @transform_7(%arg0: i32, %arg1: i32) -> (i32, i32) {
    %c0_i32 = arith.constant 0 : i32
    %c0_i32_0 = arith.constant 0 : i32
    %c0_i32_1 = arith.constant 0 : i32
    return %c0_i32, %c0_i32_0 : i32, i32
  }
  func.func @transform_8(%arg0: i32, %arg1: i32) -> (i32, i32) {
    %c0_i32 = arith.constant 0 : i32
    %c0_i32_0 = arith.constant 0 : i32
    %c0_i32_1 = arith.constant 0 : i32
    return %c0_i32, %c0_i32_0 : i32, i32
  }
  func.func @transform_9(%arg0: i32, %arg1: i32) -> (i32, i32) {
    %c0_i32 = arith.constant 0 : i32
    %c0_i32_0 = arith.constant 0 : i32
    %c0_i32_1 = arith.constant 0 : i32
    return %c0_i32, %c0_i32_0 : i32, i32
  }
  func.func @transform_10(%arg0: i32, %arg1: i32) -> (i32, i32) {
    %c0_i32 = arith.constant 0 : i32
    %c0_i32_0 = arith.constant 0 : i32
    %c0_i32_1 = arith.constant 0 : i32
    return %c0_i32, %c0_i32_0 : i32, i32
  }
  func.func @transform_11(%arg0: i32, %arg1: i32) -> (i32, i32) {
    %c0_i32 = arith.constant 0 : i32
    %c0_i32_0 = arith.constant 0 : i32
    %c0_i32_1 = arith.constant 0 : i32
    return %c0_i32, %c0_i32_0 : i32, i32
  }
  func.func @transform_12(%arg0: i32, %arg1: i32) -> (i32, i32) {
    %c0_i32 = arith.constant 0 : i32
    %c0_i32_0 = arith.constant 0 : i32
    %c0_i32_1 = arith.constant 0 : i32
    return %c0_i32, %c0_i32_0 : i32, i32
  }
  func.func @transform_13(%arg0: i32, %arg1: i32) -> i32 {
    %c0_i32 = arith.constant 0 : i32
    %c0_i32_0 = arith.constant 0 : i32
    return %c0_i32 : i32
  }
  func.func @transform_14(%arg0: i32, %arg1: i32) -> (i32, i32, i32) {
    %c0_i32 = arith.constant 0 : i32
    %c0_i32_0 = arith.constant 0 : i32
    %c0_i32_1 = arith.constant 0 : i32
    return %arg0, %c0_i32, %c0_i32_0 : i32, i32, i32
  }
  func.func @transform_15(%arg0: i32, %arg1: i32) -> (i32, i32, i32, i32) {
    %c0_i32 = arith.constant 0 : i32
    %c0_i32_0 = arith.constant 0 : i32
    %c0_i32_1 = arith.constant 0 : i32
    return %arg0, %arg1, %c0_i32, %c0_i32_0 : i32, i32, i32, i32
  }
}

</mosaic_0001>

<llo_original>
// kernel: tpu_custom_call.1
$region0: #{tpu_custom_call.1}
  #allocation0 [shape = 'u32[]', space=smem, size = 0x4, offset = 0x4, fixed_abs, tag = 'smem constant byte address 0x4 - core index']
  #allocation1 [shape = 'u32[144,128]{1,0:T(1,128)}', space=vmem, size = 0x12000, scoped, tag = 'internal scratch']
  #allocation2 [shape = 'f32[4,8,8]{2,1,0:T(8,128)}', space=vmem, size = 0x4000, scoped, tag = 'scratch operand']
  #allocation3 [shape = 'f32[4,8,8]{2,1,0:T(8,128)}', space=vmem, size = 0x4000, scoped, tag = 'scratch operand']
  #allocation4 [shape = 'f32[4,8,8]{2,1,0:T(8,128)}', space=vmem, size = 0x4000, scoped, tag = 'scratch operand']
  %s0 = inlined_call_operand.hbm [shape: f32[2,8,32], index: 0, kind: input, shape index: {}]
  %s1 = inlined_call_operand.hbm [shape: f32[2,8,32], index: 1, kind: input, shape index: {}]
  %s2 = inlined_call_operand.hbm [shape: f32[2,8,32], index: 2, kind: input, shape index: {}]
  %s3 = inlined_call_operand.vmem [shape: f32[32,32], index: 3, kind: input, shape index: {}]
  %s4 = inlined_call_operand.vmem [shape: f32[1,32], index: 4, kind: input, shape index: {}]
  %s5 = inlined_call_operand.vmem [shape: f32[32,32], index: 5, kind: input, shape index: {}]
  %s6 = inlined_call_operand.hbm [shape: f32[1,32], index: 6, kind: input, shape index: {}]
  %s7 = inlined_call_operand.vmem [shape: f32[32,32], index: 7, kind: input, shape index: {}]
  %s8 = inlined_call_operand.hbm [shape: f32[1,32], index: 8, kind: input, shape index: {}]
  %s9 = inlined_call_operand.vmem [shape: f32[32,4], index: 9, kind: input, shape index: {}]
  %s10 = inlined_call_operand.vmem [shape: f32[32,4], index: 10, kind: input, shape index: {}]
  %s11 = inlined_call_operand.vmem [shape: f32[4,32], index: 11, kind: input, shape index: {}]
  %s12 = inlined_call_operand.vmem [shape: f32[4,32], index: 12, kind: input, shape index: {}]
  %s13 = inlined_call_operand.vmem [shape: f32[4], index: 13, kind: input, shape index: {}]
  %s14 = inlined_call_operand.hbm [shape: f32[2,8,32], index: 14, kind: output, shape index: {0}]
  %s15 = inlined_call_operand.hbm [shape: f32[2,4,8,8], index: 15, kind: output, shape index: {1}]
  %16 = xla_tuple %s14, %s15
  %s17 = sld [smem:[#allocation0]]
  $region141: #{tpu_custom_call.1} parent=0
    _
  %s19 = ssub.s32 1, %s17
  %s20 = scalar_select 0, %s19, %s17
  $region1: #{tpu_custom_call.1} parent=0
    #allocation5 [shape = 'u8[8192]{0}', space=vmem, size = 0x2000, scoped, tag = 'input window, operand 0']
    #allocation6 [shape = 's32[2]{0}', space=sflag, size = 0x8, scoped, tag = 'scoped memory for tpu_custom_call.1']
    #allocation7 [shape = 's32[2]{0}', space=sflag, size = 0x8, scoped, tag = 'scoped memory for tpu_custom_call.1']
    #allocation8 [shape = 's32[2]{0}', space=sflag, size = 0x8, scoped, tag = 'scoped memory for tpu_custom_call.1']
    #allocation9 [shape = 'u8[8192]{0}', space=vmem, size = 0x2000, scoped, tag = 'input window, operand 1']
    #allocation10 [shape = 's32[2]{0}', space=sflag, size = 0x8, scoped, tag = 'scoped memory for tpu_custom_call.1']
    #allocation11 [shape = 'u8[8192]{0}', space=vmem, size = 0x2000, scoped, tag = 'input window, operand 2']
    #allocation12 [shape = 'u8[512]{0}', space=vmem, size = 0x400, scoped, tag = 'input window, operand 6, single buffered']
    #allocation13 [shape = 's32[1]{0}', space=sflag, size = 0x4, scoped, tag = 'scoped memory for tpu_custom_call.1']
    #allocation14 [shape = 'u8[512]{0}', space=vmem, size = 0x400, scoped, tag = 'input window, operand 8, single buffered']
    #allocation15 [shape = 'u8[512]{0}', space=smem, size = 0x200, scoped, tag = 'input window, operand 13, single buffered']
    #allocation16 [shape = 'u8[8192]{0}', space=vmem, size = 0x2000, scoped, tag = 'output window, operand 0']
    #allocation17 [shape = 'u8[8192]{0}', space=vmem, size = 0x2000, scoped, tag = 'output window, operand 1']
    #allocation18 [shape = 's32[2]{0}', space=sflag, size = 0x8, scoped, tag = 'scoped memory for tpu_custom_call.1']
    %21 = vsyncpa [#allocation6], 0
    %s22 = scalar_lea.sflag [#allocation6], 1
    %23 = vsyncpa %s22, 0
    %24 = vsyncpa [#allocation10], 0
    %s25 = scalar_lea.sflag [#allocation10], 1
    %26 = vsyncpa %s25, 0
    %27 = vsyncpa [#allocation13], 0
    %28 = vsyncpa [#allocation8], 0
    %29 = vsyncpa [#allocation7], 0
    %s30 = scalar_lea.sflag [#allocation7], 1
    %31 = vsyncpa %s30, 0
    %32 = vsyncpa [#allocation18], 0
    %s33 = scalar_lea.sflag [#allocation18], 1
    %34 = vsyncpa %s33, 0
    loop: start=0, step=1, limit=10
    $region2: #{tpu_custom_call.1} parent=1 // loop_pre_header
      _
    $region3: #{tpu_custom_call.1} parent=1 // loop_header
      %s36 = sphi 0, %s40
      %p37 = scmp.ge.s32.totalorder %s36, 10
      %s43 = sphi 0, %s55
      %s44 = sphi 0, %s51
      %s45 = sphi 0, %s43
      %s46 = sphi 0, %s44
      %s47 = sphi 0, %s45
      %s48 = sphi 0, %s46
      %s58 = sphi 0, %s60
      %s61 = sphi 0, %s58
      %s62 = sphi 0, %s61
      %s78 = sphi 0, %s62
      %s84 = sphi 0, %s86
      %s87 = sphi 0, %s84
      %s88 = sphi 0, %s87
      %s104 = sphi 0, %s88
      %s110 = sphi 0, %s112
      %s113 = sphi 0, %s110
      %s114 = sphi 0, %s113
      %s130 = sphi 0, %s114
      %s134 = sphi 0, %s134
      %s136 = sphi 0, %s134
      %s137 = sphi 0, %s136
      %s151 = sphi 0, %s137
      %s155 = sphi 0, %s155
      %s157 = sphi 0, %s155
      %s158 = sphi 0, %s157
      %s172 = sphi 0, %s158
      %s176 = sphi 0, %s176
      %s178 = sphi 0, %s176
      %s179 = sphi 0, %s178
      %s193 = sphi 0, %s179
      %s197 = sphi 0, %s197
      %s199 = sphi 0, %s197
      %s200 = sphi 0, %s199
      %s214 = sphi 0, %s200
      %s218 = sphi 0, %s218
      %s220 = sphi 0, %s218
      %s221 = sphi 0, %s220
      %s235 = sphi 0, %s221
      %s239 = sphi 0, %s239
      %s241 = sphi 0, %s239
      %s242 = sphi 0, %s241
      %s256 = sphi 0, %s242
      %s260 = sphi 0, %s260
      %s262 = sphi 0, %s260
      %s263 = sphi 0, %s262
      %s277 = sphi 0, %s263
      %s281 = sphi 0, %s281
      %s283 = sphi 0, %s281
      %s284 = sphi 0, %s283
      %s298 = sphi 0, %s284
      %s302 = sphi 0, %s302
      %s304 = sphi 0, %s302
      %s305 = sphi 0, %s304
      %s319 = sphi 0, %s305
      %s323 = sphi 0, %s323
      %s325 = sphi 0, %s323
      %s326 = sphi 0, %s325
      %s340 = sphi 0, %s326
      %s344 = sphi 0, %s344
      %s346 = sphi 0, %s344
      %s347 = sphi 0, %s346
      %s361 = sphi 0, %s347
      %s367 = sphi 0, %s369
      %s370 = sphi 0, %s367
      %s371 = sphi 0, %s370
      %s387 = sphi 0, %s371
      %s395 = sphi 0, %s397
      %s398 = sphi 0, %s395
      %s399 = sphi 0, %s398
      %s415 = sphi 0, %s399
    $region4: #{tpu_custom_call.1} parent=1 // loop_header_branch
      %39 = sbr.rel (%p37) target = $region8
    $region5: #{tpu_custom_call.1} parent=1 // loop_body
      %s41 = ssub.s32 %s36, 1
      %s42 = ssub.s32 %s36, 2
      %s49 = sadd.s32 1, %s44
      %p50 = scmp.ge.s32.totalorder %s49, 4
      %s51 = scalar_select %p50, 0, %s49
      %s52 = sadd.s32 1, %s43
      %s53 = scalar_select %p50, %s52, %s43
      %p54 = scmp.ge.s32.totalorder %s53, 2
      %s55 = scalar_select %p54, 0, %s53
      %s56 = ssub.s32 %s43, %s55
      %p57 = scmp.eq.s32.totalorder %s56, 0
      %s59 = sadd.s32 %s58, 1
      %s60 = scalar_select %p57, %s58, %s59
      %p63 = pneg %p57
      %p64 = scmp.eq.s32.totalorder %s36, 7
      %p65 = por %p63, %p64
      %p66 = scmp.ne.s32.totalorder %s58, %s61
      %p67 = scmp.eq.s32.totalorder %s36, 0
      %p68 = por %p66, %p67
      %p69 = scmp.ne.s32.totalorder %s58, %s61
      %p70 = scmp.eq.s32.totalorder %s41, 7
      %p71 = por %p69, %p70
      %p72 = scmp.ne.s32.totalorder %s61, %s62
      %p73 = scmp.eq.s32.totalorder %s41, 0
      %p74 = por %p72, %p73
      %p75 = scmp.ne.s32.totalorder %s61, %s62
      %p76 = scmp.eq.s32.totalorder %s42, 7
      %p77 = por %p75, %p76
      %p79 = scmp.ne.s32.totalorder %s62, %s78
      %p80 = scmp.eq.s32.totalorder %s42, 0
      %p81 = por %p79, %p80
      %s82 = ssub.s32 %s43, %s55
      %p83 = scmp.eq.s32.totalorder %s82, 0
      %s85 = sadd.s32 %s84, 1
      %s86 = scalar_select %p83, %s84, %s85
      %p89 = pneg %p83
      %p90 = scmp.eq.s32.totalorder %s36, 7
      %p91 = por %p89, %p90
      %p92 = scmp.ne.s32.totalorder %s84, %s87
      %p93 = scmp.eq.s32.totalorder %s36, 0
      %p94 = por %p92, %p93
      %p95 = scmp.ne.s32.totalorder %s84, %s87
      %p96 = scmp.eq.s32.totalorder %s41, 7
      %p97 = por %p95, %p96
      %p98 = scmp.ne.s32.totalorder %s87, %s88
      %p99 = scmp.eq.s32.totalorder %s41, 0
      %p100 = por %p98, %p99
      %p101 = scmp.ne.s32.totalorder %s87, %s88
      %p102 = scmp.eq.s32.totalorder %s42, 7
      %p103 = por %p101, %p102
      %p105 = scmp.ne.s32.totalorder %s88, %s104
      %p106 = scmp.eq.s32.totalorder %s42, 0
      %p107 = por %p105, %p106
      %s108 = ssub.s32 %s43, %s55
      %p109 = scmp.eq.s32.totalorder %s108, 0
      %s111 = sadd.s32 %s110, 1
      %s112 = scalar_select %p109, %s110, %s111
      %p115 = pneg %p109
      %p116 = scmp.eq.s32.totalorder %s36, 7
      %p117 = por %p115, %p116
      %p118 = scmp.ne.s32.totalorder %s110, %s113
      %p119 = scmp.eq.s32.totalorder %s36, 0
      %p120 = por %p118, %p119
      %p121 = scmp.ne.s32.totalorder %s110, %s113
      %p122 = scmp.eq.s32.totalorder %s41, 7
      %p123 = por %p121, %p122
      %p124 = scmp.ne.s32.totalorder %s113, %s114
      %p125 = scmp.eq.s32.totalorder %s41, 0
      %p126 = por %p124, %p125
      %p127 = scmp.ne.s32.totalorder %s113, %s114
      %p128 = scmp.eq.s32.totalorder %s42, 7
      %p129 = por %p127, %p128
      %p131 = scmp.ne.s32.totalorder %s114, %s130
      %p132 = scmp.eq.s32.totalorder %s42, 0
      %p133 = por %p131, %p132
      %s135 = sadd.s32 %s134, 1
      %p138 = scmp.eq.s32.totalorder %s36, 7
      %p139 = scmp.ne.s32.totalorder %s134, %s136
      %p140 = scmp.eq.s32.totalorder %s36, 0
      %p141 = por %p139, %p140
      %p142 = scmp.ne.s32.totalorder %s134, %s136
      %p143 = scmp.eq.s32.totalorder %s41, 7
      %p144 = por %p142, %p143
      %p145 = scmp.ne.s32.totalorder %s136, %s137
      %p146 = scmp.eq.s32.totalorder %s41, 0
      %p147 = por %p145, %p146
      %p148 = scmp.ne.s32.totalorder %s136, %s137
      %p149 = scmp.eq.s32.totalorder %s42, 7
      %p150 = por %p148, %p149
      %p152 = scmp.ne.s32.totalorder %s137, %s151
      %p153 = scmp.eq.s32.totalorder %s42, 0
      %p154 = por %p152, %p153
      %s156 = sadd.s32 %s155, 1
      %p159 = scmp.eq.s32.totalorder %s36, 7
      %p160 = scmp.ne.s32.totalorder %s155, %s157
      %p161 = scmp.eq.s32.totalorder %s36, 0
      %p162 = por %p160, %p161
      %p163 = scmp.ne.s32.totalorder %s155, %s157
      %p164 = scmp.eq.s32.totalorder %s41, 7
      %p165 = por %p163, %p164
      %p166 = scmp.ne.s32.totalorder %s157, %s158
      %p167 = scmp.eq.s32.totalorder %s41, 0
      %p168 = por %p166, %p167
      %p169 = scmp.ne.s32.totalorder %s157, %s158
      %p170 = scmp.eq.s32.totalorder %s42, 7
      %p171 = por %p169, %p170
      %p173 = scmp.ne.s32.totalorder %s158, %s172
      %p174 = scmp.eq.s32.totalorder %s42, 0
      %p175 = por %p173, %p174
      %s177 = sadd.s32 %s176, 1
      %p180 = scmp.eq.s32.totalorder %s36, 7
      %p181 = scmp.ne.s32.totalorder %s176, %s178
      %p182 = scmp.eq.s32.totalorder %s36, 0
      %p183 = por %p181, %p182
      %p184 = scmp.ne.s32.totalorder %s176, %s178
      %p185 = scmp.eq.s32.totalorder %s41, 7
      %p186 = por %p184, %p185
      %p187 = scmp.ne.s32.totalorder %s178, %s179
      %p188 = scmp.eq.s32.totalorder %s41, 0
      %p189 = por %p187, %p188
      %p190 = scmp.ne.s32.totalorder %s178, %s179
      %p191 = scmp.eq.s32.totalorder %s42, 7
      %p192 = por %p190, %p191
      %p194 = scmp.ne.s32.totalorder %s179, %s193
      %p195 = scmp.eq.s32.totalorder %s42, 0
      %p196 = por %p194, %p195
      %s198 = sadd.s32 %s197, 1
      %p201 = scmp.eq.s32.totalorder %s36, 7
      %p202 = scmp.ne.s32.totalorder %s197, %s199
      %p203 = scmp.eq.s32.totalorder %s36, 0
      %p204 = por %p202, %p203
      %p205 = scmp.ne.s32.totalorder %s197, %s199
      %p206 = scmp.eq.s32.totalorder %s41, 7
      %p207 = por %p205, %p206
      %p208 = scmp.ne.s32.totalorder %s199, %s200
      %p209 = scmp.eq.s32.totalorder %s41, 0
      %p210 = por %p208, %p209
      %p211 = scmp.ne.s32.totalorder %s199, %s200
      %p212 = scmp.eq.s32.totalorder %s42, 7
      %p213 = por %p211, %p212
      %p215 = scmp.ne.s32.totalorder %s200, %s214
      %p216 = scmp.eq.s32.totalorder %s42, 0
      %p217 = por %p215, %p216
      %s219 = sadd.s32 %s218, 1
      %p222 = scmp.eq.s32.totalorder %s36, 7
      %p223 = scmp.ne.s32.totalorder %s218, %s220
      %p224 = scmp.eq.s32.totalorder %s36, 0
      %p225 = por %p223, %p224
      %p226 = scmp.ne.s32.totalorder %s218, %s220
      %p227 = scmp.eq.s32.totalorder %s41, 7
      %p228 = por %p226, %p227
      %p229 = scmp.ne.s32.totalorder %s220, %s221
      %p230 = scmp.eq.s32.totalorder %s41, 0
      %p231 = por %p229, %p230
      %p232 = scmp.ne.s32.totalorder %s220, %s221
      %p233 = scmp.eq.s32.totalorder %s42, 7
      %p234 = por %p232, %p233
      %p236 = scmp.ne.s32.totalorder %s221, %s235
      %p237 = scmp.eq.s32.totalorder %s42, 0
      %p238 = por %p236, %p237
      %s240 = sadd.s32 %s239, 1
      %p243 = scmp.eq.s32.totalorder %s36, 7
      %p244 = scmp.ne.s32.totalorder %s239, %s241
      %p245 = scmp.eq.s32.totalorder %s36, 0
      %p246 = por %p244, %p245
      %p247 = scmp.ne.s32.totalorder %s239, %s241
      %p248 = scmp.eq.s32.totalorder %s41, 7
      %p249 = por %p247, %p248
      %p250 = scmp.ne.s32.totalorder %s241, %s242
      %p251 = scmp.eq.s32.totalorder %s41, 0
      %p252 = por %p250, %p251
      %p253 = scmp.ne.s32.totalorder %s241, %s242
      %p254 = scmp.eq.s32.totalorder %s42, 7
      %p255 = por %p253, %p254
      %p257 = scmp.ne.s32.totalorder %s242, %s256
      %p258 = scmp.eq.s32.totalorder %s42, 0
      %p259 = por %p257, %p258
      %s261 = sadd.s32 %s260, 1
      %p264 = scmp.eq.s32.totalorder %s36, 7
      %p265 = scmp.ne.s32.totalorder %s260, %s262
      %p266 = scmp.eq.s32.totalorder %s36, 0
      %p267 = por %p265, %p266
      %p268 = scmp.ne.s32.totalorder %s260, %s262
      %p269 = scmp.eq.s32.totalorder %s41, 7
      %p270 = por %p268, %p269
      %p271 = scmp.ne.s32.totalorder %s262, %s263
      %p272 = scmp.eq.s32.totalorder %s41, 0
      %p273 = por %p271, %p272
      %p274 = scmp.ne.s32.totalorder %s262, %s263
      %p275 = scmp.eq.s32.totalorder %s42, 7
      %p276 = por %p274, %p275
      %p278 = scmp.ne.s32.totalorder %s263, %s277
      %p279 = scmp.eq.s32.totalorder %s42, 0
      %p280 = por %p278, %p279
      %s282 = sadd.s32 %s281, 1
      %p285 = scmp.eq.s32.totalorder %s36, 7
      %p286 = scmp.ne.s32.totalorder %s281, %s283
      %p287 = scmp.eq.s32.totalorder %s36, 0
      %p288 = por %p286, %p287
      %p289 = scmp.ne.s32.totalorder %s281, %s283
      %p290 = scmp.eq.s32.totalorder %s41, 7
      %p291 = por %p289, %p290
      %p292 = scmp.ne.s32.totalorder %s283, %s284
      %p293 = scmp.eq.s32.totalorder %s41, 0
      %p294 = por %p292, %p293
      %p295 = scmp.ne.s32.totalorder %s283, %s284
      %p296 = scmp.eq.s32.totalorder %s42, 7
      %p297 = por %p295, %p296
      %p299 = scmp.ne.s32.totalorder %s284, %s298
      %p300 = scmp.eq.s32.totalorder %s42, 0
      %p301 = por %p299, %p300
      %s303 = sadd.s32 %s302, 1
      %p306 = scmp.eq.s32.totalorder %s36, 7
      %p307 = scmp.ne.s32.totalorder %s302, %s304
      %p308 = scmp.eq.s32.totalorder %s36, 0
      %p309 = por %p307, %p308
      %p310 = scmp.ne.s32.totalorder %s302, %s304
      %p311 = scmp.eq.s32.totalorder %s41, 7
      %p312 = por %p310, %p311
      %p313 = scmp.ne.s32.totalorder %s304, %s305
      %p314 = scmp.eq.s32.totalorder %s41, 0
      %p315 = por %p313, %p314
      %p316 = scmp.ne.s32.totalorder %s304, %s305
      %p317 = scmp.eq.s32.totalorder %s42, 7
      %p318 = por %p316, %p317
      %p320 = scmp.ne.s32.totalorder %s305, %s319
      %p321 = scmp.eq.s32.totalorder %s42, 0
      %p322 = por %p320, %p321
      %s324 = sadd.s32 %s323, 1
      %p327 = scmp.eq.s32.totalorder %s36, 7
      %p328 = scmp.ne.s32.totalorder %s323, %s325
      %p329 = scmp.eq.s32.totalorder %s36, 0
      %p330 = por %p328, %p329
      %p331 = scmp.ne.s32.totalorder %s323, %s325
      %p332 = scmp.eq.s32.totalorder %s41, 7
      %p333 = por %p331, %p332
      %p334 = scmp.ne.s32.totalorder %s325, %s326
      %p335 = scmp.eq.s32.totalorder %s41, 0
      %p336 = por %p334, %p335
      %p337 = scmp.ne.s32.totalorder %s325, %s326
      %p338 = scmp.eq.s32.totalorder %s42, 7
      %p339 = por %p337, %p338
      %p341 = scmp.ne.s32.totalorder %s326, %s340
      %p342 = scmp.eq.s32.totalorder %s42, 0
      %p343 = por %p341, %p342
      %s345 = sadd.s32 %s344, 1
      %p348 = scmp.eq.s32.totalorder %s36, 7
      %p349 = scmp.ne.s32.totalorder %s344, %s346
      %p350 = scmp.eq.s32.totalorder %s36, 0
      %p351 = por %p349, %p350
      %p352 = scmp.ne.s32.totalorder %s344, %s346
      %p353 = scmp.eq.s32.totalorder %s41, 7
      %p354 = por %p352, %p353
      %p355 = scmp.ne.s32.totalorder %s346, %s347
      %p356 = scmp.eq.s32.totalorder %s41, 0
      %p357 = por %p355, %p356
      %p358 = scmp.ne.s32.totalorder %s346, %s347
      %p359 = scmp.eq.s32.totalorder %s42, 7
      %p360 = por %p358, %p359
      %p362 = scmp.ne.s32.totalorder %s347, %s361
      %p363 = scmp.eq.s32.totalorder %s42, 0
      %p364 = por %p362, %p363
      %s365 = ssub.s32 %s43, %s55
      %p366 = scmp.eq.s32.totalorder %s365, 0
      %s368 = sadd.s32 %s367, 1
      %s369 = scalar_select %p366, %s367, %s368
      %p372 = pneg %p366
      %p373 = scmp.eq.s32.totalorder %s36, 7
      %p374 = por %p372, %p373
      %p375 = scmp.ne.s32.totalorder %s367, %s370
      %p376 = scmp.eq.s32.totalorder %s36, 0
      %p377 = por %p375, %p376
      %p378 = scmp.ne.s32.totalorder %s367, %s370
      %p379 = scmp.eq.s32.totalorder %s41, 7
      %p380 = por %p378, %p379
      %p381 = scmp.ne.s32.totalorder %s370, %s371
      %p382 = scmp.eq.s32.totalorder %s41, 0
      %p383 = por %p381, %p382
      %p384 = scmp.ne.s32.totalorder %s370, %s371
      %p385 = scmp.eq.s32.totalorder %s42, 7
      %p386 = por %p384, %p385
      %p388 = scmp.ne.s32.totalorder %s371, %s387
      %p389 = scmp.eq.s32.totalorder %s42, 0
      %p390 = por %p388, %p389
      %s391 = ssub.s32 %s43, %s55
      %s392 = ssub.s32 %s44, %s51
      %s393 = sor.u32 %s391, %s392
      %p394 = scmp.eq.s32.totalorder %s393, 0
      %s396 = sadd.s32 %s395, 1
      %s397 = scalar_select %p394, %s395, %s396
      %p400 = pneg %p394
      %p401 = scmp.eq.s32.totalorder %s36, 7
      %p402 = por %p400, %p401
      %p403 = scmp.ne.s32.totalorder %s395, %s398
      %p404 = scmp.eq.s32.totalorder %s36, 0
      %p405 = por %p403, %p404
      %p406 = scmp.ne.s32.totalorder %s395, %s398
      %p407 = scmp.eq.s32.totalorder %s41, 7
      %p408 = por %p406, %p407
      %p409 = scmp.ne.s32.totalorder %s398, %s399
      %p410 = scmp.eq.s32.totalorder %s41, 0
      %p411 = por %p409, %p410
      %p412 = scmp.ne.s32.totalorder %s398, %s399
      %p413 = scmp.eq.s32.totalorder %s42, 7
      %p414 = por %p412, %p413
      %p416 = scmp.ne.s32.totalorder %s399, %s415
      %p417 = scmp.eq.s32.totalorder %s42, 0
      %p418 = por %p416, %p417
      %p419 = scmp.le.s32.totalorder 1, %s36
      %p420 = scmp.lt.s32.totalorder %s36, 9
      %p421 = pnand %p419, %p420
      %p422 = pneg %p421
      // Predicated region
      $region9: #{tpu_custom_call.1} parent=5 // pred_check
        _
      $region10: #{tpu_custom_call.1} parent=5 // pred_check_branch
        %424 = sbr.rel (%p421) target = $region12
      $region11: #{tpu_custom_call.1} parent=5 // pred_region
        %s425 = ssub.s32 %s36, 1
        // Predicated region
        $region13: #{tpu_custom_call.1} parent=11 // pred_check
          %p426 = pneg %p147
        $region14: #{tpu_custom_call.1} parent=11 // pred_check_branch
          %428 = sbr.rel (%p426) target = $region16
        $region15: #{tpu_custom_call.1} parent=11 // pred_region
          _
        $region16: #{tpu_custom_call.1} parent=11 // pred_fallthru
          _
        // Predicated region
        $region17: #{tpu_custom_call.1} parent=11 // pred_check
          %p429 = pneg %p168
        $region18: #{tpu_custom_call.1} parent=11 // pred_check_branch
          %431 = sbr.rel (%p429) target = $region20
        $region19: #{tpu_custom_call.1} parent=11 // pred_region
          _
        $region20: #{tpu_custom_call.1} parent=11 // pred_fallthru
          _
        // Predicated region
        $region21: #{tpu_custom_call.1} parent=11 // pred_check
          %p432 = pneg %p189
        $region22: #{tpu_custom_call.1} parent=11 // pred_check_branch
          %434 = sbr.rel (%p432) target = $region24
        $region23: #{tpu_custom_call.1} parent=11 // pred_region
          _
        $region24: #{tpu_custom_call.1} parent=11 // pred_fallthru
          _
        // Predicated region
        $region25: #{tpu_custom_call.1} parent=11 // pred_check
          %p435 = pneg %p210
        $region26: #{tpu_custom_call.1} parent=11 // pred_check_branch
          %437 = sbr.rel (%p435) target = $region28
        $region27: #{tpu_custom_call.1} parent=11 // pred_region
          %s439 = ssub.s32 16, 16
          %440 = vsyncadd [#allocation13], %s439
          %s442 = sshll.u32 [#allocation12], 4
          %s443 = int_to_ptr.vmem [resolvable:$true] %s442
          %445 = dma.hbm_to_vmem [thread:$0]  %s6, 16, %s443, [#allocation13]
        $region28: #{tpu_custom_call.1} parent=11 // pred_fallthru
          _
        // Predicated region
        $region29: #{tpu_custom_call.1} parent=11 // pred_check
          %p446 = pneg %p231
        $region30: #{tpu_custom_call.1} parent=11 // pred_check_branch
          %448 = sbr.rel (%p446) target = $region32
        $region31: #{tpu_custom_call.1} parent=11 // pred_region
          _
        $region32: #{tpu_custom_call.1} parent=11 // pred_fallthru
          _
        // Predicated region
        $region33: #{tpu_custom_call.1} parent=11 // pred_check
          %p449 = pneg %p252
        $region34: #{tpu_custom_call.1} parent=11 // pred_check_branch
          %451 = sbr.rel (%p449) target = $region36
        $region35: #{tpu_custom_call.1} parent=11 // pred_region
          %s453 = ssub.s32 16, 16
          %454 = vsyncadd [#allocation13], %s453
          %s456 = sshll.u32 [#allocation14], 4
          %s457 = int_to_ptr.vmem [resolvable:$true] %s456
          %459 = dma.hbm_to_vmem [thread:$0]  %s8, 16, %s457, [#allocation13]
        $region36: #{tpu_custom_call.1} parent=11 // pred_fallthru
          _
        // Predicated region
        $region37: #{tpu_custom_call.1} parent=11 // pred_check
          %p460 = pneg %p273
        $region38: #{tpu_custom_call.1} parent=11 // pred_check_branch
          %462 = sbr.rel (%p460) target = $region40
        $region39: #{tpu_custom_call.1} parent=11 // pred_region
          _
        $region40: #{tpu_custom_call.1} parent=11 // pred_fallthru
          _
        // Predicated region
        $region41: #{tpu_custom_call.1} parent=11 // pred_check
          %p463 = pneg %p294
        $region42: #{tpu_custom_call.1} parent=11 // pred_check_branch
          %465 = sbr.rel (%p463) target = $region44
        $region43: #{tpu_custom_call.1} parent=11 // pred_region
          _
        $region44: #{tpu_custom_call.1} parent=11 // pred_fallthru
          _
        // Predicated region
        $region45: #{tpu_custom_call.1} parent=11 // pred_check
          %p466 = pneg %p315
        $region46: #{tpu_custom_call.1} parent=11 // pred_check_branch
          %468 = sbr.rel (%p466) target = $region48
        $region47: #{tpu_custom_call.1} parent=11 // pred_region
          _
        $region48: #{tpu_custom_call.1} parent=11 // pred_fallthru
          _
        // Predicated region
        $region49: #{tpu_custom_call.1} parent=11 // pred_check
          %p469 = pneg %p336
        $region50: #{tpu_custom_call.1} parent=11 // pred_check_branch
          %471 = sbr.rel (%p469) target = $region52
        $region51: #{tpu_custom_call.1} parent=11 // pred_region
          _
        $region52: #{tpu_custom_call.1} parent=11 // pred_fallthru
          _
        // Predicated region
        $region53: #{tpu_custom_call.1} parent=11 // pred_check
          %p472 = pneg %p357
        $region54: #{tpu_custom_call.1} parent=11 // pred_check_branch
          %474 = sbr.rel (%p472) target = $region56
        $region55: #{tpu_custom_call.1} parent=11 // pred_region
          %s476 = ssub.s32 16, 16
          %477 = vsyncadd [#allocation8], %s476
          %s479 = sshll.u32 %s13, 4
          %s480 = int_to_ptr.vmem [resolvable:$true] %s479
          %482 = dma.vmem_to_smem %s480, 16, [#allocation15], [#allocation8]
        $region56: #{tpu_custom_call.1} parent=11 // pred_fallthru
          _
      $region12: #{tpu_custom_call.1} parent=5 // pred_fallthru
        _
      %p483 = scmp.lt.s32.totalorder %s36, 8
      // Predicated region
      $region57: #{tpu_custom_call.1} parent=5 // pred_check
        %p484 = pneg %p483
      $region58: #{tpu_custom_call.1} parent=5 // pred_check_branch
        %486 = sbr.rel (%p484) target = $region60
      $region59: #{tpu_custom_call.1} parent=5 // pred_region
        // Predicated region
        $region61: #{tpu_custom_call.1} parent=59 // pred_check
          %p487 = pneg %p68
        $region62: #{tpu_custom_call.1} parent=59 // pred_check_branch
          %489 = sbr.rel (%p487) target = $region64
        $region63: #{tpu_custom_call.1} parent=59 // pred_region
          %s490 = sand.u32 %s58, 1
          %s491 = scalar_lea.sflag [#allocation6], %s490
          %s492 = sand.u32 %s58, 1
          %s493 = smul.addr %s492, 8
          %s494 = scalar_lea.vmem [#allocation5], %s493
          %s496 = ssub.s32 128, 128
          %497 = vsyncadd %s491, %s496
          %s498 = smul.addr %s43, 128
          %s499 = scalar_lea.hbm %s0, %s498
          %s501 = sshll.u32 %s494, 4
          %s502 = int_to_ptr.vmem [resolvable:$true] %s501
          %504 = dma.hbm_to_vmem [thread:$0]  %s499, 128, %s502, %s491
        $region64: #{tpu_custom_call.1} parent=59 // pred_fallthru
          _
        // Predicated region
        $region65: #{tpu_custom_call.1} parent=59 // pred_check
          %p505 = pneg %p94
        $region66: #{tpu_custom_call.1} parent=59 // pred_check_branch
          %507 = sbr.rel (%p505) target = $region68
        $region67: #{tpu_custom_call.1} parent=59 // pred_region
          %s508 = sand.u32 %s36, 1
          %s509 = scalar_lea.sflag [#allocation10], %s508
          %s510 = sand.u32 %s84, 1
          %s511 = smul.addr %s510, 8
          %s512 = scalar_lea.vmem [#allocation9], %s511
          %s514 = ssub.s32 128, 128
          %515 = vsyncadd %s509, %s514
          %s516 = smul.addr %s43, 128
          %s517 = scalar_lea.hbm %s1, %s516
          %s519 = sshll.u32 %s512, 4
          %s520 = int_to_ptr.vmem [resolvable:$true] %s519
          %522 = dma.hbm_to_vmem [thread:$0]  %s517, 128, %s520, %s509
        $region68: #{tpu_custom_call.1} parent=59 // pred_fallthru
          _
        // Predicated region
        $region69: #{tpu_custom_call.1} parent=59 // pred_check
          %p523 = pneg %p120
        $region70: #{tpu_custom_call.1} parent=59 // pred_check_branch
          %525 = sbr.rel (%p523) target = $region72
        $region71: #{tpu_custom_call.1} parent=59 // pred_region
          %s526 = sand.u32 %s36, 1
          %s527 = scalar_lea.sflag [#allocation10], %s526
          %s528 = sand.u32 %s110, 1
          %s529 = smul.addr %s528, 8
          %s530 = scalar_lea.vmem [#allocation11], %s529
          %s532 = ssub.s32 128, 128
          %533 = vsyncadd %s527, %s532
          %s534 = smul.addr %s43, 128
          %s535 = scalar_lea.hbm %s2, %s534
          %s537 = sshll.u32 %s530, 4
          %s538 = int_to_ptr.vmem [resolvable:$true] %s537
          %540 = dma.hbm_to_vmem [thread:$0]  %s535, 128, %s538, %s527
        $region72: #{tpu_custom_call.1} parent=59 // pred_fallthru
          _
      $region60: #{tpu_custom_call.1} parent=5 // pred_fallthru
        _
      %p541 = scmp.le.s32.totalorder 1, %s36
      %p542 = scmp.lt.s32.totalorder %s36, 9
      %p543 = pnand %p541, %p542
      %p544 = pneg %p543
      // Predicated region
      $region73: #{tpu_custom_call.1} parent=5 // pred_check
        _
      $region74: #{tpu_custom_call.1} parent=5 // pred_check_branch
        %546 = sbr.rel (%p543) target = $region76
      $region75: #{tpu_custom_call.1} parent=5 // pred_region
        %s547 = ssub.s32 %s36, 1
        %s548 = sand.u32 %s61, 1
        %s549 = scalar_lea.sflag [#allocation6], %s548
        %s550 = sand.u32 %s61, 1
        %s551 = smul.addr %s550, 8
        %s552 = scalar_lea.vmem [#allocation5], %s551
        // Predicated region
        $region77: #{tpu_custom_call.1} parent=75 // pred_check
          %p553 = pneg %p74
        $region78: #{tpu_custom_call.1} parent=75 // pred_check_branch
          %555 = sbr.rel (%p553) target = $region80
        $region79: #{tpu_custom_call.1} parent=75 // pred_region
          %556 = dma.done %s549, 128
        $region80: #{tpu_custom_call.1} parent=75 // pred_fallthru
          _
        %s557 = sand.u32 %s41, 1
        %s558 = scalar_lea.sflag [#allocation10], %s557
        %s559 = sand.u32 %s87, 1
        %s560 = smul.addr %s559, 8
        %s561 = scalar_lea.vmem [#allocation9], %s560
        // Predicated region
        $region81: #{tpu_custom_call.1} parent=75 // pred_check
          %p562 = pneg %p100
        $region82: #{tpu_custom_call.1} parent=75 // pred_check_branch
          %564 = sbr.rel (%p562) target = $region84
        $region83: #{tpu_custom_call.1} parent=75 // pred_region
          %565 = dma.done %s558, 128
        $region84: #{tpu_custom_call.1} parent=75 // pred_fallthru
          _
        %s566 = sand.u32 %s41, 1
        %s567 = scalar_lea.sflag [#allocation10], %s566
        %s568 = sand.u32 %s113, 1
        %s569 = smul.addr %s568, 8
        %s570 = scalar_lea.vmem [#allocation11], %s569
        // Predicated region
        $region85: #{tpu_custom_call.1} parent=75 // pred_check
          %p571 = pneg %p126
        $region86: #{tpu_custom_call.1} parent=75 // pred_check_branch
          %573 = sbr.rel (%p571) target = $region88
        $region87: #{tpu_custom_call.1} parent=75 // pred_region
          %574 = dma.done %s567, 128
        $region88: #{tpu_custom_call.1} parent=75 // pred_fallthru
          _
        // Predicated region
        $region89: #{tpu_custom_call.1} parent=75 // pred_check
          %p575 = pneg %p210
        $region90: #{tpu_custom_call.1} parent=75 // pred_check_branch
          %577 = sbr.rel (%p575) target = $region92
        $region91: #{tpu_custom_call.1} parent=75 // pred_region
          %578 = dma.done [#allocation13], 16
        $region92: #{tpu_custom_call.1} parent=75 // pred_fallthru
          _
        // Predicated region
        $region93: #{tpu_custom_call.1} parent=75 // pred_check
          %p579 = pneg %p252
        $region94: #{tpu_custom_call.1} parent=75 // pred_check_branch
          %581 = sbr.rel (%p579) target = $region96
        $region95: #{tpu_custom_call.1} parent=75 // pred_region
          %582 = dma.done [#allocation13], 16
        $region96: #{tpu_custom_call.1} parent=75 // pred_fallthru
          _
        // Predicated region
        $region97: #{tpu_custom_call.1} parent=75 // pred_check
          %p583 = pneg %p357
        $region98: #{tpu_custom_call.1} parent=75 // pred_check_branch
          %585 = sbr.rel (%p583) target = $region100
        $region99: #{tpu_custom_call.1} parent=75 // pred_region
          %586 = dma.done [#allocation8], 16
        $region100: #{tpu_custom_call.1} parent=75 // pred_fallthru
          _
        %587 = sfence
        %s588 = sand.u32 %s61, 1
        %s589 = scalar_lea.sflag [#allocation6], %s588
        %s590 = sand.u32 %s61, 1
        %s591 = smul.addr %s590, 8
        %s592 = scalar_lea.vmem [#allocation5], %s591
        %p593 = pneg %p74
        %p594 = pneg %p71
        %s595 = sand.u32 %s41, 1
        %s596 = scalar_lea.sflag [#allocation10], %s595
        %s597 = sand.u32 %s87, 1
        %s598 = smul.addr %s597, 8
        %s599 = scalar_lea.vmem [#allocation9], %s598
        %p600 = pneg %p100
        %p601 = pneg %p97
        %s602 = sand.u32 %s41, 1
        %s603 = scalar_lea.sflag [#allocation10], %s602
        %s604 = sand.u32 %s113, 1
        %s605 = smul.addr %s604, 8
        %s606 = scalar_lea.vmem [#allocation11], %s605
        %p607 = pneg %p126
        %p608 = pneg %p123
        %p609 = pneg %p147
        %p610 = pneg %p144
        %p611 = pneg %p168
        %p612 = pneg %p165
        %p613 = pneg %p189
        %p614 = pneg %p186
        %p615 = pneg %p210
        %p616 = pneg %p207
        %p617 = pneg %p231
        %p618 = pneg %p228
        %p619 = pneg %p252
        %p620 = pneg %p249
        %p621 = pneg %p273
        %p622 = pneg %p270
        %p623 = pneg %p294
        %p624 = pneg %p291
        %p625 = pneg %p315
        %p626 = pneg %p312
        %p627 = pneg %p336
        %p628 = pneg %p333
        %p629 = pneg %p357
        %p630 = pneg %p354
        %p631 = pneg %p383
        %p632 = pneg %p380
        %s633 = sand.u32 %s370, 1
        %s634 = scalar_lea.sflag [#allocation7], %s633
        %s635 = sand.u32 %s370, 1
        %s636 = smul.addr %s635, 8
        %s637 = scalar_lea.vmem [#allocation16], %s636
        %p638 = pneg %p411
        %p639 = pneg %p408
        %s640 = sand.u32 %s398, 1
        %s641 = scalar_lea.sflag [#allocation18], %s640
        %s642 = sand.u32 %s398, 1
        %s643 = smul.addr %s642, 8
        %s644 = scalar_lea.vmem [#allocation17], %s643
        %p645 = scmp.eq.s32.totalorder %s46, 0
        // Predicated region
        $region101: #{tpu_custom_call.1} parent=75 // pred_check
          %p646 = pneg %p645
        $region102: #{tpu_custom_call.1} parent=75 // pred_check_branch
          %648 = sbr.rel (%p646) target = $region104
        $region103: #{tpu_custom_call.1} parent=75 // pred_region
          %s649 = sld [smem:[#allocation15]]
          %s650 = sld [smem:[#allocation15 + $0x1]]
          %s651 = sld [smem:[#allocation15 + $0x2]]
          %s652 = sld [smem:[#allocation15 + $0x3]]
          %v653 = vld [vmem:[%s9] sm:$0xff]
          %v654 = vld [vmem:[%s9 + $0x8] sm:$0xff]
          %v655 = vld [vmem:[%s9 + $0x10] sm:$0xff]
          %v656 = vld [vmem:[%s9 + $0x18] sm:$0xff]
          %v657 = vld [vmem:[%s10] sm:$0xff]
          %v658 = vld [vmem:[%s10 + $0x8] sm:$0xff]
          %v659 = vld [vmem:[%s10 + $0x10] sm:$0xff]
          %v660 = vld [vmem:[%s10 + $0x18] sm:$0xff]
          %v661 = vld [vmem:[%s11] sm:$0xf]
          %v662 = vld [vmem:[%s12] sm:$0xf]
          %v663 = vld [vmem:[%s552] sm:$0xff]
          %v664 = vld [vmem:[%s3] sm:$0xff]
          %v665 = vld [vmem:[%s3 + $0x8] sm:$0xff]
          %v666 = vld [vmem:[%s3 + $0x10] sm:$0xff]
          %v667 = vld [vmem:[%s3 + $0x18] sm:$0xff]
          %v668 = vld [vmem:[%s4] sm:$0x1]
          %v670 = vlaneseq
          %v671 = vshrl.u32 %v670, 7
          %v672 = vsub.s32 0, %v671
          %v673 = vrot.slane %v668, %v672
          %vm675 = vcmask 261120
          %v677 = vsel %vm675, %v663, 0
          %679 = vmatprep.subr.mxu0 0.0
          %680 = vmatpush1.msra.mxu0 %v664
          %681 = vmatprep.subr.mxu0 0.0
          %682 = vmatpush1.msra.mxu0 %v665
          %683 = vmatprep.subr.mxu0 0.0
          %684 = vmatpush1.msra.mxu0 %v666
          %685 = vmatprep.subr.mxu0 0.0
          %686 = vmatpush1.msra.mxu0 %v667
          %687 = vmatprep.subr.mxu0 0.0
          %688 = vmatpush1.msra.mxu0 0.0
          %689 = vmatprep.subr.mxu0 0.0
          %690 = vmatpush1.msra.mxu0 0.0
          %691 = vmatprep.subr.mxu0 0.0
          %692 = vmatpush1.msra.mxu0 0.0
          %693 = vmatprep.subr.mxu0 0.0
          %694 = vmatpush1.msra.mxu0 0.0
          %695 = vmatprep.subr.mxu0 0.0
          %696 = vmatpush1.msra.mxu0 0.0
          %697 = vmatprep.subr.mxu0 0.0
          %698 = vmatpush1.msra.mxu0 0.0
          %699 = vmatprep.subr.mxu0 0.0
          %700 = vmatpush1.msra.mxu0 0.0
          %701 = vmatprep.subr.mxu0 0.0
          %702 = vmatpush1.msra.mxu0 0.0
          %703 = vmatprep.subr.mxu0 0.0
          %704 = vmatpush1.msra.mxu0 0.0
          %705 = vmatprep.subr.mxu0 0.0
          %706 = vmatpush1.msra.mxu0 0.0
          %707 = vmatprep.subr.mxu0 0.0
          %708 = vmatpush1.msra.mxu0 0.0
          %709 = vmatprep.subr.mxu0 0.0
          %710 = vmatpush1.msra.mxu0 0.0
          %711 = vmatprep.subr.mxu0 0.0
          %712 = vmatpush1.msra.mxu0 0.0
          %713 = vmatprep.subr.mxu0 0.0
          %714 = vmatpush1.msra.mxu0 0.0
          %715 = vmatprep.subr.mxu0 0.0
          %716 = vmatpush1.msra.mxu0 0.0
          %717 = vmatprep.subr.mxu0 0.0
          %718 = vmatpush1.msra.mxu0 0.0
          %719 = vmatprep.subr.mxu0 0.0
          %720 = vmatpush1.msra.mxu0 0.0
          %721 = vmatprep.subr.mxu0 0.0
          %722 = vmatpush1.msra.mxu0 0.0
          %723 = vmatprep.subr.mxu0 0.0
          %724 = vmatpush1.msra.mxu0 0.0
          %725 = vmatprep.subr.mxu0 0.0
          %726 = vmatpush1.msra.mxu0 0.0
          %727 = vmatprep.subr.mxu0 0.0
          %728 = vmatpush1.msra.mxu0 0.0
          %729 = vmatprep.subr.mxu0 0.0
          %730 = vmatpush1.msra.mxu0 0.0
          %731 = vmatprep.subr.mxu0 0.0
          %732 = vmatpush1.msra.mxu0 0.0
          %733 = vmatprep.subr.mxu0 0.0
          %734 = vmatpush1.msra.mxu0 0.0
          %735 = vmatprep.subr.mxu0 0.0
          %736 = vmatpush1.msra.mxu0 0.0
          %737 = vmatprep.subr.mxu0 0.0
          %738 = vmatpush1.msra.mxu0 0.0
          %739 = vmatprep.subr.mxu0 0.0
          %740 = vmatpush1.msra.mxu0 0.0
          %741 = vmatprep.subr.mxu0 0.0
          %742 = vmatpush1.msra.mxu0 0.0
          %743 = vmatprep.mubr.f32.mxu0 0.0
          %744 = vmatmul.mubr.f32.gmra.mrb[0].mxu0 %v677
          %v745 = vpop.f32.mrb[0].mxu0
          %v746 = vadd.f32 %v673, %v745
          %v747 = vpop.f32.mrb[0].mxu0
          %748 = vdwg.mxu0
          %v750 = vsel %vm675, %v746, 0
          %752 = vmatprep.subr.mxu0 0.0
          %753 = vmatpush1.msra.mxu0 %v653
          %754 = vmatprep.subr.mxu0 0.0
          %755 = vmatpush1.msra.mxu0 %v654
          %756 = vmatprep.subr.mxu0 0.0
          %757 = vmatpush1.msra.mxu0 %v655
          %758 = vmatprep.subr.mxu0 0.0
          %759 = vmatpush1.msra.mxu0 %v656
          %760 = vmatprep.subr.mxu0 0.0
          %761 = vmatpush1.msra.mxu0 0.0
          %762 = vmatprep.subr.mxu0 0.0
          %763 = vmatpush1.msra.mxu0 0.0
          %764 = vmatprep.subr.mxu0 0.0
          %765 = vmatpush1.msra.mxu0 0.0
          %766 = vmatprep.subr.mxu0 0.0
          %767 = vmatpush1.msra.mxu0 0.0
          %768 = vmatprep.subr.mxu0 0.0
          %769 = vmatpush1.msra.mxu0 0.0
          %770 = vmatprep.subr.mxu0 0.0
          %771 = vmatpush1.msra.mxu0 0.0
          %772 = vmatprep.subr.mxu0 0.0
          %773 = vmatpush1.msra.mxu0 0.0
          %774 = vmatprep.subr.mxu0 0.0
          %775 = vmatpush1.msra.mxu0 0.0
          %776 = vmatprep.subr.mxu0 0.0
          %777 = vmatpush1.msra.mxu0 0.0
          %778 = vmatprep.subr.mxu0 0.0
          %779 = vmatpush1.msra.mxu0 0.0
          %780 = vmatprep.subr.mxu0 0.0
          %781 = vmatpush1.msra.mxu0 0.0
          %782 = vmatprep.subr.mxu0 0.0
          %783 = vmatpush1.msra.mxu0 0.0
          %784 = vmatprep.subr.mxu0 0.0
          %785 = vmatpush1.msra.mxu0 0.0
          %786 = vmatprep.subr.mxu0 0.0
          %787 = vmatpush1.msra.mxu0 0.0
          %788 = vmatprep.subr.mxu0 0.0
          %789 = vmatpush1.msra.mxu0 0.0
          %790 = vmatprep.subr.mxu0 0.0
          %791 = vmatpush1.msra.mxu0 0.0
          %792 = vmatprep.subr.mxu0 0.0
          %793 = vmatpush1.msra.mxu0 0.0
          %794 = vmatprep.subr.mxu0 0.0
          %795 = vmatpush1.msra.mxu0 0.0
          %796 = vmatprep.subr.mxu0 0.0
          %797 = vmatpush1.msra.mxu0 0.0
          %798 = vmatprep.subr.mxu0 0.0
          %799 = vmatpush1.msra.mxu0 0.0
          %800 = vmatprep.subr.mxu0 0.0
          %801 = vmatpush1.msra.mxu0 0.0
          %802 = vmatprep.subr.mxu0 0.0
          %803 = vmatpush1.msra.mxu0 0.0
          %804 = vmatprep.subr.mxu0 0.0
          %805 = vmatpush1.msra.mxu0 0.0
          %806 = vmatprep.subr.mxu0 0.0
          %807 = vmatpush1.msra.mxu0 0.0
          %808 = vmatprep.subr.mxu0 0.0
          %809 = vmatpush1.msra.mxu0 0.0
          %810 = vmatprep.subr.mxu0 0.0
          %811 = vmatpush1.msra.mxu0 0.0
          %812 = vmatprep.subr.mxu0 0.0
          %813 = vmatpush1.msra.mxu0 0.0
          %814 = vmatprep.subr.mxu0 0.0
          %815 = vmatpush1.msra.mxu0 0.0
          %816 = vmatprep.mubr.f32.mxu0 0.0
          %817 = vmatmul.mubr.f32.gmra.mrb[0].mxu0 %v750
          %v818 = vpop.f32.mrb[0].mxu0
          %v819 = vadd.f32 0.0, %v818
          %v820 = vpop.f32.mrb[0].mxu0
          %821 = vdwg.mxu0
          %v822 = vmul.f32 %v746, %v746
          %v824 = vsel %vm675, %v822, 0
          %826 = vmatprep.subr.mxu0 0.0
          %827 = vmatpush1.msra.mxu0 %v657
          %828 = vmatprep.subr.mxu0 0.0
          %829 = vmatpush1.msra.mxu0 %v658
          %830 = vmatprep.subr.mxu0 0.0
          %831 = vmatpush1.msra.mxu0 %v659
          %832 = vmatprep.subr.mxu0 0.0
          %833 = vmatpush1.msra.mxu0 %v660
          %834 = vmatprep.subr.mxu0 0.0
          %835 = vmatpush1.msra.mxu0 0.0
          %836 = vmatprep.subr.mxu0 0.0
          %837 = vmatpush1.msra.mxu0 0.0
          %838 = vmatprep.subr.mxu0 0.0
          %839 = vmatpush1.msra.mxu0 0.0
          %840 = vmatprep.subr.mxu0 0.0
          %841 = vmatpush1.msra.mxu0 0.0
          %842 = vmatprep.subr.mxu0 0.0
          %843 = vmatpush1.msra.mxu0 0.0
          %844 = vmatprep.subr.mxu0 0.0
          %845 = vmatpush1.msra.mxu0 0.0
          %846 = vmatprep.subr.mxu0 0.0
          %847 = vmatpush1.msra.mxu0 0.0
          %848 = vmatprep.subr.mxu0 0.0
          %849 = vmatpush1.msra.mxu0 0.0
          %850 = vmatprep.subr.mxu0 0.0
          %851 = vmatpush1.msra.mxu0 0.0
          %852 = vmatprep.subr.mxu0 0.0
          %853 = vmatpush1.msra.mxu0 0.0
          %854 = vmatprep.subr.mxu0 0.0
          %855 = vmatpush1.msra.mxu0 0.0
          %856 = vmatprep.subr.mxu0 0.0
          %857 = vmatpush1.msra.mxu0 0.0
          %858 = vmatprep.subr.mxu0 0.0
          %859 = vmatpush1.msra.mxu0 0.0
          %860 = vmatprep.subr.mxu0 0.0
          %861 = vmatpush1.msra.mxu0 0.0
          %862 = vmatprep.subr.mxu0 0.0
          %863 = vmatpush1.msra.mxu0 0.0
          %864 = vmatprep.subr.mxu0 0.0
          %865 = vmatpush1.msra.mxu0 0.0
          %866 = vmatprep.subr.mxu0 0.0
          %867 = vmatpush1.msra.mxu0 0.0
          %868 = vmatprep.subr.mxu0 0.0
          %869 = vmatpush1.msra.mxu0 0.0
          %870 = vmatprep.subr.mxu0 0.0
          %871 = vmatpush1.msra.mxu0 0.0
          %872 = vmatprep.subr.mxu0 0.0
          %873 = vmatpush1.msra.mxu0 0.0
          %874 = vmatprep.subr.mxu0 0.0
          %875 = vmatpush1.msra.mxu0 0.0
          %876 = vmatprep.subr.mxu0 0.0
          %877 = vmatpush1.msra.mxu0 0.0
          %878 = vmatprep.subr.mxu0 0.0
          %879 = vmatpush1.msra.mxu0 0.0
          %880 = vmatprep.subr.mxu0 0.0
          %881 = vmatpush1.msra.mxu0 0.0
          %882 = vmatprep.subr.mxu0 0.0
          %883 = vmatpush1.msra.mxu0 0.0
          %884 = vmatprep.subr.mxu0 0.0
          %885 = vmatpush1.msra.mxu0 0.0
          %886 = vmatprep.subr.mxu0 0.0
          %887 = vmatpush1.msra.mxu0 0.0
          %888 = vmatprep.subr.mxu0 0.0
          %889 = vmatpush1.msra.mxu0 0.0
          %890 = vmatprep.mubr.f32.mxu0 0.0
          %891 = vmatmul.mubr.f32.gmra.mrb[0].mxu0 %v824
          %v892 = vpop.f32.mrb[0].mxu0
          %v893 = vadd.f32 0.0, %v892
          %v894 = vpop.f32.mrb[0].mxu0
          %895 = vdwg.mxu0
          %v896 = vxor.u32 %v819, 2147483648
          %v897 = vmul.f32 %v896, 1.442695
          %v898 = vpow.pop %v897
          %v899 = vadd.f32 %v898, 1.0
          %v900 = vrcp.pop %v899
          %v901 = vmul.f32 1.0, %v900
          %v902 = vstv %s649
          %v903 = vmul.f32 %v901, %v902
          %v904 = vadd.f32 %v903, 1.1
          %v905 = vmul.f32 %v904, %v904
          %v906 = vsub.f32 %v905, 1.0
          %v907 = vmax.f32 %v893, 1e-08
          %v908 = vrcp.pop %v907
          %v909 = vmul.f32 %v906, %v908
          %v910 = vrsqrt.pop %v909
          %v911 = vmul.f32 %v909, %v910
          %vm912 = vcmp.eq.f32.partialorder %v909, inf
          %v913 = vsel %vm912, %v909, %v911
          %vm914 = vcmp.eq.f32.partialorder %v909, 0.0
          %v915 = vand.u32 %v909, 2147483648
          %v916 = vsel %vm914, %v915, %v913
          %vm917 = vcmask 31744
          %v919 = vsel %vm917, %v916, 0
          %vm921 = vcmask 1043456
          %v923 = vsel %vm921, %v662, 0
          %925 = vmatprep.subr.mxu0 0.0
          %926 = vmatpush1.msra.mxu0 %v923
          %927 = vmatprep.subr.mxu0 0.0
          %928 = vmatpush1.msra.mxu0 0.0
          %929 = vmatprep.subr.mxu0 0.0
          %930 = vmatpush1.msra.mxu0 0.0
          %931 = vmatprep.subr.mxu0 0.0
          %932 = vmatpush1.msra.mxu0 0.0
          %933 = vmatprep.subr.mxu0 0.0
          %934 = vmatpush1.msra.mxu0 0.0
          %935 = vmatprep.subr.mxu0 0.0
          %936 = vmatpush1.msra.mxu0 0.0
          %937 = vmatprep.subr.mxu0 0.0
          %938 = vmatpush1.msra.mxu0 0.0
          %939 = vmatprep.subr.mxu0 0.0
          %940 = vmatpush1.msra.mxu0 0.0
          %941 = vmatprep.subr.mxu0 0.0
          %942 = vmatpush1.msra.mxu0 0.0
          %943 = vmatprep.subr.mxu0 0.0
          %944 = vmatpush1.msra.mxu0 0.0
          %945 = vmatprep.subr.mxu0 0.0
          %946 = vmatpush1.msra.mxu0 0.0
          %947 = vmatprep.subr.mxu0 0.0
          %948 = vmatpush1.msra.mxu0 0.0
          %949 = vmatprep.subr.mxu0 0.0
          %950 = vmatpush1.msra.mxu0 0.0
          %951 = vmatprep.subr.mxu0 0.0
          %952 = vmatpush1.msra.mxu0 0.0
          %953 = vmatprep.subr.mxu0 0.0
          %954 = vmatpush1.msra.mxu0 0.0
          %955 = vmatprep.subr.mxu0 0.0
          %956 = vmatpush1.msra.mxu0 0.0
          %957 = vmatprep.subr.mxu0 0.0
          %958 = vmatpush1.msra.mxu0 0.0
          %959 = vmatprep.subr.mxu0 0.0
          %960 = vmatpush1.msra.mxu0 0.0
          %961 = vmatprep.subr.mxu0 0.0
          %962 = vmatpush1.msra.mxu0 0.0
          %963 = vmatprep.subr.mxu0 0.0
          %964 = vmatpush1.msra.mxu0 0.0
          %965 = vmatprep.subr.mxu0 0.0
          %966 = vmatpush1.msra.mxu0 0.0
          %967 = vmatprep.subr.mxu0 0.0
          %968 = vmatpush1.msra.mxu0 0.0
          %969 = vmatprep.subr.mxu0 0.0
          %970 = vmatpush1.msra.mxu0 0.0
          %971 = vmatprep.subr.mxu0 0.0
          %972 = vmatpush1.msra.mxu0 0.0
          %973 = vmatprep.subr.mxu0 0.0
          %974 = vmatpush1.msra.mxu0 0.0
          %975 = vmatprep.subr.mxu0 0.0
          %976 = vmatpush1.msra.mxu0 0.0
          %977 = vmatprep.subr.mxu0 0.0
          %978 = vmatpush1.msra.mxu0 0.0
          %979 = vmatprep.subr.mxu0 0.0
          %980 = vmatpush1.msra.mxu0 0.0
          %981 = vmatprep.subr.mxu0 0.0
          %982 = vmatpush1.msra.mxu0 0.0
          %983 = vmatprep.subr.mxu0 0.0
          %984 = vmatpush1.msra.mxu0 0.0
          %985 = vmatprep.subr.mxu0 0.0
          %986 = vmatpush1.msra.mxu0 0.0
          %987 = vmatprep.subr.mxu0 0.0
          %988 = vmatpush1.msra.mxu0 0.0
          %989 = vmatprep.mubr.f32.mxu0 0.0
          %990 = vmatmul.mubr.f32.gmra.mrb[0].mxu0 %v919
          %v991 = vpop.f32.mrb[0].mxu0
          %v992 = vadd.f32 0.0, %v991
          %v993 = vpop.f32.mrb[0].mxu0
          %994 = vdwg.mxu0
          %v995 = vmul.f32 %v746, %v992
          %v997 = vsel %vm917, %v904, 0
          %v1000 = vsel %vm921, %v661, 0
          %1002 = vmatprep.subr.mxu0 0.0
          %1003 = vmatpush1.msra.mxu0 %v1000
          %1004 = vmatprep.subr.mxu0 0.0
          %1005 = vmatpush1.msra.mxu0 0.0
          %1006 = vmatprep.subr.mxu0 0.0
          %1007 = vmatpush1.msra.mxu0 0.0
          %1008 = vmatprep.subr.mxu0 0.0
          %1009 = vmatpush1.msra.mxu0 0.0
          %1010 = vmatprep.subr.mxu0 0.0
          %1011 = vmatpush1.msra.mxu0 0.0
          %1012 = vmatprep.subr.mxu0 0.0
          %1013 = vmatpush1.msra.mxu0 0.0
          %1014 = vmatprep.subr.mxu0 0.0
          %1015 = vmatpush1.msra.mxu0 0.0
          %1016 = vmatprep.subr.mxu0 0.0
          %1017 = vmatpush1.msra.mxu0 0.0
          %1018 = vmatprep.subr.mxu0 0.0
          %1019 = vmatpush1.msra.mxu0 0.0
          %1020 = vmatprep.subr.mxu0 0.0
          %1021 = vmatpush1.msra.mxu0 0.0
          %1022 = vmatprep.subr.mxu0 0.0
          %1023 = vmatpush1.msra.mxu0 0.0
          %1024 = vmatprep.subr.mxu0 0.0
          %1025 = vmatpush1.msra.mxu0 0.0
          %1026 = vmatprep.subr.mxu0 0.0
          %1027 = vmatpush1.msra.mxu0 0.0
          %1028 = vmatprep.subr.mxu0 0.0
          %1029 = vmatpush1.msra.mxu0 0.0
          %1030 = vmatprep.subr.mxu0 0.0
          %1031 = vmatpush1.msra.mxu0 0.0
          %1032 = vmatprep.subr.mxu0 0.0
          %1033 = vmatpush1.msra.mxu0 0.0
          %1034 = vmatprep.subr.mxu0 0.0
          %1035 = vmatpush1.msra.mxu0 0.0
          %1036 = vmatprep.subr.mxu0 0.0
          %1037 = vmatpush1.msra.mxu0 0.0
          %1038 = vmatprep.subr.mxu0 0.0
          %1039 = vmatpush1.msra.mxu0 0.0
          %1040 = vmatprep.subr.mxu0 0.0
          %1041 = vmatpush1.msra.mxu0 0.0
          %1042 = vmatprep.subr.mxu0 0.0
          %1043 = vmatpush1.msra.mxu0 0.0
          %1044 = vmatprep.subr.mxu0 0.0
          %1045 = vmatpush1.msra.mxu0 0.0
          %1046 = vmatprep.subr.mxu0 0.0
          %1047 = vmatpush1.msra.mxu0 0.0
          %1048 = vmatprep.subr.mxu0 0.0
          %1049 = vmatpush1.msra.mxu0 0.0
          %1050 = vmatprep.subr.mxu0 0.0
          %1051 = vmatpush1.msra.mxu0 0.0
          %1052 = vmatprep.subr.mxu0 0.0
          %1053 = vmatpush1.msra.mxu0 0.0
          %1054 = vmatprep.subr.mxu0 0.0
          %1055 = vmatpush1.msra.mxu0 0.0
          %1056 = vmatprep.subr.mxu0 0.0
          %1057 = vmatpush1.msra.mxu0 0.0
          %1058 = vmatprep.subr.mxu0 0.0
          %1059 = vmatpush1.msra.mxu0 0.0
          %1060 = vmatprep.subr.mxu0 0.0
          %1061 = vmatpush1.msra.mxu0 0.0
          %1062 = vmatprep.subr.mxu0 0.0
          %1063 = vmatpush1.msra.mxu0 0.0
          %1064 = vmatprep.subr.mxu0 0.0
          %1065 = vmatpush1.msra.mxu0 0.0
          %1066 = vmatprep.mubr.f32.mxu0 0.0
          %1067 = vmatmul.mubr.f32.gmra.mrb[0].mxu0 %v997
          %v1068 = vpop.f32.mrb[0].mxu0
          %v1069 = vadd.f32 %v995, %v1068
          %v1070 = vpop.f32.mrb[0].mxu0
          %1071 = vdwg.mxu0
          %v1072 = vld [vmem:[%s561] sm:$0xff]
          %v1073 = vld [vmem:[%s5] sm:$0xff]
          %v1074 = vld [vmem:[%s5 + $0x8] sm:$0xff]
          %v1075 = vld [vmem:[%s5 + $0x10] sm:$0xff]
          %v1076 = vld [vmem:[%s5 + $0x18] sm:$0xff]
          %v1077 = vld [vmem:[#allocation12] sm:$0x1]
          %v1079 = vlaneseq
          %v1080 = vshrl.u32 %v1079, 7
          %v1081 = vsub.s32 0, %v1080
          %v1082 = vrot.slane %v1077, %v1081
          %v1085 = vsel %vm675, %v1072, 0
          %1087 = vmatprep.subr.mxu0 0.0
          %1088 = vmatpush1.msra.mxu0 %v1073
          %1089 = vmatprep.subr.mxu0 0.0
          %1090 = vmatpush1.msra.mxu0 %v1074
          %1091 = vmatprep.subr.mxu0 0.0
          %1092 = vmatpush1.msra.mxu0 %v1075
          %1093 = vmatprep.subr.mxu0 0.0
          %1094 = vmatpush1.msra.mxu0 %v1076
          %1095 = vmatprep.subr.mxu0 0.0
          %1096 = vmatpush1.msra.mxu0 0.0
          %1097 = vmatprep.subr.mxu0 0.0
          %1098 = vmatpush1.msra.mxu0 0.0
          %1099 = vmatprep.subr.mxu0 0.0
          %1100 = vmatpush1.msra.mxu0 0.0
          %1101 = vmatprep.subr.mxu0 0.0
          %1102 = vmatpush1.msra.mxu0 0.0
          %1103 = vmatprep.subr.mxu0 0.0
          %1104 = vmatpush1.msra.mxu0 0.0
          %1105 = vmatprep.subr.mxu0 0.0
          %1106 = vmatpush1.msra.mxu0 0.0
          %1107 = vmatprep.subr.mxu0 0.0
          %1108 = vmatpush1.msra.mxu0 0.0
          %1109 = vmatprep.subr.mxu0 0.0
          %1110 = vmatpush1.msra.mxu0 0.0
          %1111 = vmatprep.subr.mxu0 0.0
          %1112 = vmatpush1.msra.mxu0 0.0
          %1113 = vmatprep.subr.mxu0 0.0
          %1114 = vmatpush1.msra.mxu0 0.0
          %1115 = vmatprep.subr.mxu0 0.0
          %1116 = vmatpush1.msra.mxu0 0.0
          %1117 = vmatprep.subr.mxu0 0.0
          %1118 = vmatpush1.msra.mxu0 0.0
          %1119 = vmatprep.subr.mxu0 0.0
          %1120 = vmatpush1.msra.mxu0 0.0
          %1121 = vmatprep.subr.mxu0 0.0
          %1122 = vmatpush1.msra.mxu0 0.0
          %1123 = vmatprep.subr.mxu0 0.0
          %1124 = vmatpush1.msra.mxu0 0.0
          %1125 = vmatprep.subr.mxu0 0.0
          %1126 = vmatpush1.msra.mxu0 0.0
          %1127 = vmatprep.subr.mxu0 0.0
          %1128 = vmatpush1.msra.mxu0 0.0
          %1129 = vmatprep.subr.mxu0 0.0
          %1130 = vmatpush1.msra.mxu0 0.0
          %1131 = vmatprep.subr.mxu0 0.0
          %1132 = vmatpush1.msra.mxu0 0.0
          %1133 = vmatprep.subr.mxu0 0.0
          %1134 = vmatpush1.msra.mxu0 0.0
          %1135 = vmatprep.subr.mxu0 0.0
          %1136 = vmatpush1.msra.mxu0 0.0
          %1137 = vmatprep.subr.mxu0 0.0
          %1138 = vmatpush1.msra.mxu0 0.0
          %1139 = vmatprep.subr.mxu0 0.0
          %1140 = vmatpush1.msra.mxu0 0.0
          %1141 = vmatprep.subr.mxu0 0.0
          %1142 = vmatpush1.msra.mxu0 0.0
          %1143 = vmatprep.subr.mxu0 0.0
          %1144 = vmatpush1.msra.mxu0 0.0
          %1145 = vmatprep.subr.mxu0 0.0
          %1146 = vmatpush1.msra.mxu0 0.0
          %1147 = vmatprep.subr.mxu0 0.0
          %1148 = vmatpush1.msra.mxu0 0.0
          %1149 = vmatprep.subr.mxu0 0.0
          %1150 = vmatpush1.msra.mxu0 0.0
          %1151 = vmatprep.mubr.f32.mxu0 0.0
          %1152 = vmatmul.mubr.f32.gmra.mrb[0].mxu0 %v1085
          %v1153 = vpop.f32.mrb[0].mxu0
          %v1154 = vadd.f32 %v1082, %v1153
          %v1155 = vpop.f32.mrb[0].mxu0
          %1156 = vdwg.mxu0
          %v1158 = vsel %vm675, %v1154, 0
          %1160 = vmatprep.subr.mxu0 0.0
          %1161 = vmatpush1.msra.mxu0 %v653
          %1162 = vmatprep.subr.mxu0 0.0
          %1163 = vmatpush1.msra.mxu0 %v654
          %1164 = vmatprep.subr.mxu0 0.0
          %1165 = vmatpush1.msra.mxu0 %v655
          %1166 = vmatprep.subr.mxu0 0.0
          %1167 = vmatpush1.msra.mxu0 %v656
          %1168 = vmatprep.subr.mxu0 0.0
          %1169 = vmatpush1.msra.mxu0 0.0
          %1170 = vmatprep.subr.mxu0 0.0
          %1171 = vmatpush1.msra.mxu0 0.0
          %1172 = vmatprep.subr.mxu0 0.0
          %1173 = vmatpush1.msra.mxu0 0.0
          %1174 = vmatprep.subr.mxu0 0.0
          %1175 = vmatpush1.msra.mxu0 0.0
          %1176 = vmatprep.subr.mxu0 0.0
          %1177 = vmatpush1.msra.mxu0 0.0
          %1178 = vmatprep.subr.mxu0 0.0
          %1179 = vmatpush1.msra.mxu0 0.0
          %1180 = vmatprep.subr.mxu0 0.0
          %1181 = vmatpush1.msra.mxu0 0.0
          %1182 = vmatprep.subr.mxu0 0.0
          %1183 = vmatpush1.msra.mxu0 0.0
          %1184 = vmatprep.subr.mxu0 0.0
          %1185 = vmatpush1.msra.mxu0 0.0
          %1186 = vmatprep.subr.mxu0 0.0
          %1187 = vmatpush1.msra.mxu0 0.0
          %1188 = vmatprep.subr.mxu0 0.0
          %1189 = vmatpush1.msra.mxu0 0.0
          %1190 = vmatprep.subr.mxu0 0.0
          %1191 = vmatpush1.msra.mxu0 0.0
          %1192 = vmatprep.subr.mxu0 0.0
          %1193 = vmatpush1.msra.mxu0 0.0
          %1194 = vmatprep.subr.mxu0 0.0
          %1195 = vmatpush1.msra.mxu0 0.0
          %1196 = vmatprep.subr.mxu0 0.0
          %1197 = vmatpush1.msra.mxu0 0.0
          %1198 = vmatprep.subr.mxu0 0.0
          %1199 = vmatpush1.msra.mxu0 0.0
          %1200 = vmatprep.subr.mxu0 0.0
          %1201 = vmatpush1.msra.mxu0 0.0
          %1202 = vmatprep.subr.mxu0 0.0
          %1203 = vmatpush1.msra.mxu0 0.0
          %1204 = vmatprep.subr.mxu0 0.0
          %1205 = vmatpush1.msra.mxu0 0.0
          %1206 = vmatprep.subr.mxu0 0.0
          %1207 = vmatpush1.msra.mxu0 0.0
          %1208 = vmatprep.subr.mxu0 0.0
          %1209 = vmatpush1.msra.mxu0 0.0
          %1210 = vmatprep.subr.mxu0 0.0
          %1211 = vmatpush1.msra.mxu0 0.0
          %1212 = vmatprep.subr.mxu0 0.0
          %1213 = vmatpush1.msra.mxu0 0.0
          %1214 = vmatprep.subr.mxu0 0.0
          %1215 = vmatpush1.msra.mxu0 0.0
          %1216 = vmatprep.subr.mxu0 0.0
          %1217 = vmatpush1.msra.mxu0 0.0
          %1218 = vmatprep.subr.mxu0 0.0
          %1219 = vmatpush1.msra.mxu0 0.0
          %1220 = vmatprep.subr.mxu0 0.0
          %1221 = vmatpush1.msra.mxu0 0.0
          %1222 = vmatprep.subr.mxu0 0.0
          %1223 = vmatpush1.msra.mxu0 0.0
          %1224 = vmatprep.mubr.f32.mxu0 0.0
          %1225 = vmatmul.mubr.f32.gmra.mrb[0].mxu0 %v1158
          %v1226 = vpop.f32.mrb[0].mxu0
          %v1227 = vadd.f32 0.0, %v1226
          %v1228 = vpop.f32.mrb[0].mxu0
          %1229 = vdwg.mxu0
          %v1230 = vmul.f32 %v1154, %v1154
          %v1232 = vsel %vm675, %v1230, 0
          %1234 = vmatprep.subr.mxu0 0.0
          %1235 = vmatpush1.msra.mxu0 %v657
          %1236 = vmatprep.subr.mxu0 0.0
          %1237 = vmatpush1.msra.mxu0 %v658
          %1238 = vmatprep.subr.mxu0 0.0
          %1239 = vmatpush1.msra.mxu0 %v659
          %1240 = vmatprep.subr.mxu0 0.0
          %1241 = vmatpush1.msra.mxu0 %v660
          %1242 = vmatprep.subr.mxu0 0.0
          %1243 = vmatpush1.msra.mxu0 0.0
          %1244 = vmatprep.subr.mxu0 0.0
          %1245 = vmatpush1.msra.mxu0 0.0
          %1246 = vmatprep.subr.mxu0 0.0
          %1247 = vmatpush1.msra.mxu0 0.0
          %1248 = vmatprep.subr.mxu0 0.0
          %1249 = vmatpush1.msra.mxu0 0.0
          %1250 = vmatprep.subr.mxu0 0.0
          %1251 = vmatpush1.msra.mxu0 0.0
          %1252 = vmatprep.subr.mxu0 0.0
          %1253 = vmatpush1.msra.mxu0 0.0
          %1254 = vmatprep.subr.mxu0 0.0
          %1255 = vmatpush1.msra.mxu0 0.0
          %1256 = vmatprep.subr.mxu0 0.0
          %1257 = vmatpush1.msra.mxu0 0.0
          %1258 = vmatprep.subr.mxu0 0.0
          %1259 = vmatpush1.msra.mxu0 0.0
          %1260 = vmatprep.subr.mxu0 0.0
          %1261 = vmatpush1.msra.mxu0 0.0
          %1262 = vmatprep.subr.mxu0 0.0
          %1263 = vmatpush1.msra.mxu0 0.0
          %1264 = vmatprep.subr.mxu0 0.0
          %1265 = vmatpush1.msra.mxu0 0.0
          %1266 = vmatprep.subr.mxu0 0.0
          %1267 = vmatpush1.msra.mxu0 0.0
          %1268 = vmatprep.subr.mxu0 0.0
          %1269 = vmatpush1.msra.mxu0 0.0
          %1270 = vmatprep.subr.mxu0 0.0
          %1271 = vmatpush1.msra.mxu0 0.0
          %1272 = vmatprep.subr.mxu0 0.0
          %1273 = vmatpush1.msra.mxu0 0.0
          %1274 = vmatprep.subr.mxu0 0.0
          %1275 = vmatpush1.msra.mxu0 0.0
          %1276 = vmatprep.subr.mxu0 0.0
          %1277 = vmatpush1.msra.mxu0 0.0
          %1278 = vmatprep.subr.mxu0 0.0
          %1279 = vmatpush1.msra.mxu0 0.0
          %1280 = vmatprep.subr.mxu0 0.0
          %1281 = vmatpush1.msra.mxu0 0.0
          %1282 = vmatprep.subr.mxu0 0.0
          %1283 = vmatpush1.msra.mxu0 0.0
          %1284 = vmatprep.subr.mxu0 0.0
          %1285 = vmatpush1.msra.mxu0 0.0
          %1286 = vmatprep.subr.mxu0 0.0
          %1287 = vmatpush1.msra.mxu0 0.0
          %1288 = vmatprep.subr.mxu0 0.0
          %1289 = vmatpush1.msra.mxu0 0.0
          %1290 = vmatprep.subr.mxu0 0.0
          %1291 = vmatpush1.msra.mxu0 0.0
          %1292 = vmatprep.subr.mxu0 0.0
          %1293 = vmatpush1.msra.mxu0 0.0
          %1294 = vmatprep.subr.mxu0 0.0
          %1295 = vmatpush1.msra.mxu0 0.0
          %1296 = vmatprep.subr.mxu0 0.0
          %1297 = vmatpush1.msra.mxu0 0.0
          %1298 = vmatprep.mubr.f32.mxu0 0.0
          %1299 = vmatmul.mubr.f32.gmra.mrb[0].mxu0 %v1232
          %v1300 = vpop.f32.mrb[0].mxu0
          %v1301 = vadd.f32 0.0, %v1300
          %v1302 = vpop.f32.mrb[0].mxu0
          %1303 = vdwg.mxu0
          %v1304 = vxor.u32 %v1227, 2147483648
          %v1305 = vmul.f32 %v1304, 1.442695
          %v1306 = vpow.pop %v1305
          %v1307 = vadd.f32 %v1306, 1.0
          %v1308 = vrcp.pop %v1307
          %v1309 = vmul.f32 1.0, %v1308
          %v1310 = vstv %s650
          %v1311 = vmul.f32 %v1309, %v1310
          %v1312 = vadd.f32 %v1311, 1.1
          %v1313 = vmul.f32 %v1312, %v1312
          %v1314 = vsub.f32 %v1313, 1.0
          %v1315 = vmax.f32 %v1301, 1e-08
          %v1316 = vrcp.pop %v1315
          %v1317 = vmul.f32 %v1314, %v1316
          %v1318 = vrsqrt.pop %v1317
          %v1319 = vmul.f32 %v1317, %v1318
          %vm1320 = vcmp.eq.f32.partialorder %v1317, inf
          %v1321 = vsel %vm1320, %v1317, %v1319
          %vm1322 = vcmp.eq.f32.partialorder %v1317, 0.0
          %v1323 = vand.u32 %v1317, 2147483648
          %v1324 = vsel %vm1322, %v1323, %v1321
          %v1326 = vsel %vm917, %v1324, 0
          %1328 = vmatprep.subr.mxu0 0.0
          %1329 = vmatpush1.msra.mxu0 %v923
          %1330 = vmatprep.subr.mxu0 0.0
          %1331 = vmatpush1.msra.mxu0 0.0
          %1332 = vmatprep.subr.mxu0 0.0
          %1333 = vmatpush1.msra.mxu0 0.0
          %1334 = vmatprep.subr.mxu0 0.0
          %1335 = vmatpush1.msra.mxu0 0.0
          %1336 = vmatprep.subr.mxu0 0.0
          %1337 = vmatpush1.msra.mxu0 0.0
          %1338 = vmatprep.subr.mxu0 0.0
          %1339 = vmatpush1.msra.mxu0 0.0
          %1340 = vmatprep.subr.mxu0 0.0
          %1341 = vmatpush1.msra.mxu0 0.0
          %1342 = vmatprep.subr.mxu0 0.0
          %1343 = vmatpush1.msra.mxu0 0.0
          %1344 = vmatprep.subr.mxu0 0.0
          %1345 = vmatpush1.msra.mxu0 0.0
          %1346 = vmatprep.subr.mxu0 0.0
          %1347 = vmatpush1.msra.mxu0 0.0
          %1348 = vmatprep.subr.mxu0 0.0
          %1349 = vmatpush1.msra.mxu0 0.0
          %1350 = vmatprep.subr.mxu0 0.0
          %1351 = vmatpush1.msra.mxu0 0.0
          %1352 = vmatprep.subr.mxu0 0.0
          %1353 = vmatpush1.msra.mxu0 0.0
          %1354 = vmatprep.subr.mxu0 0.0
          %1355 = vmatpush1.msra.mxu0 0.0
          %1356 = vmatprep.subr.mxu0 0.0
          %1357 = vmatpush1.msra.mxu0 0.0
          %1358 = vmatprep.subr.mxu0 0.0
          %1359 = vmatpush1.msra.mxu0 0.0
          %1360 = vmatprep.subr.mxu0 0.0
          %1361 = vmatpush1.msra.mxu0 0.0
          %1362 = vmatprep.subr.mxu0 0.0
          %1363 = vmatpush1.msra.mxu0 0.0
          %1364 = vmatprep.subr.mxu0 0.0
          %1365 = vmatpush1.msra.mxu0 0.0
          %1366 = vmatprep.subr.mxu0 0.0
          %1367 = vmatpush1.msra.mxu0 0.0
          %1368 = vmatprep.subr.mxu0 0.0
          %1369 = vmatpush1.msra.mxu0 0.0
          %1370 = vmatprep.subr.mxu0 0.0
          %1371 = vmatpush1.msra.mxu0 0.0
          %1372 = vmatprep.subr.mxu0 0.0
          %1373 = vmatpush1.msra.mxu0 0.0
          %1374 = vmatprep.subr.mxu0 0.0
          %1375 = vmatpush1.msra.mxu0 0.0
          %1376 = vmatprep.subr.mxu0 0.0
          %1377 = vmatpush1.msra.mxu0 0.0
          %1378 = vmatprep.subr.mxu0 0.0
          %1379 = vmatpush1.msra.mxu0 0.0
          %1380 = vmatprep.subr.mxu0 0.0
          %1381 = vmatpush1.msra.mxu0 0.0
          %1382 = vmatprep.subr.mxu0 0.0
          %1383 = vmatpush1.msra.mxu0 0.0
          %1384 = vmatprep.subr.mxu0 0.0
          %1385 = vmatpush1.msra.mxu0 0.0
          %1386 = vmatprep.subr.mxu0 0.0
          %1387 = vmatpush1.msra.mxu0 0.0
          %1388 = vmatprep.subr.mxu0 0.0
          %1389 = vmatpush1.msra.mxu0 0.0
          %1390 = vmatprep.subr.mxu0 0.0
          %1391 = vmatpush1.msra.mxu0 0.0
          %1392 = vmatprep.mubr.f32.mxu0 0.0
          %1393 = vmatmul.mubr.f32.gmra.mrb[0].mxu0 %v1326
          %v1394 = vpop.f32.mrb[0].mxu0
          %v1395 = vadd.f32 0.0, %v1394
          %v1396 = vpop.f32.mrb[0].mxu0
          %1397 = vdwg.mxu0
          %v1398 = vmul.f32 %v1154, %v1395
          %v1400 = vsel %vm917, %v1312, 0
          %1402 = vmatprep.subr.mxu0 0.0
          %1403 = vmatpush1.msra.mxu0 %v1000
          %1404 = vmatprep.subr.mxu0 0.0
          %1405 = vmatpush1.msra.mxu0 0.0
          %1406 = vmatprep.subr.mxu0 0.0
          %1407 = vmatpush1.msra.mxu0 0.0
          %1408 = vmatprep.subr.mxu0 0.0
          %1409 = vmatpush1.msra.mxu0 0.0
          %1410 = vmatprep.subr.mxu0 0.0
          %1411 = vmatpush1.msra.mxu0 0.0
          %1412 = vmatprep.subr.mxu0 0.0
          %1413 = vmatpush1.msra.mxu0 0.0
          %1414 = vmatprep.subr.mxu0 0.0
          %1415 = vmatpush1.msra.mxu0 0.0
          %1416 = vmatprep.subr.mxu0 0.0
          %1417 = vmatpush1.msra.mxu0 0.0
          %1418 = vmatprep.subr.mxu0 0.0
          %1419 = vmatpush1.msra.mxu0 0.0
          %1420 = vmatprep.subr.mxu0 0.0
          %1421 = vmatpush1.msra.mxu0 0.0
          %1422 = vmatprep.subr.mxu0 0.0
          %1423 = vmatpush1.msra.mxu0 0.0
          %1424 = vmatprep.subr.mxu0 0.0
          %1425 = vmatpush1.msra.mxu0 0.0
          %1426 = vmatprep.subr.mxu0 0.0
          %1427 = vmatpush1.msra.mxu0 0.0
          %1428 = vmatprep.subr.mxu0 0.0
          %1429 = vmatpush1.msra.mxu0 0.0
          %1430 = vmatprep.subr.mxu0 0.0
          %1431 = vmatpush1.msra.mxu0 0.0
          %1432 = vmatprep.subr.mxu0 0.0
          %1433 = vmatpush1.msra.mxu0 0.0
          %1434 = vmatprep.subr.mxu0 0.0
          %1435 = vmatpush1.msra.mxu0 0.0
          %1436 = vmatprep.subr.mxu0 0.0
          %1437 = vmatpush1.msra.mxu0 0.0
          %1438 = vmatprep.subr.mxu0 0.0
          %1439 = vmatpush1.msra.mxu0 0.0
          %1440 = vmatprep.subr.mxu0 0.0
          %1441 = vmatpush1.msra.mxu0 0.0
          %1442 = vmatprep.subr.mxu0 0.0
          %1443 = vmatpush1.msra.mxu0 0.0
          %1444 = vmatprep.subr.mxu0 0.0
          %1445 = vmatpush1.msra.mxu0 0.0
          %1446 = vmatprep.subr.mxu0 0.0
          %1447 = vmatpush1.msra.mxu0 0.0
          %1448 = vmatprep.subr.mxu0 0.0
          %1449 = vmatpush1.msra.mxu0 0.0
          %1450 = vmatprep.subr.mxu0 0.0
          %1451 = vmatpush1.msra.mxu0 0.0
          %1452 = vmatprep.subr.mxu0 0.0
          %1453 = vmatpush1.msra.mxu0 0.0
          %1454 = vmatprep.subr.mxu0 0.0
          %1455 = vmatpush1.msra.mxu0 0.0
          %1456 = vmatprep.subr.mxu0 0.0
          %1457 = vmatpush1.msra.mxu0 0.0
          %1458 = vmatprep.subr.mxu0 0.0
          %1459 = vmatpush1.msra.mxu0 0.0
          %1460 = vmatprep.subr.mxu0 0.0
          %1461 = vmatpush1.msra.mxu0 0.0
          %1462 = vmatprep.subr.mxu0 0.0
          %1463 = vmatpush1.msra.mxu0 0.0
          %1464 = vmatprep.subr.mxu0 0.0
          %1465 = vmatpush1.msra.mxu0 0.0
          %1466 = vmatprep.mubr.f32.mxu0 0.0
          %1467 = vmatmul.mubr.f32.gmra.mrb[0].mxu0 %v1400
          %v1468 = vpop.f32.mrb[0].mxu0
          %v1469 = vadd.f32 %v1398, %v1468
          %v1470 = vpop.f32.mrb[0].mxu0
          %1471 = vdwg.mxu0
          %v1472 = vld [vmem:[%s570] sm:$0xff]
          %v1473 = vld [vmem:[%s7] sm:$0xff]
          %v1474 = vld [vmem:[%s7 + $0x8] sm:$0xff]
          %v1475 = vld [vmem:[%s7 + $0x10] sm:$0xff]
          %v1476 = vld [vmem:[%s7 + $0x18] sm:$0xff]
          %v1477 = vld [vmem:[#allocation14] sm:$0x1]
          %v1479 = vlaneseq
          %v1480 = vshrl.u32 %v1479, 7
          %v1481 = vsub.s32 0, %v1480
          %v1482 = vrot.slane %v1477, %v1481
          %v1485 = vsel %vm675, %v1472, 0
          %1487 = vmatprep.subr.mxu0 0.0
          %1488 = vmatpush1.msra.mxu0 %v1473
          %1489 = vmatprep.subr.mxu0 0.0
          %1490 = vmatpush1.msra.mxu0 %v1474
          %1491 = vmatprep.subr.mxu0 0.0
          %1492 = vmatpush1.msra.mxu0 %v1475
          %1493 = vmatprep.subr.mxu0 0.0
          %1494 = vmatpush1.msra.mxu0 %v1476
          %1495 = vmatprep.subr.mxu0 0.0
          %1496 = vmatpush1.msra.mxu0 0.0
          %1497 = vmatprep.subr.mxu0 0.0
          %1498 = vmatpush1.msra.mxu0 0.0
          %1499 = vmatprep.subr.mxu0 0.0
          %1500 = vmatpush1.msra.mxu0 0.0
          %1501 = vmatprep.subr.mxu0 0.0
          %1502 = vmatpush1.msra.mxu0 0.0
          %1503 = vmatprep.subr.mxu0 0.0
          %1504 = vmatpush1.msra.mxu0 0.0
          %1505 = vmatprep.subr.mxu0 0.0
          %1506 = vmatpush1.msra.mxu0 0.0
          %1507 = vmatprep.subr.mxu0 0.0
          %1508 = vmatpush1.msra.mxu0 0.0
          %1509 = vmatprep.subr.mxu0 0.0
          %1510 = vmatpush1.msra.mxu0 0.0
          %1511 = vmatprep.subr.mxu0 0.0
          %1512 = vmatpush1.msra.mxu0 0.0
          %1513 = vmatprep.subr.mxu0 0.0
          %1514 = vmatpush1.msra.mxu0 0.0
          %1515 = vmatprep.subr.mxu0 0.0
          %1516 = vmatpush1.msra.mxu0 0.0
          %1517 = vmatprep.subr.mxu0 0.0
          %1518 = vmatpush1.msra.mxu0 0.0
          %1519 = vmatprep.subr.mxu0 0.0
          %1520 = vmatpush1.msra.mxu0 0.0
          %1521 = vmatprep.subr.mxu0 0.0
          %1522 = vmatpush1.msra.mxu0 0.0
          %1523 = vmatprep.subr.mxu0 0.0
          %1524 = vmatpush1.msra.mxu0 0.0
          %1525 = vmatprep.subr.mxu0 0.0
          %1526 = vmatpush1.msra.mxu0 0.0
          %1527 = vmatprep.subr.mxu0 0.0
          %1528 = vmatpush1.msra.mxu0 0.0
          %1529 = vmatprep.subr.mxu0 0.0
          %1530 = vmatpush1.msra.mxu0 0.0
          %1531 = vmatprep.subr.mxu0 0.0
          %1532 = vmatpush1.msra.mxu0 0.0
          %1533 = vmatprep.subr.mxu0 0.0
          %1534 = vmatpush1.msra.mxu0 0.0
          %1535 = vmatprep.subr.mxu0 0.0
          %1536 = vmatpush1.msra.mxu0 0.0
          %1537 = vmatprep.subr.mxu0 0.0
          %1538 = vmatpush1.msra.mxu0 0.0
          %1539 = vmatprep.subr.mxu0 0.0
          %1540 = vmatpush1.msra.mxu0 0.0
          %1541 = vmatprep.subr.mxu0 0.0
          %1542 = vmatpush1.msra.mxu0 0.0
          %1543 = vmatprep.subr.mxu0 0.0
          %1544 = vmatpush1.msra.mxu0 0.0
          %1545 = vmatprep.subr.mxu0 0.0
          %1546 = vmatpush1.msra.mxu0 0.0
          %1547 = vmatprep.subr.mxu0 0.0
          %1548 = vmatpush1.msra.mxu0 0.0
          %1549 = vmatprep.subr.mxu0 0.0
          %1550 = vmatpush1.msra.mxu0 0.0
          %1551 = vmatprep.mubr.f32.mxu0 0.0
          %1552 = vmatmul.mubr.f32.gmra.mrb[0].mxu0 %v1485
          %v1553 = vpop.f32.mrb[0].mxu0
          %v1554 = vadd.f32 %v1482, %v1553
          %v1555 = vpop.f32.mrb[0].mxu0
          %1556 = vdwg.mxu0
          %v1558 = vsel %vm675, %v1554, 0
          %1560 = vmatprep.subr.mxu0 0.0
          %1561 = vmatpush1.msra.mxu0 %v653
          %1562 = vmatprep.subr.mxu0 0.0
          %1563 = vmatpush1.msra.mxu0 %v654
          %1564 = vmatprep.subr.mxu0 0.0
          %1565 = vmatpush1.msra.mxu0 %v655
          %1566 = vmatprep.subr.mxu0 0.0
          %1567 = vmatpush1.msra.mxu0 %v656
          %1568 = vmatprep.subr.mxu0 0.0
          %1569 = vmatpush1.msra.mxu0 0.0
          %1570 = vmatprep.subr.mxu0 0.0
          %1571 = vmatpush1.msra.mxu0 0.0
          %1572 = vmatprep.subr.mxu0 0.0
          %1573 = vmatpush1.msra.mxu0 0.0
          %1574 = vmatprep.subr.mxu0 0.0
          %1575 = vmatpush1.msra.mxu0 0.0
          %1576 = vmatprep.subr.mxu0 0.0
          %1577 = vmatpush1.msra.mxu0 0.0
          %1578 = vmatprep.subr.mxu0 0.0
          %1579 = vmatpush1.msra.mxu0 0.0
          %1580 = vmatprep.subr.mxu0 0.0
          %1581 = vmatpush1.msra.mxu0 0.0
          %1582 = vmatprep.subr.mxu0 0.0
          %1583 = vmatpush1.msra.mxu0 0.0
          %1584 = vmatprep.subr.mxu0 0.0
          %1585 = vmatpush1.msra.mxu0 0.0
          %1586 = vmatprep.subr.mxu0 0.0
          %1587 = vmatpush1.msra.mxu0 0.0
          %1588 = vmatprep.subr.mxu0 0.0
          %1589 = vmatpush1.msra.mxu0 0.0
          %1590 = vmatprep.subr.mxu0 0.0
          %1591 = vmatpush1.msra.mxu0 0.0
          %1592 = vmatprep.subr.mxu0 0.0
          %1593 = vmatpush1.msra.mxu0 0.0
          %1594 = vmatprep.subr.mxu0 0.0
          %1595 = vmatpush1.msra.mxu0 0.0
          %1596 = vmatprep.subr.mxu0 0.0
          %1597 = vmatpush1.msra.mxu0 0.0
          %1598 = vmatprep.subr.mxu0 0.0
          %1599 = vmatpush1.msra.mxu0 0.0
          %1600 = vmatprep.subr.mxu0 0.0
          %1601 = vmatpush1.msra.mxu0 0.0
          %1602 = vmatprep.subr.mxu0 0.0
          %1603 = vmatpush1.msra.mxu0 0.0
          %1604 = vmatprep.subr.mxu0 0.0
          %1605 = vmatpush1.msra.mxu0 0.0
          %1606 = vmatprep.subr.mxu0 0.0
          %1607 = vmatpush1.msra.mxu0 0.0
          %1608 = vmatprep.subr.mxu0 0.0
          %1609 = vmatpush1.msra.mxu0 0.0
          %1610 = vmatprep.subr.mxu0 0.0
          %1611 = vmatpush1.msra.mxu0 0.0
          %1612 = vmatprep.subr.mxu0 0.0
          %1613 = vmatpush1.msra.mxu0 0.0
          %1614 = vmatprep.subr.mxu0 0.0
          %1615 = vmatpush1.msra.mxu0 0.0
          %1616 = vmatprep.subr.mxu0 0.0
          %1617 = vmatpush1.msra.mxu0 0.0
          %1618 = vmatprep.subr.mxu0 0.0
          %1619 = vmatpush1.msra.mxu0 0.0
          %1620 = vmatprep.subr.mxu0 0.0
          %1621 = vmatpush1.msra.mxu0 0.0
          %1622 = vmatprep.subr.mxu0 0.0
          %1623 = vmatpush1.msra.mxu0 0.0
          %1624 = vmatprep.mubr.f32.mxu0 0.0
          %1625 = vmatmul.mubr.f32.gmra.mrb[0].mxu0 %v1558
          %v1626 = vpop.f32.mrb[0].mxu0
          %v1627 = vadd.f32 0.0, %v1626
          %v1628 = vpop.f32.mrb[0].mxu0
          %1629 = vdwg.mxu0
          %v1630 = vmul.f32 %v1554, %v1554
          %v1632 = vsel %vm675, %v1630, 0
          %1634 = vmatprep.subr.mxu0 0.0
          %1635 = vmatpush1.msra.mxu0 %v657
          %1636 = vmatprep.subr.mxu0 0.0
          %1637 = vmatpush1.msra.mxu0 %v658
          %1638 = vmatprep.subr.mxu0 0.0
          %1639 = vmatpush1.msra.mxu0 %v659
          %1640 = vmatprep.subr.mxu0 0.0
          %1641 = vmatpush1.msra.mxu0 %v660
          %1642 = vmatprep.subr.mxu0 0.0
          %1643 = vmatpush1.msra.mxu0 0.0
          %1644 = vmatprep.subr.mxu0 0.0
          %1645 = vmatpush1.msra.mxu0 0.0
          %1646 = vmatprep.subr.mxu0 0.0
          %1647 = vmatpush1.msra.mxu0 0.0
          %1648 = vmatprep.subr.mxu0 0.0
          %1649 = vmatpush1.msra.mxu0 0.0
          %1650 = vmatprep.subr.mxu0 0.0
          %1651 = vmatpush1.msra.mxu0 0.0
          %1652 = vmatprep.subr.mxu0 0.0
          %1653 = vmatpush1.msra.mxu0 0.0
          %1654 = vmatprep.subr.mxu0 0.0
          %1655 = vmatpush1.msra.mxu0 0.0
          %1656 = vmatprep.subr.mxu0 0.0
          %1657 = vmatpush1.msra.mxu0 0.0
          %1658 = vmatprep.subr.mxu0 0.0
          %1659 = vmatpush1.msra.mxu0 0.0
          %1660 = vmatprep.subr.mxu0 0.0
          %1661 = vmatpush1.msra.mxu0 0.0
          %1662 = vmatprep.subr.mxu0 0.0
          %1663 = vmatpush1.msra.mxu0 0.0
          %1664 = vmatprep.subr.mxu0 0.0
          %1665 = vmatpush1.msra.mxu0 0.0
          %1666 = vmatprep.subr.mxu0 0.0
          %1667 = vmatpush1.msra.mxu0 0.0
          %1668 = vmatprep.subr.mxu0 0.0
          %1669 = vmatpush1.msra.mxu0 0.0
          %1670 = vmatprep.subr.mxu0 0.0
          %1671 = vmatpush1.msra.mxu0 0.0
          %1672 = vmatprep.subr.mxu0 0.0
          %1673 = vmatpush1.msra.mxu0 0.0
          %1674 = vmatprep.subr.mxu0 0.0
          %1675 = vmatpush1.msra.mxu0 0.0
          %1676 = vmatprep.subr.mxu0 0.0
          %1677 = vmatpush1.msra.mxu0 0.0
          %1678 = vmatprep.subr.mxu0 0.0
          %1679 = vmatpush1.msra.mxu0 0.0
          %1680 = vmatprep.subr.mxu0 0.0
          %1681 = vmatpush1.msra.mxu0 0.0
          %1682 = vmatprep.subr.mxu0 0.0
          %1683 = vmatpush1.msra.mxu0 0.0
          %1684 = vmatprep.subr.mxu0 0.0
          %1685 = vmatpush1.msra.mxu0 0.0
          %1686 = vmatprep.subr.mxu0 0.0
          %1687 = vmatpush1.msra.mxu0 0.0
          %1688 = vmatprep.subr.mxu0 0.0
          %1689 = vmatpush1.msra.mxu0 0.0
          %1690 = vmatprep.subr.mxu0 0.0
          %1691 = vmatpush1.msra.mxu0 0.0
          %1692 = vmatprep.subr.mxu0 0.0
          %1693 = vmatpush1.msra.mxu0 0.0
          %1694 = vmatprep.subr.mxu0 0.0
          %1695 = vmatpush1.msra.mxu0 0.0
          %1696 = vmatprep.subr.mxu0 0.0
          %1697 = vmatpush1.msra.mxu0 0.0
          %1698 = vmatprep.mubr.f32.mxu0 0.0
          %1699 = vmatmul.mubr.f32.gmra.mrb[0].mxu0 %v1632
          %v1700 = vpop.f32.mrb[0].mxu0
          %v1701 = vadd.f32 0.0, %v1700
          %v1702 = vpop.f32.mrb[0].mxu0
          %1703 = vdwg.mxu0
          %v1704 = vxor.u32 %v1627, 2147483648
          %v1705 = vmul.f32 %v1704, 1.442695
          %v1706 = vpow.pop %v1705
          %v1707 = vadd.f32 %v1706, 1.0
          %v1708 = vrcp.pop %v1707
          %v1709 = vmul.f32 1.0, %v1708
          %v1710 = vstv %s651
          %v1711 = vmul.f32 %v1709, %v1710
          %v1712 = vadd.f32 %v1711, 1.1
          %v1713 = vmul.f32 %v1712, %v1712
          %v1714 = vsub.f32 %v1713, 1.0
          %v1715 = vmax.f32 %v1701, 1e-08
          %v1716 = vrcp.pop %v1715
          %v1717 = vmul.f32 %v1714, %v1716
          %v1718 = vrsqrt.pop %v1717
          %v1719 = vmul.f32 %v1717, %v1718
          %vm1720 = vcmp.eq.f32.partialorder %v1717, inf
          %v1721 = vsel %vm1720, %v1717, %v1719
          %vm1722 = vcmp.eq.f32.partialorder %v1717, 0.0
          %v1723 = vand.u32 %v1717, 2147483648
          %v1724 = vsel %vm1722, %v1723, %v1721
          %v1726 = vsel %vm917, %v1724, 0
          %1728 = vmatprep.subr.mxu0 0.0
          %1729 = vmatpush1.msra.mxu0 %v923
          %1730 = vmatprep.subr.mxu0 0.0
          %1731 = vmatpush1.msra.mxu0 0.0
          %1732 = vmatprep.subr.mxu0 0.0
          %1733 = vmatpush1.msra.mxu0 0.0
          %1734 = vmatprep.subr.mxu0 0.0
          %1735 = vmatpush1.msra.mxu0 0.0
          %1736 = vmatprep.subr.mxu0 0.0
          %1737 = vmatpush1.msra.mxu0 0.0
          %1738 = vmatprep.subr.mxu0 0.0
          %1739 = vmatpush1.msra.mxu0 0.0
          %1740 = vmatprep.subr.mxu0 0.0
          %1741 = vmatpush1.msra.mxu0 0.0
          %1742 = vmatprep.subr.mxu0 0.0
          %1743 = vmatpush1.msra.mxu0 0.0
          %1744 = vmatprep.subr.mxu0 0.0
          %1745 = vmatpush1.msra.mxu0 0.0
          %1746 = vmatprep.subr.mxu0 0.0
          %1747 = vmatpush1.msra.mxu0 0.0
          %1748 = vmatprep.subr.mxu0 0.0
          %1749 = vmatpush1.msra.mxu0 0.0
          %1750 = vmatprep.subr.mxu0 0.0
          %1751 = vmatpush1.msra.mxu0 0.0
          %1752 = vmatprep.subr.mxu0 0.0
          %1753 = vmatpush1.msra.mxu0 0.0
          %1754 = vmatprep.subr.mxu0 0.0
          %1755 = vmatpush1.msra.mxu0 0.0
          %1756 = vmatprep.subr.mxu0 0.0
          %1757 = vmatpush1.msra.mxu0 0.0
          %1758 = vmatprep.subr.mxu0 0.0
          %1759 = vmatpush1.msra.mxu0 0.0
          %1760 = vmatprep.subr.mxu0 0.0
          %1761 = vmatpush1.msra.mxu0 0.0
          %1762 = vmatprep.subr.mxu0 0.0
          %1763 = vmatpush1.msra.mxu0 0.0
          %1764 = vmatprep.subr.mxu0 0.0
          %1765 = vmatpush1.msra.mxu0 0.0
          %1766 = vmatprep.subr.mxu0 0.0
          %1767 = vmatpush1.msra.mxu0 0.0
          %1768 = vmatprep.subr.mxu0 0.0
          %1769 = vmatpush1.msra.mxu0 0.0
          %1770 = vmatprep.subr.mxu0 0.0
          %1771 = vmatpush1.msra.mxu0 0.0
          %1772 = vmatprep.subr.mxu0 0.0
          %1773 = vmatpush1.msra.mxu0 0.0
          %1774 = vmatprep.subr.mxu0 0.0
          %1775 = vmatpush1.msra.mxu0 0.0
          %1776 = vmatprep.subr.mxu0 0.0
          %1777 = vmatpush1.msra.mxu0 0.0
          %1778 = vmatprep.subr.mxu0 0.0
          %1779 = vmatpush1.msra.mxu0 0.0
          %1780 = vmatprep.subr.mxu0 0.0
          %1781 = vmatpush1.msra.mxu0 0.0
          %1782 = vmatprep.subr.mxu0 0.0
          %1783 = vmatpush1.msra.mxu0 0.0
          %1784 = vmatprep.subr.mxu0 0.0
          %1785 = vmatpush1.msra.mxu0 0.0
          %1786 = vmatprep.subr.mxu0 0.0
          %1787 = vmatpush1.msra.mxu0 0.0
          %1788 = vmatprep.subr.mxu0 0.0
          %1789 = vmatpush1.msra.mxu0 0.0
          %1790 = vmatprep.subr.mxu0 0.0
          %1791 = vmatpush1.msra.mxu0 0.0
          %1792 = vmatprep.mubr.f32.mxu0 0.0
          %1793 = vmatmul.mubr.f32.gmra.mrb[0].mxu0 %v1726
          %v1794 = vpop.f32.mrb[0].mxu0
          %v1795 = vadd.f32 0.0, %v1794
          %v1796 = vpop.f32.mrb[0].mxu0
          %1797 = vdwg.mxu0
          %v1798 = vmul.f32 %v1554, %v1795
          %v1800 = vsel %vm917, %v1712, 0
          %1802 = vmatprep.subr.mxu0 0.0
          %1803 = vmatpush1.msra.mxu0 %v1000
          %1804 = vmatprep.subr.mxu0 0.0
          %1805 = vmatpush1.msra.mxu0 0.0
          %1806 = vmatprep.subr.mxu0 0.0
          %1807 = vmatpush1.msra.mxu0 0.0
          %1808 = vmatprep.subr.mxu0 0.0
          %1809 = vmatpush1.msra.mxu0 0.0
          %1810 = vmatprep.subr.mxu0 0.0
          %1811 = vmatpush1.msra.mxu0 0.0
          %1812 = vmatprep.subr.mxu0 0.0
          %1813 = vmatpush1.msra.mxu0 0.0
          %1814 = vmatprep.subr.mxu0 0.0
          %1815 = vmatpush1.msra.mxu0 0.0
          %1816 = vmatprep.subr.mxu0 0.0
          %1817 = vmatpush1.msra.mxu0 0.0
          %1818 = vmatprep.subr.mxu0 0.0
          %1819 = vmatpush1.msra.mxu0 0.0
          %1820 = vmatprep.subr.mxu0 0.0
          %1821 = vmatpush1.msra.mxu0 0.0
          %1822 = vmatprep.subr.mxu0 0.0
          %1823 = vmatpush1.msra.mxu0 0.0
          %1824 = vmatprep.subr.mxu0 0.0
          %1825 = vmatpush1.msra.mxu0 0.0
          %1826 = vmatprep.subr.mxu0 0.0
          %1827 = vmatpush1.msra.mxu0 0.0
          %1828 = vmatprep.subr.mxu0 0.0
          %1829 = vmatpush1.msra.mxu0 0.0
          %1830 = vmatprep.subr.mxu0 0.0
          %1831 = vmatpush1.msra.mxu0 0.0
          %1832 = vmatprep.subr.mxu0 0.0
          %1833 = vmatpush1.msra.mxu0 0.0
          %1834 = vmatprep.subr.mxu0 0.0
          %1835 = vmatpush1.msra.mxu0 0.0
          %1836 = vmatprep.subr.mxu0 0.0
          %1837 = vmatpush1.msra.mxu0 0.0
          %1838 = vmatprep.subr.mxu0 0.0
          %1839 = vmatpush1.msra.mxu0 0.0
          %1840 = vmatprep.subr.mxu0 0.0
          %1841 = vmatpush1.msra.mxu0 0.0
          %1842 = vmatprep.subr.mxu0 0.0
          %1843 = vmatpush1.msra.mxu0 0.0
          %1844 = vmatprep.subr.mxu0 0.0
          %1845 = vmatpush1.msra.mxu0 0.0
          %1846 = vmatprep.subr.mxu0 0.0
          %1847 = vmatpush1.msra.mxu0 0.0
          %1848 = vmatprep.subr.mxu0 0.0
          %1849 = vmatpush1.msra.mxu0 0.0
          %1850 = vmatprep.subr.mxu0 0.0
          %1851 = vmatpush1.msra.mxu0 0.0
          %1852 = vmatprep.subr.mxu0 0.0
          %1853 = vmatpush1.msra.mxu0 0.0
          %1854 = vmatprep.subr.mxu0 0.0
          %1855 = vmatpush1.msra.mxu0 0.0
          %1856 = vmatprep.subr.mxu0 0.0
          %1857 = vmatpush1.msra.mxu0 0.0
          %1858 = vmatprep.subr.mxu0 0.0
          %1859 = vmatpush1.msra.mxu0 0.0
          %1860 = vmatprep.subr.mxu0 0.0
          %1861 = vmatpush1.msra.mxu0 0.0
          %1862 = vmatprep.subr.mxu0 0.0
          %1863 = vmatpush1.msra.mxu0 0.0
          %1864 = vmatprep.subr.mxu0 0.0
          %1865 = vmatpush1.msra.mxu0 0.0
          %1866 = vmatprep.mubr.f32.mxu0 0.0
          %1867 = vmatmul.mubr.f32.gmra.mrb[0].mxu0 %v1800
          %v1868 = vpop.f32.mrb[0].mxu0
          %v1869 = vadd.f32 %v1798, %v1868
          %v1870 = vpop.f32.mrb[0].mxu0
          %1871 = vdwg.mxu0
          %vm1872 = vcmask 257024
          %v1873 = vsel %vm1872, %v661, 0.0
          %v1874 = vrot.slane %v1873, 4
          %v1875 = vadd.f32 %v1873, %v1874
          %v1876 = vrot.slane %v1875, 2
          %v1877 = vadd.f32 %v1875, %v1876
          %v1878 = vrot.slane %v1877, 1
          %v1879 = vadd.f32 %v1877, %v1878
          %v1880 = vmul.f32 %v1879, 2.0
          %v1881 = vsub.f32 1.0, %v1880
          %s1882 = smul.f32 %s652, 2.0
          %v1883 = vstv %s1882
          %v1884 = vmul.f32 %v1881, %v1883
          %v1885 = vmul.f32 %v1869, %v1884
          %vm1886 = vcmask 64512
          %1887 = vst.msk [vmem:[#allocation2] sm:$0xff] %vm1886, %v1885
          %1888 = vst.msk [vmem:[#allocation3] sm:$0xff] %vm1886, %v1069
          %1889 = vst.msk [vmem:[#allocation4] sm:$0xff] %vm1886, %v1469
          %1891 = vrot.lane.b32.xlu0 %v1885, 120
          %v1892 = vpop.permute.xlu0 %1891
          %s1894 = scalar_lea.vmem [#allocation2], 8
          %1895 = vst.msk [vmem:[%s1894] sm:$0xff] %vm1886, %v1892
          %1897 = vrot.lane.b32.xlu0 %v1069, 120
          %v1898 = vpop.permute.xlu0 %1897
          %s1900 = scalar_lea.vmem [#allocation3], 8
          %1901 = vst.msk [vmem:[%s1900] sm:$0xff] %vm1886, %v1898
          %1903 = vrot.lane.b32.xlu0 %v1469, 120
          %v1904 = vpop.permute.xlu0 %1903
          %s1906 = scalar_lea.vmem [#allocation4], 8
          %1907 = vst.msk [vmem:[%s1906] sm:$0xff] %vm1886, %v1904
          %1908 = vrot.lane.b32.xlu0 %v1885, 112
          %v1909 = vpop.permute.xlu0 %1908
          %s1911 = scalar_lea.vmem [#allocation2], 16
          %1912 = vst.msk [vmem:[%s1911] sm:$0xff] %vm1886, %v1909
          %1913 = vrot.lane.b32.xlu0 %v1069, 112
          %v1914 = vpop.permute.xlu0 %1913
          %s1916 = scalar_lea.vmem [#allocation3], 16
          %1917 = vst.msk [vmem:[%s1916] sm:$0xff] %vm1886, %v1914
          %1918 = vrot.lane.b32.xlu0 %v1469, 112
          %v1919 = vpop.permute.xlu0 %1918
          %s1921 = scalar_lea.vmem [#allocation4], 16
          %1922 = vst.msk [vmem:[%s1921] sm:$0xff] %vm1886, %v1919
          %1923 = vrot.lane.b32.xlu0 %v1885, 104
          %v1924 = vpop.permute.xlu0 %1923
          %s1926 = scalar_lea.vmem [#allocation2], 24
          %1927 = vst.msk [vmem:[%s1926] sm:$0xff] %vm1886, %v1924
          %1928 = vrot.lane.b32.xlu0 %v1069, 104
          %v1929 = vpop.permute.xlu0 %1928
          %s1931 = scalar_lea.vmem [#allocation3], 24
          %1932 = vst.msk [vmem:[%s1931] sm:$0xff] %vm1886, %v1929
          %1933 = vrot.lane.b32.xlu0 %v1469, 104
          %v1934 = vpop.permute.xlu0 %1933
          %s1936 = scalar_lea.vmem [#allocation4], 24
          %1937 = vst.msk [vmem:[%s1936] sm:$0xff] %vm1886, %v1934
        $region104: #{tpu_custom_call.1} parent=75 // pred_fallthru
          _
        %s1938 = smul.u32 %s46, 8
        %s1939 = scalar_lea.vmem [#allocation2], %s1938
        %v1940 = vld [vmem:[%s1939] sm:$0xff]
        %s1941 = scalar_lea.vmem [#allocation3], %s1938
        %v1942 = vld [vmem:[%s1941] sm:$0xff]
        %s1943 = scalar_lea.vmem [#allocation4], %s1938
        %v1944 = vld [vmem:[%s1943] sm:$0xff]
        %vm1945 = vcmask 64512
        %v1947 = vsel %vm1945, %v1940, 0
        %v1950 = vsel %vm1945, %v1942, 0
        %1952 = vmatprep.subr.mxu0 0.0
        %1953 = vmatpush1.xpose.msra.mxu0 %v1950
        %1954 = vmatprep.subr.mxu0 0.0
        %1955 = vmatpush1.xpose.msra.mxu0 0.0
        %1956 = vmatprep.subr.mxu0 0.0
        %1957 = vmatpush1.xpose.msra.mxu0 0.0
        %1958 = vmatprep.subr.mxu0 0.0
        %1959 = vmatpush1.xpose.msra.mxu0 0.0
        %1960 = vmatprep.subr.mxu0 0.0
        %1961 = vmatpush1.xpose.msra.mxu0 0.0
        %1962 = vmatprep.subr.mxu0 0.0
        %1963 = vmatpush1.xpose.msra.mxu0 0.0
        %1964 = vmatprep.subr.mxu0 0.0
        %1965 = vmatpush1.xpose.msra.mxu0 0.0
        %1966 = vmatprep.subr.mxu0 0.0
        %1967 = vmatpush1.xpose.msra.mxu0 0.0
        %1968 = vmatprep.subr.mxu0 0.0
        %1969 = vmatpush1.xpose.msra.mxu0 0.0
        %1970 = vmatprep.subr.mxu0 0.0
        %1971 = vmatpush1.xpose.msra.mxu0 0.0
        %1972 = vmatprep.subr.mxu0 0.0
        %1973 = vmatpush1.xpose.msra.mxu0 0.0
        %1974 = vmatprep.subr.mxu0 0.0
        %1975 = vmatpush1.xpose.msra.mxu0 0.0
        %1976 = vmatprep.subr.mxu0 0.0
        %1977 = vmatpush1.xpose.msra.mxu0 0.0
        %1978 = vmatprep.subr.mxu0 0.0
        %1979 = vmatpush1.xpose.msra.mxu0 0.0
        %1980 = vmatprep.subr.mxu0 0.0
        %1981 = vmatpush1.xpose.msra.mxu0 0.0
        %1982 = vmatprep.subr.mxu0 0.0
        %1983 = vmatpush1.xpose.msra.mxu0 0.0
        %1984 = vmatprep.subr.mxu0 0.0
        %1985 = vmatpush1.xpose.msra.mxu0 0.0
        %1986 = vmatprep.subr.mxu0 0.0
        %1987 = vmatpush1.xpose.msra.mxu0 0.0
        %1988 = vmatprep.subr.mxu0 0.0
        %1989 = vmatpush1.xpose.msra.mxu0 0.0
        %1990 = vmatprep.subr.mxu0 0.0
        %1991 = vmatpush1.xpose.msra.mxu0 0.0
        %1992 = vmatprep.subr.mxu0 0.0
        %1993 = vmatpush1.xpose.msra.mxu0 0.0
        %1994 = vmatprep.subr.mxu0 0.0
        %1995 = vmatpush1.xpose.msra.mxu0 0.0
        %1996 = vmatprep.subr.mxu0 0.0
        %1997 = vmatpush1.xpose.msra.mxu0 0.0
        %1998 = vmatprep.subr.mxu0 0.0
        %1999 = vmatpush1.xpose.msra.mxu0 0.0
        %2000 = vmatprep.subr.mxu0 0.0
        %2001 = vmatpush1.xpose.msra.mxu0 0.0
        %2002 = vmatprep.subr.mxu0 0.0
        %2003 = vmatpush1.xpose.msra.mxu0 0.0
        %2004 = vmatprep.subr.mxu0 0.0
        %2005 = vmatpush1.xpose.msra.mxu0 0.0
        %2006 = vmatprep.subr.mxu0 0.0
        %2007 = vmatpush1.xpose.msra.mxu0 0.0
        %2008 = vmatprep.subr.mxu0 0.0
        %2009 = vmatpush1.xpose.msra.mxu0 0.0
        %2010 = vmatprep.subr.mxu0 0.0
        %2011 = vmatpush1.xpose.msra.mxu0 0.0
        %2012 = vmatprep.subr.mxu0 0.0
        %2013 = vmatpush1.xpose.msra.mxu0 0.0
        %2014 = vmatprep.subr.mxu0 0.0
        %2015 = vmatpush1.xpose.msra.mxu0 0.0
        %2016 = vmatprep.mubr.f32.mxu0 0.0
        %2017 = vmatmul.mubr.f32.gmra.mrb[0].mxu0 %v1947
        %v2018 = vpop.f32.mrb[0].mxu0
        %v2019 = vadd.f32 0.0, %v2018
        %v2020 = vpop.f32.mrb[0].mxu0
        %2021 = vdwg.mxu0
        %v2022 = vsel %vm1945, %v2019, -inf
        %2023 = vmax.xlane.f32.xlu0 %v2022
        %v2024 = vpop.xlane.xlu0 %2023
        %v2025 = vsub.f32 %v2019, %v2024
        %v2026 = vmul.f32 %v2025, 1.442695
        %v2027 = vpow.pop %v2026
        %v2028 = vsel %vm1945, %v2027, 0.0
        %2029 = vadd.xlane.f32.xlu0 %v2028
        %v2030 = vpop.xlane.xlu0 %2029
        %v2031 = vrcp.pop %v2030
        %v2032 = vmul.f32 %v2027, %v2031
        %2033 = vst.msk [vmem:[%s644] sm:$0xff] %vm1945, %v2032
        %v2035 = vsel %vm1945, %v2032, 0
        %2037 = vmatprep.subr.mxu0 0.0
        %2038 = vmatpush1.msra.mxu0 %v1944
        %2039 = vmatprep.subr.mxu0 0.0
        %2040 = vmatpush1.msra.mxu0 0.0
        %2041 = vmatprep.subr.mxu0 0.0
        %2042 = vmatpush1.msra.mxu0 0.0
        %2043 = vmatprep.subr.mxu0 0.0
        %2044 = vmatpush1.msra.mxu0 0.0
        %2045 = vmatprep.subr.mxu0 0.0
        %2046 = vmatpush1.msra.mxu0 0.0
        %2047 = vmatprep.subr.mxu0 0.0
        %2048 = vmatpush1.msra.mxu0 0.0
        %2049 = vmatprep.subr.mxu0 0.0
        %2050 = vmatpush1.msra.mxu0 0.0
        %2051 = vmatprep.subr.mxu0 0.0
        %2052 = vmatpush1.msra.mxu0 0.0
        %2053 = vmatprep.subr.mxu0 0.0
        %2054 = vmatpush1.msra.mxu0 0.0
        %2055 = vmatprep.subr.mxu0 0.0
        %2056 = vmatpush1.msra.mxu0 0.0
        %2057 = vmatprep.subr.mxu0 0.0
        %2058 = vmatpush1.msra.mxu0 0.0
        %2059 = vmatprep.subr.mxu0 0.0
        %2060 = vmatpush1.msra.mxu0 0.0
        %2061 = vmatprep.subr.mxu0 0.0
        %2062 = vmatpush1.msra.mxu0 0.0
        %2063 = vmatprep.subr.mxu0 0.0
        %2064 = vmatpush1.msra.mxu0 0.0
        %2065 = vmatprep.subr.mxu0 0.0
        %2066 = vmatpush1.msra.mxu0 0.0
        %2067 = vmatprep.subr.mxu0 0.0
        %2068 = vmatpush1.msra.mxu0 0.0
        %2069 = vmatprep.subr.mxu0 0.0
        %2070 = vmatpush1.msra.mxu0 0.0
        %2071 = vmatprep.subr.mxu0 0.0
        %2072 = vmatpush1.msra.mxu0 0.0
        %2073 = vmatprep.subr.mxu0 0.0
        %2074 = vmatpush1.msra.mxu0 0.0
        %2075 = vmatprep.subr.mxu0 0.0
        %2076 = vmatpush1.msra.mxu0 0.0
        %2077 = vmatprep.subr.mxu0 0.0
        %2078 = vmatpush1.msra.mxu0 0.0
        %2079 = vmatprep.subr.mxu0 0.0
        %2080 = vmatpush1.msra.mxu0 0.0
        %2081 = vmatprep.subr.mxu0 0.0
        %2082 = vmatpush1.msra.mxu0 0.0
        %2083 = vmatprep.subr.mxu0 0.0
        %2084 = vmatpush1.msra.mxu0 0.0
        %2085 = vmatprep.subr.mxu0 0.0
        %2086 = vmatpush1.msra.mxu0 0.0
        %2087 = vmatprep.subr.mxu0 0.0
        %2088 = vmatpush1.msra.mxu0 0.0
        %2089 = vmatprep.subr.mxu0 0.0
        %2090 = vmatpush1.msra.mxu0 0.0
        %2091 = vmatprep.subr.mxu0 0.0
        %2092 = vmatpush1.msra.mxu0 0.0
        %2093 = vmatprep.subr.mxu0 0.0
        %2094 = vmatpush1.msra.mxu0 0.0
        %2095 = vmatprep.subr.mxu0 0.0
        %2096 = vmatpush1.msra.mxu0 0.0
        %2097 = vmatprep.subr.mxu0 0.0
        %2098 = vmatpush1.msra.mxu0 0.0
        %2099 = vmatprep.subr.mxu0 0.0
        %2100 = vmatpush1.msra.mxu0 0.0
        %2101 = vmatprep.mubr.f32.mxu0 0.0
        %2102 = vmatmul.mubr.f32.gmra.mrb[0].mxu0 %v2035
        %v2103 = vpop.f32.mrb[0].mxu0
        %v2104 = vadd.f32 0.0, %v2103
        %v2105 = vpop.f32.mrb[0].mxu0
        %2106 = vdwg.mxu0
        %v2107 = vlaneseq
        %v2108 = vand.u32 %v2107, 127
        %vm2109 = vcmp.eq.s32.totalorder %v2108, 0
        %v2110 = vsel %vm2109, -1.0, 1.0
        %v2111 = vmul.f32 %v2110, %v2104
        %v2112 = vmul.f32 %v2111, %v2104
        %v2113 = vsel %vm1945, %v2112, 0.0
        %2114 = vadd.xlane.f32.xlu0 %v2113
        %v2115 = vpop.xlane.xlu0 %2114
        %v2116 = vand.u32 2147483647, %v2115
        %v2117 = vmax.f32 %v2116, 1e-08
        %v2118 = vrsqrt.pop %v2117
        %v2119 = vmul.f32 %v2104, %v2118
        // Predicated region
        $region105: #{tpu_custom_call.1} parent=75 // pred_check
          %p2120 = pneg %p645
        $region106: #{tpu_custom_call.1} parent=75 // pred_check_branch
          %2122 = sbr.rel (%p2120) target = $region108
        $region107: #{tpu_custom_call.1} parent=75 // pred_region
          %2123 = vst.msk [vmem:[%s637] sm:$0xff] %vm1945, %v2119
        $region108: #{tpu_custom_call.1} parent=75 // pred_fallthru
          _
        %p2124 = scmp.eq.s32.totalorder %s46, 1
        // Predicated region
        $region109: #{tpu_custom_call.1} parent=75 // pred_check
          %p2125 = pneg %p2124
        $region110: #{tpu_custom_call.1} parent=75 // pred_check_branch
          %2127 = sbr.rel (%p2125) target = $region112
        $region111: #{tpu_custom_call.1} parent=75 // pred_region
          %2129 = vrot.lane.b32.xlu0 %v2119, 8
          %v2130 = vpop.permute.xlu0 %2129
          %vm2132 = vcmask 130112
          %2133 = vst.msk [vmem:[%s637] sm:$0xff] %vm2132, %v2130
        $region112: #{tpu_custom_call.1} parent=75 // pred_fallthru
          _
        %p2134 = scmp.eq.s32.totalorder %s46, 2
        // Predicated region
        $region113: #{tpu_custom_call.1} parent=75 // pred_check
          %p2135 = pneg %p2134
        $region114: #{tpu_custom_call.1} parent=75 // pred_check_branch
          %2137 = sbr.rel (%p2135) target = $region116
        $region115: #{tpu_custom_call.1} parent=75 // pred_region
          %2139 = vrot.lane.b32.xlu0 %v2119, 16
          %v2140 = vpop.permute.xlu0 %2139
          %vm2142 = vcmask 195712
          %2143 = vst.msk [vmem:[%s637] sm:$0xff] %vm2142, %v2140
        $region116: #{tpu_custom_call.1} parent=75 // pred_fallthru
          _
        %p2144 = scmp.eq.s32.totalorder %s46, 3
        // Predicated region
        $region117: #{tpu_custom_call.1} parent=75 // pred_check
          %p2145 = pneg %p2144
        $region118: #{tpu_custom_call.1} parent=75 // pred_check_branch
          %2147 = sbr.rel (%p2145) target = $region120
        $region119: #{tpu_custom_call.1} parent=75 // pred_region
          %2149 = vrot.lane.b32.xlu0 %v2119, 24
          %v2150 = vpop.permute.xlu0 %2149
          %vm2152 = vcmask 261312
          %2153 = vst.msk [vmem:[%s637] sm:$0xff] %vm2152, %v2150
        $region120: #{tpu_custom_call.1} parent=75 // pred_fallthru
          _
        %s2154 = sand.u32 %s370, 1
        %s2155 = scalar_lea.sflag [#allocation7], %s2154
        %s2156 = sand.u32 %s370, 1
        %s2157 = smul.addr %s2156, 8
        %s2158 = scalar_lea.vmem [#allocation16], %s2157
        %s2159 = sand.u32 %s398, 1
        %s2160 = scalar_lea.sflag [#allocation18], %s2159
        %s2161 = sand.u32 %s398, 1
        %s2162 = smul.addr %s2161, 8
        %s2163 = scalar_lea.vmem [#allocation17], %s2162
        // Predicated region
        $region121: #{tpu_custom_call.1} parent=75 // pred_check
          %p2164 = pneg %p380
        $region122: #{tpu_custom_call.1} parent=75 // pred_check_branch
          %2166 = sbr.rel (%p2164) target = $region124
        $region123: #{tpu_custom_call.1} parent=75 // pred_region
          %s2168 = ssub.s32 128, 128
          %2169 = vsyncadd %s2155, %s2168
          %s2170 = smul.addr %s45, 128
          %s2171 = scalar_lea.hbm %s14, %s2170
          %s2173 = sshll.u32 %s2158, 4
          %s2174 = int_to_ptr.vmem [resolvable:$true] %s2173
          %2176 = dma.vmem_to_hbm [thread:$0]  %s2174, 128, %s2171, %s2155
        $region124: #{tpu_custom_call.1} parent=75 // pred_fallthru
          _
        // Predicated region
        $region125: #{tpu_custom_call.1} parent=75 // pred_check
          %p2177 = pneg %p408
        $region126: #{tpu_custom_call.1} parent=75 // pred_check_branch
          %2179 = sbr.rel (%p2177) target = $region128
        $region127: #{tpu_custom_call.1} parent=75 // pred_region
          %s2181 = ssub.s32 128, 128
          %2182 = vsyncadd %s2160, %s2181
          %s2183 = smul.addr %s45, 4
          %s2184 = sadd.s32 %s46, %s2183
          %s2185 = smul.addr %s2184, 128
          %s2186 = scalar_lea.hbm %s15, %s2185
          %s2188 = sshll.u32 %s2163, 4
          %s2189 = int_to_ptr.vmem [resolvable:$true] %s2188
          %2191 = dma.vmem_to_hbm [thread:$0]  %s2189, 128, %s2186, %s2160
        $region128: #{tpu_custom_call.1} parent=75 // pred_fallthru
          _
      $region76: #{tpu_custom_call.1} parent=5 // pred_fallthru
        _
      %p2192 = scmp.le.s32.totalorder 2, %s36
      // Predicated region
      $region129: #{tpu_custom_call.1} parent=5 // pred_check
        %p2193 = pneg %p2192
      $region130: #{tpu_custom_call.1} parent=5 // pred_check_branch
        %2195 = sbr.rel (%p2193) target = $region132
      $region131: #{tpu_custom_call.1} parent=5 // pred_region
        %s2196 = ssub.s32 %s36, 2
        // Predicated region
        $region133: #{tpu_custom_call.1} parent=131 // pred_check
          %p2197 = pneg %p386
        $region134: #{tpu_custom_call.1} parent=131 // pred_check_branch
          %2199 = sbr.rel (%p2197) target = $region136
        $region135: #{tpu_custom_call.1} parent=131 // pred_region
          %s2200 = sand.u32 %s371, 1
          %s2201 = scalar_lea.sflag [#allocation7], %s2200
          %s2202 = sand.u32 %s371, 1
          %s2203 = smul.addr %s2202, 8
          %s2204 = scalar_lea.vmem [#allocation16], %s2203
          %2205 = dma.done %s2201, 128
        $region136: #{tpu_custom_call.1} parent=131 // pred_fallthru
          _
        // Predicated region
        $region137: #{tpu_custom_call.1} parent=131 // pred_check
          %p2206 = pneg %p414
        $region138: #{tpu_custom_call.1} parent=131 // pred_check_branch
          %2208 = sbr.rel (%p2206) target = $region140
        $region139: #{tpu_custom_call.1} parent=131 // pred_region
          %s2209 = sand.u32 %s399, 1
          %s2210 = scalar_lea.sflag [#allocation18], %s2209
          %s2211 = sand.u32 %s399, 1
          %s2212 = smul.addr %s2211, 8
          %s2213 = scalar_lea.vmem [#allocation17], %s2212
          %2214 = dma.done %s2210, 128
        $region140: #{tpu_custom_call.1} parent=131 // pred_fallthru
          _
      $region132: #{tpu_custom_call.1} parent=5 // pred_fallthru
        _
    $region6: #{tpu_custom_call.1} parent=1 // loop_footer
      %s40 = sadd.s32 1, %s36
    $region7: #{tpu_custom_call.1} parent=1 // loop_footer_branch
      %35 = sbr.rel target = $region3
    $region8: #{tpu_custom_call.1} parent=1 // loop_exit
      _
    %2215 = vsyncpa [#allocation6], 1
    %s2216 = scalar_lea.sflag [#allocation6], 1
    %2217 = vsyncpa %s2216, 1
    %2218 = vsyncpa [#allocation10], 1
    %s2219 = scalar_lea.sflag [#allocation10], 1
    %2220 = vsyncpa %s2219, 1
    %2221 = vsyncpa [#allocation13], 1
    %2222 = vsyncpa [#allocation7], 1
    %s2223 = scalar_lea.sflag [#allocation7], 1
    %2224 = vsyncpa %s2223, 1
    %2225 = vsyncpa [#allocation18], 1
    %s2226 = scalar_lea.sflag [#allocation18], 1
    %2227 = vsyncpa %s2226, 1
    %2228 = vsyncpa [#allocation8], 1
    %s2229 = scalar_lea.sflag [#allocation8], 1
    %2230 = vsyncpa %s2229, 1

// kernel: tpu_custom_call.1
$region0: #{tpu_custom_call.1}
  #allocation0 [shape = 'u32[]', space=smem, size = 0x4, offset = 0x4, fixed_abs, tag = 'smem constant byte address 0x4 - core index']
  #allocation1 [shape = 'u32[144,128]{1,0:T(1,128)}', space=vmem, size = 0x12000, scoped, tag = 'internal scratch']
  #allocation2 [shape = 'f32[4,8,8]{2,1,0:T(8,128)}', space=vmem, size = 0x4000, scoped, tag = 'scratch operand']
  #allocation3 [shape = 'f32[4,8,8]{2,1,0:T(8,128)}', space=vmem, size = 0x4000, scoped, tag = 'scratch operand']
  #allocation4 [shape = 'f32[4,8,8]{2,1,0:T(8,128)}', space=vmem, size = 0x4000, scoped, tag = 'scratch operand']
  %s0 = inlined_call_operand.hbm [shape: f32[2,8,32], index: 0, kind: input, shape index: {}]
  %s1 = inlined_call_operand.hbm [shape: f32[2,8,32], index: 1, kind: input, shape index: {}]
  %s2 = inlined_call_operand.hbm [shape: f32[2,8,32], index: 2, kind: input, shape index: {}]
  %s3 = inlined_call_operand.vmem [shape: f32[32,32], index: 3, kind: input, shape index: {}]
  %s4 = inlined_call_operand.vmem [shape: f32[1,32], index: 4, kind: input, shape index: {}]
  %s5 = inlined_call_operand.vmem [shape: f32[32,32], index: 5, kind: input, shape index: {}]
  %s6 = inlined_call_operand.hbm [shape: f32[1,32], index: 6, kind: input, shape index: {}]
  %s7 = inlined_call_operand.vmem [shape: f32[32,32], index: 7, kind: input, shape index: {}]
  %s8 = inlined_call_operand.hbm [shape: f32[1,32], index: 8, kind: input, shape index: {}]
  %s9 = inlined_call_operand.vmem [shape: f32[32,4], index: 9, kind: input, shape index: {}]
  %s10 = inlined_call_operand.vmem [shape: f32[32,4], index: 10, kind: input, shape index: {}]
  %s11 = inlined_call_operand.vmem [shape: f32[4,32], index: 11, kind: input, shape index: {}]
  %s12 = inlined_call_operand.vmem [shape: f32[4,32], index: 12, kind: input, shape index: {}]
  %s13 = inlined_call_operand.vmem [shape: f32[4], index: 13, kind: input, shape index: {}]
  %s14 = inlined_call_operand.hbm [shape: f32[2,8,32], index: 14, kind: output, shape index: {0}]
  %s15 = inlined_call_operand.hbm [shape: f32[2,4,8,8], index: 15, kind: output, shape index: {1}]
  %16 = xla_tuple %s14, %s15
  %s17 = sld [smem:[#allocation0]]
  $region141: #{tpu_custom_call.1} parent=0
    _
  %s19 = ssub.s32 1, %s17
  %s20 = scalar_select 0, %s19, %s17
  $region1: #{tpu_custom_call.1} parent=0
    #allocation5 [shape = 'u8[8192]{0}', space=vmem, size = 0x2000, scoped, tag = 'input window, operand 0']
    #allocation6 [shape = 's32[2]{0}', space=sflag, size = 0x8, scoped, tag = 'scoped memory for tpu_custom_call.1']
    #allocation7 [shape = 's32[2]{0}', space=sflag, size = 0x8, scoped, tag = 'scoped memory for tpu_custom_call.1']
    #allocation8 [shape = 's32[2]{0}', space=sflag, size = 0x8, scoped, tag = 'scoped memory for tpu_custom_call.1']
    #allocation9 [shape = 'u8[8192]{0}', space=vmem, size = 0x2000, scoped, tag = 'input window, operand 1']
    #allocation10 [shape = 's32[2]{0}', space=sflag, size = 0x8, scoped, tag = 'scoped memory for tpu_custom_call.1']
    #allocation11 [shape = 'u8[8192]{0}', space=vmem, size = 0x2000, scoped, tag = 'input window, operand 2']
    #allocation12 [shape = 'u8[512]{0}', space=vmem, size = 0x400, scoped, tag = 'input window, operand 6, single buffered']
    #allocation13 [shape = 's32[1]{0}', space=sflag, size = 0x4, scoped, tag = 'scoped memory for tpu_custom_call.1']
    #allocation14 [shape = 'u8[512]{0}', space=vmem, size = 0x400, scoped, tag = 'input window, operand 8, single buffered']
    #allocation15 [shape = 'u8[512]{0}', space=smem, size = 0x200, scoped, tag = 'input window, operand 13, single buffered']
    #allocation16 [shape = 'u8[8192]{0}', space=vmem, size = 0x2000, scoped, tag = 'output window, operand 0']
    #allocation17 [shape = 'u8[8192]{0}', space=vmem, size = 0x2000, scoped, tag = 'output window, operand 1']
    #allocation18 [shape = 's32[2]{0}', space=sflag, size = 0x8, scoped, tag = 'scoped memory for tpu_custom_call.1']
    %21 = vsyncpa [#allocation6], 0
    %s22 = scalar_lea.sflag [#allocation6], 1
    %23 = vsyncpa %s22, 0
    %24 = vsyncpa [#allocation10], 0
    %s25 = scalar_lea.sflag [#allocation10], 1
    %26 = vsyncpa %s25, 0
    %27 = vsyncpa [#allocation13], 0
    %28 = vsyncpa [#allocation8], 0
    %29 = vsyncpa [#allocation7], 0
    %s30 = scalar_lea.sflag [#allocation7], 1
    %31 = vsyncpa %s30, 0
    %32 = vsyncpa [#allocation18], 0
    %s33 = scalar_lea.sflag [#allocation18], 1
    %34 = vsyncpa %s33, 0
    loop: start=0, step=1, limit=10
    $region2: #{tpu_custom_call.1} parent=1 // loop_pre_header
      _
    $region3: #{tpu_custom_call.1} parent=1 // loop_header
      %s36 = sphi 0, %s40
      %p37 = scmp.ge.s32.totalorder %s36, 10
      %s43 = sphi 0, %s55
      %s44 = sphi 0, %s51
      %s45 = sphi 0, %s43
      %s46 = sphi 0, %s44
      %s47 = sphi 0, %s45
      %s48 = sphi 0, %s46
      %s58 = sphi 0, %s60
      %s61 = sphi 0, %s58
      %s62 = sphi 0, %s61
      %s78 = sphi 0, %s62
      %s84 = sphi 0, %s86
      %s87 = sphi 0, %s84
      %s88 = sphi 0, %s87
      %s104 = sphi 0, %s88
      %s110 = sphi 0, %s112
      %s113 = sphi 0, %s110
      %s114 = sphi 0, %s113
      %s130 = sphi 0, %s114
      %s134 = sphi 0, %s134
      %s136 = sphi 0, %s134
      %s137 = sphi 0, %s136
      %s151 = sphi 0, %s137
      %s155 = sphi 0, %s155
      %s157 = sphi 0, %s155
      %s158 = sphi 0, %s157
      %s172 = sphi 0, %s158
      %s176 = sphi 0, %s176
      %s178 = sphi 0, %s176
      %s179 = sphi 0, %s178
      %s193 = sphi 0, %s179
      %s197 = sphi 0, %s197
      %s199 = sphi 0, %s197
      %s200 = sphi 0, %s199
      %s214 = sphi 0, %s200
      %s218 = sphi 0, %s218
      %s220 = sphi 0, %s218
      %s221 = sphi 0, %s220
      %s235 = sphi 0, %s221
      %s239 = sphi 0, %s239
      %s241 = sphi 0, %s239
      %s242 = sphi 0, %s241
      %s256 = sphi 0, %s242
      %s260 = sphi 0, %s260
      %s262 = sphi 0, %s260
      %s263 = sphi 0, %s262
      %s277 = sphi 0, %s263
      %s281 = sphi 0, %s281
      %s283 = sphi 0, %s281
      %s284 = sphi 0, %s283
      %s298 = sphi 0, %s284
      %s302 = sphi 0, %s302
      %s304 = sphi 0, %s302
      %s305 = sphi 0, %s304
      %s319 = sphi 0, %s305
      %s323 = sphi 0, %s323
      %s325 = sphi 0, %s323
      %s326 = sphi 0, %s325
      %s340 = sphi 0, %s326
      %s344 = sphi 0, %s344
      %s346 = sphi 0, %s344
      %s347 = sphi 0, %s346
      %s361 = sphi 0, %s347
      %s367 = sphi 0, %s369
      %s370 = sphi 0, %s367
      %s371 = sphi 0, %s370
      %s387 = sphi 0, %s371
      %s395 = sphi 0, %s397
      %s398 = sphi 0, %s395
      %s399 = sphi 0, %s398
      %s415 = sphi 0, %s399
    $region4: #{tpu_custom_call.1} parent=1 // loop_header_branch
      %39 = sbr.rel (%p37) target = $region8
    $region5: #{tpu_custom_call.1} parent=1 // loop_body
      %s41 = ssub.s32 %s36, 1
      %s42 = ssub.s32 %s36, 2
      %s49 = sadd.s32 1, %s44
      %p50 = scmp.ge.s32.totalorder %s49, 4
      %s51 = scalar_select %p50, 0, %s49
      %s52 = sadd.s32 1, %s43
      %s53 = scalar_select %p50, %s52, %s43
      %p54 = scmp.ge.s32.totalorder %s53, 2
      %s55 = scalar_select %p54, 0, %s53
      %s56 = ssub.s32 %s43, %s55
      %p57 = scmp.eq.s32.totalorder %s56, 0
      %s59 = sadd.s32 %s58, 1
      %s60 = scalar_select %p57, %s58, %s59
      %p63 = pneg %p57
      %p64 = scmp.eq.s32.totalorder %s36, 7
      %p65 = por %p63, %p64
      %p66 = scmp.ne.s32.totalorder %s58, %s61
      %p67 = scmp.eq.s32.totalorder %s36, 0
      %p68 = por %p66, %p67
      %p69 = scmp.ne.s32.totalorder %s58, %s61
      %p70 = scmp.eq.s32.totalorder %s41, 7
      %p71 = por %p69, %p70
      %p72 = scmp.ne.s32.totalorder %s61, %s62
      %p73 = scmp.eq.s32.totalorder %s41, 0
      %p74 = por %p72, %p73
      %p75 = scmp.ne.s32.totalorder %s61, %s62
      %p76 = scmp.eq.s32.totalorder %s42, 7
      %p77 = por %p75, %p76
      %p79 = scmp.ne.s32.totalorder %s62, %s78
      %p80 = scmp.eq.s32.totalorder %s42, 0
      %p81 = por %p79, %p80
      %s82 = ssub.s32 %s43, %s55
      %p83 = scmp.eq.s32.totalorder %s82, 0
      %s85 = sadd.s32 %s84, 1
      %s86 = scalar_select %p83, %s84, %s85
      %p89 = pneg %p83
      %p90 = scmp.eq.s32.totalorder %s36, 7
      %p91 = por %p89, %p90
      %p92 = scmp.ne.s32.totalorder %s84, %s87
      %p93 = scmp.eq.s32.totalorder %s36, 0
      %p94 = por %p92, %p93
      %p95 = scmp.ne.s32.totalorder %s84, %s87
      %p96 = scmp.eq.s32.totalorder %s41, 7
      %p97 = por %p95, %p96
      %p98 = scmp.ne.s32.totalorder %s87, %s88
      %p99 = scmp.eq.s32.totalorder %s41, 0
      %p100 = por %p98, %p99
      %p101 = scmp.ne.s32.totalorder %s87, %s88
      %p102 = scmp.eq.s32.totalorder %s42, 7
      %p103 = por %p101, %p102
      %p105 = scmp.ne.s32.totalorder %s88, %s104
      %p106 = scmp.eq.s32.totalorder %s42, 0
      %p107 = por %p105, %p106
      %s108 = ssub.s32 %s43, %s55
      %p109 = scmp.eq.s32.totalorder %s108, 0
      %s111 = sadd.s32 %s110, 1
      %s112 = scalar_select %p109, %s110, %s111
      %p115 = pneg %p109
      %p116 = scmp.eq.s32.totalorder %s36, 7
      %p117 = por %p115, %p116
      %p118 = scmp.ne.s32.totalorder %s110, %s113
      %p119 = scmp.eq.s32.totalorder %s36, 0
      %p120 = por %p118, %p119
      %p121 = scmp.ne.s32.totalorder %s110, %s113
      %p122 = scmp.eq.s32.totalorder %s41, 7
      %p123 = por %p121, %p122
      %p124 = scmp.ne.s32.totalorder %s113, %s114
      %p125 = scmp.eq.s32.totalorder %s41, 0
      %p126 = por %p124, %p125
      %p127 = scmp.ne.s32.totalorder %s113, %s114
      %p128 = scmp.eq.s32.totalorder %s42, 7
      %p129 = por %p127, %p128
      %p131 = scmp.ne.s32.totalorder %s114, %s130
      %p132 = scmp.eq.s32.totalorder %s42, 0
      %p133 = por %p131, %p132
      %s135 = sadd.s32 %s134, 1
      %p138 = scmp.eq.s32.totalorder %s36, 7
      %p139 = scmp.ne.s32.totalorder %s134, %s136
      %p140 = scmp.eq.s32.totalorder %s36, 0
      %p141 = por %p139, %p140
      %p142 = scmp.ne.s32.totalorder %s134, %s136
      %p143 = scmp.eq.s32.totalorder %s41, 7
      %p144 = por %p142, %p143
      %p145 = scmp.ne.s32.totalorder %s136, %s137
      %p146 = scmp.eq.s32.totalorder %s41, 0
      %p147 = por %p145, %p146
      %p148 = scmp.ne.s32.totalorder %s136, %s137
      %p149 = scmp.eq.s32.totalorder %s42, 7
      %p150 = por %p148, %p149
      %p152 = scmp.ne.s32.totalorder %s137, %s151
      %p153 = scmp.eq.s32.totalorder %s42, 0
      %p154 = por %p152, %p153
      %s156 = sadd.s32 %s155, 1
      %p159 = scmp.eq.s32.totalorder %s36, 7
      %p160 = scmp.ne.s32.totalorder %s155, %s157
      %p161 = scmp.eq.s32.totalorder %s36, 0
      %p162 = por %p160, %p161
      %p163 = scmp.ne.s32.totalorder %s155, %s157
      %p164 = scmp.eq.s32.totalorder %s41, 7
      %p165 = por %p163, %p164
      %p166 = scmp.ne.s32.totalorder %s157, %s158
      %p167 = scmp.eq.s32.totalorder %s41, 0
      %p168 = por %p166, %p167
      %p169 = scmp.ne.s32.totalorder %s157, %s158
      %p170 = scmp.eq.s32.totalorder %s42, 7
      %p171 = por %p169, %p170
      %p173 = scmp.ne.s32.totalorder %s158, %s172
      %p174 = scmp.eq.s32.totalorder %s42, 0
      %p175 = por %p173, %p174
      %s177 = sadd.s32 %s176, 1
      %p180 = scmp.eq.s32.totalorder %s36, 7
      %p181 = scmp.ne.s32.totalorder %s176, %s178
      %p182 = scmp.eq.s32.totalorder %s36, 0
      %p183 = por %p181, %p182
      %p184 = scmp.ne.s32.totalorder %s176, %s178
      %p185 = scmp.eq.s32.totalorder %s41, 7
      %p186 = por %p184, %p185
      %p187 = scmp.ne.s32.totalorder %s178, %s179
      %p188 = scmp.eq.s32.totalorder %s41, 0
      %p189 = por %p187, %p188
      %p190 = scmp.ne.s32.totalorder %s178, %s179
      %p191 = scmp.eq.s32.totalorder %s42, 7
      %p192 = por %p190, %p191
      %p194 = scmp.ne.s32.totalorder %s179, %s193
      %p195 = scmp.eq.s32.totalorder %s42, 0
      %p196 = por %p194, %p195
      %s198 = sadd.s32 %s197, 1
      %p201 = scmp.eq.s32.totalorder %s36, 7
      %p202 = scmp.ne.s32.totalorder %s197, %s199
      %p203 = scmp.eq.s32.totalorder %s36, 0
      %p204 = por %p202, %p203
      %p205 = scmp.ne.s32.totalorder %s197, %s199
      %p206 = scmp.eq.s32.totalorder %s41, 7
      %p207 = por %p205, %p206
      %p208 = scmp.ne.s32.totalorder %s199, %s200
      %p209 = scmp.eq.s32.totalorder %s41, 0
      %p210 = por %p208, %p209
      %p211 = scmp.ne.s32.totalorder %s199, %s200
      %p212 = scmp.eq.s32.totalorder %s42, 7
      %p213 = por %p211, %p212
      %p215 = scmp.ne.s32.totalorder %s200, %s214
      %p216 = scmp.eq.s32.totalorder %s42, 0
      %p217 = por %p215, %p216
      %s219 = sadd.s32 %s218, 1
      %p222 = scmp.eq.s32.totalorder %s36, 7
      %p223 = scmp.ne.s32.totalorder %s218, %s220
      %p224 = scmp.eq.s32.totalorder %s36, 0
      %p225 = por %p223, %p224
      %p226 = scmp.ne.s32.totalorder %s218, %s220
      %p227 = scmp.eq.s32.totalorder %s41, 7
      %p228 = por %p226, %p227
      %p229 = scmp.ne.s32.totalorder %s220, %s221
      %p230 = scmp.eq.s32.totalorder %s41, 0
      %p231 = por %p229, %p230
      %p232 = scmp.ne.s32.totalorder %s220, %s221
      %p233 = scmp.eq.s32.totalorder %s42, 7
      %p234 = por %p232, %p233
      %p236 = scmp.ne.s32.totalorder %s221, %s235
      %p237 = scmp.eq.s32.totalorder %s42, 0
      %p238 = por %p236, %p237
      %s240 = sadd.s32 %s239, 1
      %p243 = scmp.eq.s32.totalorder %s36, 7
      %p244 = scmp.ne.s32.totalorder %s239, %s241
      %p245 = scmp.eq.s32.totalorder %s36, 0
      %p246 = por %p244, %p245
      %p247 = scmp.ne.s32.totalorder %s239, %s241
      %p248 = scmp.eq.s32.totalorder %s41, 7
      %p249 = por %p247, %p248
      %p250 = scmp.ne.s32.totalorder %s241, %s242
      %p251 = scmp.eq.s32.totalorder %s41, 0
      %p252 = por %p250, %p251
      %p253 = scmp.ne.s32.totalorder %s241, %s242
      %p254 = scmp.eq.s32.totalorder %s42, 7
      %p255 = por %p253, %p254
      %p257 = scmp.ne.s32.totalorder %s242, %s256
      %p258 = scmp.eq.s32.totalorder %s42, 0
      %p259 = por %p257, %p258
      %s261 = sadd.s32 %s260, 1
      %p264 = scmp.eq.s32.totalorder %s36, 7
      %p265 = scmp.ne.s32.totalorder %s260, %s262
      %p266 = scmp.eq.s32.totalorder %s36, 0
      %p267 = por %p265, %p266
      %p268 = scmp.ne.s32.totalorder %s260, %s262
      %p269 = scmp.eq.s32.totalorder %s41, 7
      %p270 = por %p268, %p269
      %p271 = scmp.ne.s32.totalorder %s262, %s263
      %p272 = scmp.eq.s32.totalorder %s41, 0
      %p273 = por %p271, %p272
      %p274 = scmp.ne.s32.totalorder %s262, %s263
      %p275 = scmp.eq.s32.totalorder %s42, 7
      %p276 = por %p274, %p275
      %p278 = scmp.ne.s32.totalorder %s263, %s277
      %p279 = scmp.eq.s32.totalorder %s42, 0
      %p280 = por %p278, %p279
      %s282 = sadd.s32 %s281, 1
      %p285 = scmp.eq.s32.totalorder %s36, 7
      %p286 = scmp.ne.s32.totalorder %s281, %s283
      %p287 = scmp.eq.s32.totalorder %s36, 0
      %p288 = por %p286, %p287
      %p289 = scmp.ne.s32.totalorder %s281, %s283
      %p290 = scmp.eq.s32.totalorder %s41, 7
      %p291 = por %p289, %p290
      %p292 = scmp.ne.s32.totalorder %s283, %s284
      %p293 = scmp.eq.s32.totalorder %s41, 0
      %p294 = por %p292, %p293
      %p295 = scmp.ne.s32.totalorder %s283, %s284
      %p296 = scmp.eq.s32.totalorder %s42, 7
      %p297 = por %p295, %p296
      %p299 = scmp.ne.s32.totalorder %s284, %s298
      %p300 = scmp.eq.s32.totalorder %s42, 0
      %p301 = por %p299, %p300
      %s303 = sadd.s32 %s302, 1
      %p306 = scmp.eq.s32.totalorder %s36, 7
      %p307 = scmp.ne.s32.totalorder %s302, %s304
      %p308 = scmp.eq.s32.totalorder %s36, 0
      %p309 = por %p307, %p308
      %p310 = scmp.ne.s32.totalorder %s302, %s304
      %p311 = scmp.eq.s32.totalorder %s41, 7
      %p312 = por %p310, %p311
      %p313 = scmp.ne.s32.totalorder %s304, %s305
      %p314 = scmp.eq.s32.totalorder %s41, 0
      %p315 = por %p313, %p314
      %p316 = scmp.ne.s32.totalorder %s304, %s305
      %p317 = scmp.eq.s32.totalorder %s42, 7
      %p318 = por %p316, %p317
      %p320 = scmp.ne.s32.totalorder %s305, %s319
      %p321 = scmp.eq.s32.totalorder %s42, 0
      %p322 = por %p320, %p321
      %s324 = sadd.s32 %s323, 1
      %p327 = scmp.eq.s32.totalorder %s36, 7
      %p328 = scmp.ne.s32.totalorder %s323, %s325
      %p329 = scmp.eq.s32.totalorder %s36, 0
      %p330 = por %p328, %p329
      %p331 = scmp.ne.s32.totalorder %s323, %s325
      %p332 = scmp.eq.s32.totalorder %s41, 7
      %p333 = por %p331, %p332
      %p334 = scmp.ne.s32.totalorder %s325, %s326
      %p335 = scmp.eq.s32.totalorder %s41, 0
      %p336 = por %p334, %p335
      %p337 = scmp.ne.s32.totalorder %s325, %s326
      %p338 = scmp.eq.s32.totalorder %s42, 7
      %p339 = por %p337, %p338
      %p341 = scmp.ne.s32.totalorder %s326, %s340
      %p342 = scmp.eq.s32.totalorder %s42, 0
      %p343 = por %p341, %p342
      %s345 = sadd.s32 %s344, 1
      %p348 = scmp.eq.s32.totalorder %s36, 7
      %p349 = scmp.ne.s32.totalorder %s344, %s346
      %p350 = scmp.eq.s32.totalorder %s36, 0
      %p351 = por %p349, %p350
      %p352 = scmp.ne.s32.totalorder %s344, %s346
      %p353 = scmp.eq.s32.totalorder %s41, 7
      %p354 = por %p352, %p353
      %p355 = scmp.ne.s32.totalorder %s346, %s347
      %p356 = scmp.eq.s32.totalorder %s41, 0
      %p357 = por %p355, %p356
      %p358 = scmp.ne.s32.totalorder %s346, %s347
      %p359 = scmp.eq.s32.totalorder %s42, 7
      %p360 = por %p358, %p359
      %p362 = scmp.ne.s32.totalorder %s347, %s361
      %p363 = scmp.eq.s32.totalorder %s42, 0
      %p364 = por %p362, %p363
      %s365 = ssub.s32 %s43, %s55
      %p366 = scmp.eq.s32.totalorder %s365, 0
      %s368 = sadd.s32 %s367, 1
      %s369 = scalar_select %p366, %s367, %s368
      %p372 = pneg %p366
      %p373 = scmp.eq.s32.totalorder %s36, 7
      %p374 = por %p372, %p373
      %p375 = scmp.ne.s32.totalorder %s367, %s370
      %p376 = scmp.eq.s32.totalorder %s36, 0
      %p377 = por %p375, %p376
      %p378 = scmp.ne.s32.totalorder %s367, %s370
      %p379 = scmp.eq.s32.totalorder %s41, 7
      %p380 = por %p378, %p379
      %p381 = scmp.ne.s32.totalorder %s370, %s371
      %p382 = scmp.eq.s32.totalorder %s41, 0
      %p383 = por %p381, %p382
      %p384 = scmp.ne.s32.totalorder %s370, %s371
      %p385 = scmp.eq.s32.totalorder %s42, 7
      %p386 = por %p384, %p385
      %p388 = scmp.ne.s32.totalorder %s371, %s387
      %p389 = scmp.eq.s32.totalorder %s42, 0
      %p390 = por %p388, %p389
      %s391 = ssub.s32 %s43, %s55
      %s392 = ssub.s32 %s44, %s51
      %s393 = sor.u32 %s391, %s392
      %p394 = scmp.eq.s32.totalorder %s393, 0
      %s396 = sadd.s32 %s395, 1
      %s397 = scalar_select %p394, %s395, %s396
      %p400 = pneg %p394
      %p401 = scmp.eq.s32.totalorder %s36, 7
      %p402 = por %p400, %p401
      %p403 = scmp.ne.s32.totalorder %s395, %s398
      %p404 = scmp.eq.s32.totalorder %s36, 0
      %p405 = por %p403, %p404
      %p406 = scmp.ne.s32.totalorder %s395, %s398
      %p407 = scmp.eq.s32.totalorder %s41, 7
      %p408 = por %p406, %p407
      %p409 = scmp.ne.s32.totalorder %s398, %s399
      %p410 = scmp.eq.s32.totalorder %s41, 0
      %p411 = por %p409, %p410
      %p412 = scmp.ne.s32.totalorder %s398, %s399
      %p413 = scmp.eq.s32.totalorder %s42, 7
      %p414 = por %p412, %p413
      %p416 = scmp.ne.s32.totalorder %s399, %s415
      %p417 = scmp.eq.s32.totalorder %s42, 0
      %p418 = por %p416, %p417
      %p419 = scmp.le.s32.totalorder 1, %s36
      %p420 = scmp.lt.s32.totalorder %s36, 9
      %p421 = pnand %p419, %p420
      %p422 = pneg %p421
      // Predicated region
      $region9: #{tpu_custom_call.1} parent=5 // pred_check
        _
      $region10: #{tpu_custom_call.1} parent=5 // pred_check_branch
        %424 = sbr.rel (%p421) target = $region12
      $region11: #{tpu_custom_call.1} parent=5 // pred_region
        %s425 = ssub.s32 %s36, 1
        // Predicated region
        $region13: #{tpu_custom_call.1} parent=11 // pred_check
          %p426 = pneg %p147
        $region14: #{tpu_custom_call.1} parent=11 // pred_check_branch
          %428 = sbr.rel (%p426) target = $region16
        $region15: #{tpu_custom_call.1} parent=11 // pred_region
          _
        $region16: #{tpu_custom_call.1} parent=11 // pred_fallthru
          _
        // Predicated region
        $region17: #{tpu_custom_call.1} parent=11 // pred_check
          %p429 = pneg %p168
        $region18: #{tpu_custom_call.1} parent=11 // pred_check_branch
          %431 = sbr.rel (%p429) target = $region20
        $region19: #{tpu_custom_call.1} parent=11 // pred_region
          _
        $region20: #{tpu_custom_call.1} parent=11 // pred_fallthru
          _
        // Predicated region
        $region21: #{tpu_custom_call.1} parent=11 // pred_check
          %p432 = pneg %p189
        $region22: #{tpu_custom_call.1} parent=11 // pred_check_branch
          %434 = sbr.rel (%p432) target = $region24
        $region23: #{tpu_custom_call.1} parent=11 // pred_region
          _
        $region24: #{tpu_custom_call.1} parent=11 // pred_fallthru
          _
        // Predicated region
        $region25: #{tpu_custom_call.1} parent=11 // pred_check
          %p435 = pneg %p210
        $region26: #{tpu_custom_call.1} parent=11 // pred_check_branch
          %437 = sbr.rel (%p435) target = $region28
        $region27: #{tpu_custom_call.1} parent=11 // pred_region
          %s439 = ssub.s32 16, 16
          %440 = vsyncadd [#allocation13], %s439
          %s442 = sshll.u32 [#allocation12], 4
          %s443 = int_to_ptr.vmem [resolvable:$true] %s442
          %445 = dma.hbm_to_vmem [thread:$0]  %s6, 16, %s443, [#allocation13]
        $region28: #{tpu_custom_call.1} parent=11 // pred_fallthru
          _
        // Predicated region
        $region29: #{tpu_custom_call.1} parent=11 // pred_check
          %p446 = pneg %p231
        $region30: #{tpu_custom_call.1} parent=11 // pred_check_branch
          %448 = sbr.rel (%p446) target = $region32
        $region31: #{tpu_custom_call.1} parent=11 // pred_region
          _
        $region32: #{tpu_custom_call.1} parent=11 // pred_fallthru
          _
        // Predicated region
        $region33: #{tpu_custom_call.1} parent=11 // pred_check
          %p449 = pneg %p252
        $region34: #{tpu_custom_call.1} parent=11 // pred_check_branch
          %451 = sbr.rel (%p449) target = $region36
        $region35: #{tpu_custom_call.1} parent=11 // pred_region
          %s453 = ssub.s32 16, 16
          %454 = vsyncadd [#allocation13], %s453
          %s456 = sshll.u32 [#allocation14], 4
          %s457 = int_to_ptr.vmem [resolvable:$true] %s456
          %459 = dma.hbm_to_vmem [thread:$0]  %s8, 16, %s457, [#allocation13]
        $region36: #{tpu_custom_call.1} parent=11 // pred_fallthru
          _
        // Predicated region
        $region37: #{tpu_custom_call.1} parent=11 // pred_check
          %p460 = pneg %p273
        $region38: #{tpu_custom_call.1} parent=11 // pred_check_branch
          %462 = sbr.rel (%p460) target = $region40
        $region39: #{tpu_custom_call.1} parent=11 // pred_region
          _
        $region40: #{tpu_custom_call.1} parent=11 // pred_fallthru
          _
        // Predicated region
        $region41: #{tpu_custom_call.1} parent=11 // pred_check
          %p463 = pneg %p294
        $region42: #{tpu_custom_call.1} parent=11 // pred_check_branch
          %465 = sbr.rel (%p463) target = $region44
        $region43: #{tpu_custom_call.1} parent=11 // pred_region
          _
        $region44: #{tpu_custom_call.1} parent=11 // pred_fallthru
          _
        // Predicated region
        $region45: #{tpu_custom_call.1} parent=11 // pred_check
          %p466 = pneg %p315
        $region46: #{tpu_custom_call.1} parent=11 // pred_check_branch
          %468 = sbr.rel (%p466) target = $region48
        $region47: #{tpu_custom_call.1} parent=11 // pred_region
          _
        $region48: #{tpu_custom_call.1} parent=11 // pred_fallthru
          _
        // Predicated region
        $region49: #{tpu_custom_call.1} parent=11 // pred_check
          %p469 = pneg %p336
        $region50: #{tpu_custom_call.1} parent=11 // pred_check_branch
          %471 = sbr.rel (%p469) target = $region52
        $region51: #{tpu_custom_call.1} parent=11 // pred_region
          _
        $region52: #{tpu_custom_call.1} parent=11 // pred_fallthru
          _
        // Predicated region
        $region53: #{tpu_custom_call.1} parent=11 // pred_check
          %p472 = pneg %p357
        $region54: #{tpu_custom_call.1} parent=11 // pred_check_branch
          %474 = sbr.rel (%p472) target = $region56
        $region55: #{tpu_custom_call.1} parent=11 // pred_region
          %s476 = ssub.s32 16, 16
          %477 = vsyncadd [#allocation8], %s476
          %s479 = sshll.u32 %s13, 4
          %s480 = int_to_ptr.vmem [resolvable:$true] %s479
          %482 = dma.vmem_to_smem %s480, 16, [#allocation15], [#allocation8]
        $region56: #{tpu_custom_call.1} parent=11 // pred_fallthru
          _
      $region12: #{tpu_custom_call.1} parent=5 // pred_fallthru
        _
      %p483 = scmp.lt.s32.totalorder %s36, 8
      // Predicated region
      $region57: #{tpu_custom_call.1} parent=5 // pred_check
        %p484 = pneg %p483
      $region58: #{tpu_custom_call.1} parent=5 // pred_check_branch
        %486 = sbr.rel (%p484) target = $region60
      $region59: #{tpu_custom_call.1} parent=5 // pred_region
        // Predicated region
        $region61: #{tpu_custom_call.1} parent=59 // pred_check
          %p487 = pneg %p68
        $region62: #{tpu_custom_call.1} parent=59 // pred_check_branch
          %489 = sbr.rel (%p487) target = $region64
        $region63: #{tpu_custom_call.1} parent=59 // pred_region
          %s490 = sand.u32 %s58, 1
          %s491 = scalar_lea.sflag [#allocation6], %s490
          %s492 = sand.u32 %s58, 1
          %s493 = smul.addr %s492, 8
          %s494 = scalar_lea.vmem [#allocation5], %s493
          %s496 = ssub.s32 128, 128
          %497 = vsyncadd %s491, %s496
          %s498 = smul.addr %s43, 128
          %s499 = scalar_lea.hbm %s0, %s498
          %s501 = sshll.u32 %s494, 4
          %s502 = int_to_ptr.vmem [resolvable:$true] %s501
          %504 = dma.hbm_to_vmem [thread:$0]  %s499, 128, %s502, %s491
        $region64: #{tpu_custom_call.1} parent=59 // pred_fallthru
          _
        // Predicated region
        $region65: #{tpu_custom_call.1} parent=59 // pred_check
          %p505 = pneg %p94
        $region66: #{tpu_custom_call.1} parent=59 // pred_check_branch
          %507 = sbr.rel (%p505) target = $region68
        $region67: #{tpu_custom_call.1} parent=59 // pred_region
          %s508 = sand.u32 %s36, 1
          %s509 = scalar_lea.sflag [#allocation10], %s508
          %s510 = sand.u32 %s84, 1
          %s511 = smul.addr %s510, 8
          %s512 = scalar_lea.vmem [#allocation9], %s511
          %s514 = ssub.s32 128, 128
          %515 = vsyncadd %s509, %s514
          %s516 = smul.addr %s43, 128
          %s517 = scalar_lea.hbm %s1, %s516
          %s519 = sshll.u32 %s512, 4
          %s520 = int_to_ptr.vmem [resolvable:$true] %s519
          %522 = dma.hbm_to_vmem [thread:$0]  %s517, 128, %s520, %s509
        $region68: #{tpu_custom_call.1} parent=59 // pred_fallthru
          _
        // Predicated region
        $region69: #{tpu_custom_call.1} parent=59 // pred_check
          %p523 = pneg %p120
        $region70: #{tpu_custom_call.1} parent=59 // pred_check_branch
          %525 = sbr.rel (%p523) target = $region72
        $region71: #{tpu_custom_call.1} parent=59 // pred_region
          %s526 = sand.u32 %s36, 1
          %s527 = scalar_lea.sflag [#allocation10], %s526
          %s528 = sand.u32 %s110, 1
          %s529 = smul.addr %s528, 8
          %s530 = scalar_lea.vmem [#allocation11], %s529
          %s532 = ssub.s32 128, 128
          %533 = vsyncadd %s527, %s532
          %s534 = smul.addr %s43, 128
          %s535 = scalar_lea.hbm %s2, %s534
          %s537 = sshll.u32 %s530, 4
          %s538 = int_to_ptr.vmem [resolvable:$true] %s537
          %540 = dma.hbm_to_vmem [thread:$0]  %s535, 128, %s538, %s527
        $region72: #{tpu_custom_call.1} parent=59 // pred_fallthru
          _
      $region60: #{tpu_custom_call.1} parent=5 // pred_fallthru
        _
      %p541 = scmp.le.s32.totalorder 1, %s36
      %p542 = scmp.lt.s32.totalorder %s36, 9
      %p543 = pnand %p541, %p542
      %p544 = pneg %p543
      // Predicated region
      $region73: #{tpu_custom_call.1} parent=5 // pred_check
        _
      $region74: #{tpu_custom_call.1} parent=5 // pred_check_branch
        %546 = sbr.rel (%p543) target = $region76
      $region75: #{tpu_custom_call.1} parent=5 // pred_region
        %s547 = ssub.s32 %s36, 1
        %s548 = sand.u32 %s61, 1
        %s549 = scalar_lea.sflag [#allocation6], %s548
        %s550 = sand.u32 %s61, 1
        %s551 = smul.addr %s550, 8
        %s552 = scalar_lea.vmem [#allocation5], %s551
        // Predicated region
        $region77: #{tpu_custom_call.1} parent=75 // pred_check
          %p553 = pneg %p74
        $region78: #{tpu_custom_call.1} parent=75 // pred_check_branch
          %555 = sbr.rel (%p553) target = $region80
        $region79: #{tpu_custom_call.1} parent=75 // pred_region
          %556 = dma.done %s549, 128
        $region80: #{tpu_custom_call.1} parent=75 // pred_fallthru
          _
        %s557 = sand.u32 %s41, 1
        %s558 = scalar_lea.sflag [#allocation10], %s557
        %s559 = sand.u32 %s87, 1
        %s560 = smul.addr %s559, 8
        %s561 = scalar_lea.vmem [#allocation9], %s560
        // Predicated region
        $region81: #{tpu_custom_call.1} parent=75 // pred_check
          %p562 = pneg %p100
        $region82: #{tpu_custom_call.1} parent=75 // pred_check_branch
          %564 = sbr.rel (%p562) target = $region84
        $region83: #{tpu_custom_call.1} parent=75 // pred_region
          %565 = dma.done %s558, 128
        $region84: #{tpu_custom_call.1} parent=75 // pred_fallthru
          _
        %s566 = sand.u32 %s41, 1
        %s567 = scalar_lea.sflag [#allocation10], %s566
        %s568 = sand.u32 %s113, 1
        %s569 = smul.addr %s568, 8
        %s570 = scalar_lea.vmem [#allocation11], %s569
        // Predicated region
        $region85: #{tpu_custom_call.1} parent=75 // pred_check
          %p571 = pneg %p126
        $region86: #{tpu_custom_call.1} parent=75 // pred_check_branch
          %573 = sbr.rel (%p571) target = $region88
        $region87: #{tpu_custom_call.1} parent=75 // pred_region
          %574 = dma.done %s567, 128
        $region88: #{tpu_custom_call.1} parent=75 // pred_fallthru
          _
        // Predicated region
        $region89: #{tpu_custom_call.1} parent=75 // pred_check
          %p575 = pneg %p210
        $region90: #{tpu_custom_call.1} parent=75 // pred_check_branch
          %577 = sbr.rel (%p575) target = $region92
        $region91: #{tpu_custom_call.1} parent=75 // pred_region
          %578 = dma.done [#allocation13], 16
        $region92: #{tpu_custom_call.1} parent=75 // pred_fallthru
          _
        // Predicated region
        $region93: #{tpu_custom_call.1} parent=75 // pred_check
          %p579 = pneg %p252
        $region94: #{tpu_custom_call.1} parent=75 // pred_check_branch
          %581 = sbr.rel (%p579) target = $region96
        $region95: #{tpu_custom_call.1} parent=75 // pred_region
          %582 = dma.done [#allocation13], 16
        $region96: #{tpu_custom_call.1} parent=75 // pred_fallthru
          _
        // Predicated region
        $region97: #{tpu_custom_call.1} parent=75 // pred_check
          %p583 = pneg %p357
        $region98: #{tpu_custom_call.1} parent=75 // pred_check_branch
          %585 = sbr.rel (%p583) target = $region100
        $region99: #{tpu_custom_call.1} parent=75 // pred_region
          %586 = dma.done [#allocation8], 16
        $region100: #{tpu_custom_call.1} parent=75 // pred_fallthru
          _
        %587 = sfence
        %s588 = sand.u32 %s61, 1
        %s589 = scalar_lea.sflag [#allocation6], %s588
        %s590 = sand.u32 %s61, 1
        %s591 = smul.addr %s590, 8
        %s592 = scalar_lea.vmem [#allocation5], %s591
        %p593 = pneg %p74
        %p594 = pneg %p71
        %s595 = sand.u32 %s41, 1
        %s596 = scalar_lea.sflag [#allocation10], %s595
        %s597 = sand.u32 %s87, 1
        %s598 = smul.addr %s597, 8
        %s599 = scalar_lea.vmem [#allocation9], %s598
        %p600 = pneg %p100
        %p601 = pneg %p97
        %s602 = sand.u32 %s41, 1
        %s603 = scalar_lea.sflag [#allocation10], %s602
        %s604 = sand.u32 %s113, 1
        %s605 = smul.addr %s604, 8
        %s606 = scalar_lea.vmem [#allocation11], %s605
        %p607 = pneg %p126
        %p608 = pneg %p123
        %p609 = pneg %p147
        %p610 = pneg %p144
        %p611 = pneg %p168
        %p612 = pneg %p165
        %p613 = pneg %p189
        %p614 = pneg %p186
        %p615 = pneg %p210
        %p616 = pneg %p207
        %p617 = pneg %p231
        %p618 = pneg %p228
        %p619 = pneg %p252
        %p620 = pneg %p249
        %p621 = pneg %p273
        %p622 = pneg %p270
        %p623 = pneg %p294
        %p624 = pneg %p291
        %p625 = pneg %p315
        %p626 = pneg %p312
        %p627 = pneg %p336
        %p628 = pneg %p333
        %p629 = pneg %p357
        %p630 = pneg %p354
        %p631 = pneg %p383
        %p632 = pneg %p380
        %s633 = sand.u32 %s370, 1
        %s634 = scalar_lea.sflag [#allocation7], %s633
        %s635 = sand.u32 %s370, 1
        %s636 = smul.addr %s635, 8
        %s637 = scalar_lea.vmem [#allocation16], %s636
        %p638 = pneg %p411
        %p639 = pneg %p408
        %s640 = sand.u32 %s398, 1
        %s641 = scalar_lea.sflag [#allocation18], %s640
        %s642 = sand.u32 %s398, 1
        %s643 = smul.addr %s642, 8
        %s644 = scalar_lea.vmem [#allocation17], %s643
        %p645 = scmp.eq.s32.totalorder %s46, 0
        // Predicated region
        $region101: #{tpu_custom_call.1} parent=75 // pred_check
          %p646 = pneg %p645
        $region102: #{tpu_custom_call.1} parent=75 // pred_check_branch
          %648 = sbr.rel (%p646) target = $region104
        $region103: #{tpu_custom_call.1} parent=75 // pred_region
          %s649 = sld [smem:[#allocation15]]
          %s650 = sld [smem:[#allocation15 + $0x1]]
          %s651 = sld [smem:[#allocation15 + $0x2]]
          %s652 = sld [smem:[#allocation15 + $0x3]]
          %v653 = vld [vmem:[%s9] sm:$0xff]
          %v654 = vld [vmem:[%s9 + $0x8] sm:$0xff]
          %v655 = vld [vmem:[%s9 + $0x10] sm:$0xff]
          %v656 = vld [vmem:[%s9 + $0x18] sm:$0xff]
          %v657 = vld [vmem:[%s10] sm:$0xff]
          %v658 = vld [vmem:[%s10 + $0x8] sm:$0xff]
          %v659 = vld [vmem:[%s10 + $0x10] sm:$0xff]
          %v660 = vld [vmem:[%s10 + $0x18] sm:$0xff]
          %v661 = vld [vmem:[%s11] sm:$0xf]
          %v662 = vld [vmem:[%s12] sm:$0xf]
          %v663 = vld [vmem:[%s552] sm:$0xff]
          %v664 = vld [vmem:[%s3] sm:$0xff]
          %v665 = vld [vmem:[%s3 + $0x8] sm:$0xff]
          %v666 = vld [vmem:[%s3 + $0x10] sm:$0xff]
          %v667 = vld [vmem:[%s3 + $0x18] sm:$0xff]
          %v668 = vld [vmem:[%s4] sm:$0x1]
          %v670 = vlaneseq
          %v671 = vshrl.u32 %v670, 7
          %v672 = vsub.s32 0, %v671
          %v673 = vrot.slane %v668, %v672
          %vm675 = vcmask 261120
          %v677 = vsel %vm675, %v663, 0
          %679 = vmatprep.subr.mxu0 0.0
          %680 = vmatpush1.msra.mxu0 %v664
          %681 = vmatprep.subr.mxu0 0.0
          %682 = vmatpush1.msra.mxu0 %v665
          %683 = vmatprep.subr.mxu0 0.0
          %684 = vmatpush1.msra.mxu0 %v666
          %685 = vmatprep.subr.mxu0 0.0
          %686 = vmatpush1.msra.mxu0 %v667
          %687 = vmatprep.subr.mxu0 0.0
          %688 = vmatpush1.msra.mxu0 0.0
          %689 = vmatprep.subr.mxu0 0.0
          %690 = vmatpush1.msra.mxu0 0.0
          %691 = vmatprep.subr.mxu0 0.0
          %692 = vmatpush1.msra.mxu0 0.0
          %693 = vmatprep.subr.mxu0 0.0
          %694 = vmatpush1.msra.mxu0 0.0
          %695 = vmatprep.subr.mxu0 0.0
          %696 = vmatpush1.msra.mxu0 0.0
          %697 = vmatprep.subr.mxu0 0.0
          %698 = vmatpush1.msra.mxu0 0.0
          %699 = vmatprep.subr.mxu0 0.0
          %700 = vmatpush1.msra.mxu0 0.0
          %701 = vmatprep.subr.mxu0 0.0
          %702 = vmatpush1.msra.mxu0 0.0
          %703 = vmatprep.subr.mxu0 0.0
          %704 = vmatpush1.msra.mxu0 0.0
          %705 = vmatprep.subr.mxu0 0.0
          %706 = vmatpush1.msra.mxu0 0.0
          %707 = vmatprep.subr.mxu0 0.0
          %708 = vmatpush1.msra.mxu0 0.0
          %709 = vmatprep.subr.mxu0 0.0
          %710 = vmatpush1.msra.mxu0 0.0
          %711 = vmatprep.subr.mxu0 0.0
          %712 = vmatpush1.msra.mxu0 0.0
          %713 = vmatprep.subr.mxu0 0.0
          %714 = vmatpush1.msra.mxu0 0.0
          %715 = vmatprep.subr.mxu0 0.0
          %716 = vmatpush1.msra.mxu0 0.0
          %717 = vmatprep.subr.mxu0 0.0
          %718 = vmatpush1.msra.mxu0 0.0
          %719 = vmatprep.subr.mxu0 0.0
          %720 = vmatpush1.msra.mxu0 0.0
          %721 = vmatprep.subr.mxu0 0.0
          %722 = vmatpush1.msra.mxu0 0.0
          %723 = vmatprep.subr.mxu0 0.0
          %724 = vmatpush1.msra.mxu0 0.0
          %725 = vmatprep.subr.mxu0 0.0
          %726 = vmatpush1.msra.mxu0 0.0
          %727 = vmatprep.subr.mxu0 0.0
          %728 = vmatpush1.msra.mxu0 0.0
          %729 = vmatprep.subr.mxu0 0.0
          %730 = vmatpush1.msra.mxu0 0.0
          %731 = vmatprep.subr.mxu0 0.0
          %732 = vmatpush1.msra.mxu0 0.0
          %733 = vmatprep.subr.mxu0 0.0
          %734 = vmatpush1.msra.mxu0 0.0
          %735 = vmatprep.subr.mxu0 0.0
          %736 = vmatpush1.msra.mxu0 0.0
          %737 = vmatprep.subr.mxu0 0.0
          %738 = vmatpush1.msra.mxu0 0.0
          %739 = vmatprep.subr.mxu0 0.0
          %740 = vmatpush1.msra.mxu0 0.0
          %741 = vmatprep.subr.mxu0 0.0
          %742 = vmatpush1.msra.mxu0 0.0
          %743 = vmatprep.mubr.f32.mxu0 0.0
          %744 = vmatmul.mubr.f32.gmra.mrb[0].mxu0 %v677
          %v745 = vpop.f32.mrb[0].mxu0
          %v746 = vadd.f32 %v673, %v745
          %v747 = vpop.f32.mrb[0].mxu0
          %748 = vdwg.mxu0
          %v750 = vsel %vm675, %v746, 0
          %752 = vmatprep.subr.mxu0 0.0
          %753 = vmatpush1.msra.mxu0 %v653
          %754 = vmatprep.subr.mxu0 0.0
          %755 = vmatpush1.msra.mxu0 %v654
          %756 = vmatprep.subr.mxu0 0.0
          %757 = vmatpush1.msra.mxu0 %v655
          %758 = vmatprep.subr.mxu0 0.0
          %759 = vmatpush1.msra.mxu0 %v656
          %760 = vmatprep.subr.mxu0 0.0
          %761 = vmatpush1.msra.mxu0 0.0
          %762 = vmatprep.subr.mxu0 0.0
          %763 = vmatpush1.msra.mxu0 0.0
          %764 = vmatprep.subr.mxu0 0.0
          %765 = vmatpush1.msra.mxu0 0.0
          %766 = vmatprep.subr.mxu0 0.0
          %767 = vmatpush1.msra.mxu0 0.0
          %768 = vmatprep.subr.mxu0 0.0
          %769 = vmatpush1.msra.mxu0 0.0
          %770 = vmatprep.subr.mxu0 0.0
          %771 = vmatpush1.msra.mxu0 0.0
          %772 = vmatprep.subr.mxu0 0.0
          %773 = vmatpush1.msra.mxu0 0.0
          %774 = vmatprep.subr.mxu0 0.0
          %775 = vmatpush1.msra.mxu0 0.0
          %776 = vmatprep.subr.mxu0 0.0
          %777 = vmatpush1.msra.mxu0 0.0
          %778 = vmatprep.subr.mxu0 0.0
          %779 = vmatpush1.msra.mxu0 0.0
          %780 = vmatprep.subr.mxu0 0.0
          %781 = vmatpush1.msra.mxu0 0.0
          %782 = vmatprep.subr.mxu0 0.0
          %783 = vmatpush1.msra.mxu0 0.0
          %784 = vmatprep.subr.mxu0 0.0
          %785 = vmatpush1.msra.mxu0 0.0
          %786 = vmatprep.subr.mxu0 0.0
          %787 = vmatpush1.msra.mxu0 0.0
          %788 = vmatprep.subr.mxu0 0.0
          %789 = vmatpush1.msra.mxu0 0.0
          %790 = vmatprep.subr.mxu0 0.0
          %791 = vmatpush1.msra.mxu0 0.0
          %792 = vmatprep.subr.mxu0 0.0
          %793 = vmatpush1.msra.mxu0 0.0
          %794 = vmatprep.subr.mxu0 0.0
          %795 = vmatpush1.msra.mxu0 0.0
          %796 = vmatprep.subr.mxu0 0.0
          %797 = vmatpush1.msra.mxu0 0.0
          %798 = vmatprep.subr.mxu0 0.0
          %799 = vmatpush1.msra.mxu0 0.0
          %800 = vmatprep.subr.mxu0 0.0
          %801 = vmatpush1.msra.mxu0 0.0
          %802 = vmatprep.subr.mxu0 0.0
          %803 = vmatpush1.msra.mxu0 0.0
          %804 = vmatprep.subr.mxu0 0.0
          %805 = vmatpush1.msra.mxu0 0.0
          %806 = vmatprep.subr.mxu0 0.0
          %807 = vmatpush1.msra.mxu0 0.0
          %808 = vmatprep.subr.mxu0 0.0
          %809 = vmatpush1.msra.mxu0 0.0
          %810 = vmatprep.subr.mxu0 0.0
          %811 = vmatpush1.msra.mxu0 0.0
          %812 = vmatprep.subr.mxu0 0.0
          %813 = vmatpush1.msra.mxu0 0.0
          %814 = vmatprep.subr.mxu0 0.0
          %815 = vmatpush1.msra.mxu0 0.0
          %816 = vmatprep.mubr.f32.mxu0 0.0
          %817 = vmatmul.mubr.f32.gmra.mrb[0].mxu0 %v750
          %v818 = vpop.f32.mrb[0].mxu0
          %v819 = vadd.f32 0.0, %v818
          %v820 = vpop.f32.mrb[0].mxu0
          %821 = vdwg.mxu0
          %v822 = vmul.f32 %v746, %v746
          %v824 = vsel %vm675, %v822, 0
          %826 = vmatprep.subr.mxu0 0.0
          %827 = vmatpush1.msra.mxu0 %v657
          %828 = vmatprep.subr.mxu0 0.0
          %829 = vmatpush1.msra.mxu0 %v658
          %830 = vmatprep.subr.mxu0 0.0
          %831 = vmatpush1.msra.mxu0 %v659
          %832 = vmatprep.subr.mxu0 0.0
          %833 = vmatpush1.msra.mxu0 %v660
          %834 = vmatprep.subr.mxu0 0.0
          %835 = vmatpush1.msra.mxu0 0.0
          %836 = vmatprep.subr.mxu0 0.0
          %837 = vmatpush1.msra.mxu0 0.0
          %838 = vmatprep.subr.mxu0 0.0
          %839 = vmatpush1.msra.mxu0 0.0
          %840 = vmatprep.subr.mxu0 0.0
          %841 = vmatpush1.msra.mxu0 0.0
          %842 = vmatprep.subr.mxu0 0.0
          %843 = vmatpush1.msra.mxu0 0.0
          %844 = vmatprep.subr.mxu0 0.0
          %845 = vmatpush1.msra.mxu0 0.0
          %846 = vmatprep.subr.mxu0 0.0
          %847 = vmatpush1.msra.mxu0 0.0
          %848 = vmatprep.subr.mxu0 0.0
          %849 = vmatpush1.msra.mxu0 0.0
          %850 = vmatprep.subr.mxu0 0.0
          %851 = vmatpush1.msra.mxu0 0.0
          %852 = vmatprep.subr.mxu0 0.0
          %853 = vmatpush1.msra.mxu0 0.0
          %854 = vmatprep.subr.mxu0 0.0
          %855 = vmatpush1.msra.mxu0 0.0
          %856 = vmatprep.subr.mxu0 0.0
          %857 = vmatpush1.msra.mxu0 0.0
          %858 = vmatprep.subr.mxu0 0.0
          %859 = vmatpush1.msra.mxu0 0.0
          %860 = vmatprep.subr.mxu0 0.0
          %861 = vmatpush1.msra.mxu0 0.0
          %862 = vmatprep.subr.mxu0 0.0
          %863 = vmatpush1.msra.mxu0 0.0
          %864 = vmatprep.subr.mxu0 0.0
          %865 = vmatpush1.msra.mxu0 0.0
          %866 = vmatprep.subr.mxu0 0.0
          %867 = vmatpush1.msra.mxu0 0.0
          %868 = vmatprep.subr.mxu0 0.0
          %869 = vmatpush1.msra.mxu0 0.0
          %870 = vmatprep.subr.mxu0 0.0
          %871 = vmatpush1.msra.mxu0 0.0
          %872 = vmatprep.subr.mxu0 0.0
          %873 = vmatpush1.msra.mxu0 0.0
          %874 = vmatprep.subr.mxu0 0.0
          %875 = vmatpush1.msra.mxu0 0.0
          %876 = vmatprep.subr.mxu0 0.0
          %877 = vmatpush1.msra.mxu0 0.0
          %878 = vmatprep.subr.mxu0 0.0
          %879 = vmatpush1.msra.mxu0 0.0
          %880 = vmatprep.subr.mxu0 0.0
          %881 = vmatpush1.msra.mxu0 0.0
          %882 = vmatprep.subr.mxu0 0.0
          %883 = vmatpush1.msra.mxu0 0.0
          %884 = vmatprep.subr.mxu0 0.0
          %885 = vmatpush1.msra.mxu0 0.0
          %886 = vmatprep.subr.mxu0 0.0
          %887 = vmatpush1.msra.mxu0 0.0
          %888 = vmatprep.subr.mxu0 0.0
          %889 = vmatpush1.msra.mxu0 0.0
          %890 = vmatprep.mubr.f32.mxu0 0.0
          %891 = vmatmul.mubr.f32.gmra.mrb[0].mxu0 %v824
          %v892 = vpop.f32.mrb[0].mxu0
          %v893 = vadd.f32 0.0, %v892
          %v894 = vpop.f32.mrb[0].mxu0
          %895 = vdwg.mxu0
          %v896 = vxor.u32 %v819, 2147483648
          %v897 = vmul.f32 %v896, 1.442695
          %v898 = vpow.pop %v897
          %v899 = vadd.f32 %v898, 1.0
          %v900 = vrcp.pop %v899
          %v901 = vmul.f32 1.0, %v900
          %v902 = vstv %s649
          %v903 = vmul.f32 %v901, %v902
          %v904 = vadd.f32 %v903, 1.1
          %v905 = vmul.f32 %v904, %v904
          %v906 = vsub.f32 %v905, 1.0
          %v907 = vmax.f32 %v893, 1e-08
          %v908 = vrcp.pop %v907
          %v909 = vmul.f32 %v906, %v908
          %v910 = vrsqrt.pop %v909
          %v911 = vmul.f32 %v909, %v910
          %vm912 = vcmp.eq.f32.partialorder %v909, inf
          %v913 = vsel %vm912, %v909, %v911
          %vm914 = vcmp.eq.f32.partialorder %v909, 0.0
          %v915 = vand.u32 %v909, 2147483648
          %v916 = vsel %vm914, %v915, %v913
          %vm917 = vcmask 31744
          %v919 = vsel %vm917, %v916, 0
          %vm921 = vcmask 1043456
          %v923 = vsel %vm921, %v662, 0
          %925 = vmatprep.subr.mxu0 0.0
          %926 = vmatpush1.msra.mxu0 %v923
          %927 = vmatprep.subr.mxu0 0.0
          %928 = vmatpush1.msra.mxu0 0.0
          %929 = vmatprep.subr.mxu0 0.0
          %930 = vmatpush1.msra.mxu0 0.0
          %931 = vmatprep.subr.mxu0 0.0
          %932 = vmatpush1.msra.mxu0 0.0
          %933 = vmatprep.subr.mxu0 0.0
          %934 = vmatpush1.msra.mxu0 0.0
          %935 = vmatprep.subr.mxu0 0.0
          %936 = vmatpush1.msra.mxu0 0.0
          %937 = vmatprep.subr.mxu0 0.0
          %938 = vmatpush1.msra.mxu0 0.0
          %939 = vmatprep.subr.mxu0 0.0
          %940 = vmatpush1.msra.mxu0 0.0
          %941 = vmatprep.subr.mxu0 0.0
          %942 = vmatpush1.msra.mxu0 0.0
          %943 = vmatprep.subr.mxu0 0.0
          %944 = vmatpush1.msra.mxu0 0.0
          %945 = vmatprep.subr.mxu0 0.0
          %946 = vmatpush1.msra.mxu0 0.0
          %947 = vmatprep.subr.mxu0 0.0
          %948 = vmatpush1.msra.mxu0 0.0
          %949 = vmatprep.subr.mxu0 0.0
          %950 = vmatpush1.msra.mxu0 0.0
          %951 = vmatprep.subr.mxu0 0.0
          %952 = vmatpush1.msra.mxu0 0.0
          %953 = vmatprep.subr.mxu0 0.0
          %954 = vmatpush1.msra.mxu0 0.0
          %955 = vmatprep.subr.mxu0 0.0
          %956 = vmatpush1.msra.mxu0 0.0
          %957 = vmatprep.subr.mxu0 0.0
          %958 = vmatpush1.msra.mxu0 0.0
          %959 = vmatprep.subr.mxu0 0.0
          %960 = vmatpush1.msra.mxu0 0.0
          %961 = vmatprep.subr.mxu0 0.0
          %962 = vmatpush1.msra.mxu0 0.0
          %963 = vmatprep.subr.mxu0 0.0
          %964 = vmatpush1.msra.mxu0 0.0
          %965 = vmatprep.subr.mxu0 0.0
          %966 = vmatpush1.msra.mxu0 0.0
          %967 = vmatprep.subr.mxu0 0.0
          %968 = vmatpush1.msra.mxu0 0.0
          %969 = vmatprep.subr.mxu0 0.0
          %970 = vmatpush1.msra.mxu0 0.0
          %971 = vmatprep.subr.mxu0 0.0
          %972 = vmatpush1.msra.mxu0 0.0
          %973 = vmatprep.subr.mxu0 0.0
          %974 = vmatpush1.msra.mxu0 0.0
          %975 = vmatprep.subr.mxu0 0.0
          %976 = vmatpush1.msra.mxu0 0.0
          %977 = vmatprep.subr.mxu0 0.0
          %978 = vmatpush1.msra.mxu0 0.0
          %979 = vmatprep.subr.mxu0 0.0
          %980 = vmatpush1.msra.mxu0 0.0
          %981 = vmatprep.subr.mxu0 0.0
          %982 = vmatpush1.msra.mxu0 0.0
          %983 = vmatprep.subr.mxu0 0.0
          %984 = vmatpush1.msra.mxu0 0.0
          %985 = vmatprep.subr.mxu0 0.0
          %986 = vmatpush1.msra.mxu0 0.0
          %987 = vmatprep.subr.mxu0 0.0
          %988 = vmatpush1.msra.mxu0 0.0
          %989 = vmatprep.mubr.f32.mxu0 0.0
          %990 = vmatmul.mubr.f32.gmra.mrb[0].mxu0 %v919
          %v991 = vpop.f32.mrb[0].mxu0
          %v992 = vadd.f32 0.0, %v991
          %v993 = vpop.f32.mrb[0].mxu0
          %994 = vdwg.mxu0
          %v995 = vmul.f32 %v746, %v992
          %v997 = vsel %vm917, %v904, 0
          %v1000 = vsel %vm921, %v661, 0
          %1002 = vmatprep.subr.mxu0 0.0
          %1003 = vmatpush1.msra.mxu0 %v1000
          %1004 = vmatprep.subr.mxu0 0.0
          %1005 = vmatpush1.msra.mxu0 0.0
          %1006 = vmatprep.subr.mxu0 0.0
          %1007 = vmatpush1.msra.mxu0 0.0
          %1008 = vmatprep.subr.mxu0 0.0
          %1009 = vmatpush1.msra.mxu0 0.0
          %1010 = vmatprep.subr.mxu0 0.0
          %1011 = vmatpush1.msra.mxu0 0.0
          %1012 = vmatprep.subr.mxu0 0.0
          %1013 = vmatpush1.msra.mxu0 0.0
          %1014 = vmatprep.subr.mxu0 0.0
          %1015 = vmatpush1.msra.mxu0 0.0
          %1016 = vmatprep.subr.mxu0 0.0
          %1017 = vmatpush1.msra.mxu0 0.0
          %1018 = vmatprep.subr.mxu0 0.0
          %1019 = vmatpush1.msra.mxu0 0.0
          %1020 = vmatprep.subr.mxu0 0.0
          %1021 = vmatpush1.msra.mxu0 0.0
          %1022 = vmatprep.subr.mxu0 0.0
          %1023 = vmatpush1.msra.mxu0 0.0
          %1024 = vmatprep.subr.mxu0 0.0
          %1025 = vmatpush1.msra.mxu0 0.0
          %1026 = vmatprep.subr.mxu0 0.0
          %1027 = vmatpush1.msra.mxu0 0.0
          %1028 = vmatprep.subr.mxu0 0.0
          %1029 = vmatpush1.msra.mxu0 0.0
          %1030 = vmatprep.subr.mxu0 0.0
          %1031 = vmatpush1.msra.mxu0 0.0
          %1032 = vmatprep.subr.mxu0 0.0
          %1033 = vmatpush1.msra.mxu0 0.0
          %1034 = vmatprep.subr.mxu0 0.0
          %1035 = vmatpush1.msra.mxu0 0.0
          %1036 = vmatprep.subr.mxu0 0.0
          %1037 = vmatpush1.msra.mxu0 0.0
          %1038 = vmatprep.subr.mxu0 0.0
          %1039 = vmatpush1.msra.mxu0 0.0
          %1040 = vmatprep.subr.mxu0 0.0
          %1041 = vmatpush1.msra.mxu0 0.0
          %1042 = vmatprep.subr.mxu0 0.0
          %1043 = vmatpush1.msra.mxu0 0.0
          %1044 = vmatprep.subr.mxu0 0.0
          %1045 = vmatpush1.msra.mxu0 0.0
          %1046 = vmatprep.subr.mxu0 0.0
          %1047 = vmatpush1.msra.mxu0 0.0
          %1048 = vmatprep.subr.mxu0 0.0
          %1049 = vmatpush1.msra.mxu0 0.0
          %1050 = vmatprep.subr.mxu0 0.0
          %1051 = vmatpush1.msra.mxu0 0.0
          %1052 = vmatprep.subr.mxu0 0.0
          %1053 = vmatpush1.msra.mxu0 0.0
          %1054 = vmatprep.subr.mxu0 0.0
          %1055 = vmatpush1.msra.mxu0 0.0
          %1056 = vmatprep.subr.mxu0 0.0
          %1057 = vmatpush1.msra.mxu0 0.0
          %1058 = vmatprep.subr.mxu0 0.0
          %1059 = vmatpush1.msra.mxu0 0.0
          %1060 = vmatprep.subr.mxu0 0.0
          %1061 = vmatpush1.msra.mxu0 0.0
          %1062 = vmatprep.subr.mxu0 0.0
          %1063 = vmatpush1.msra.mxu0 0.0
          %1064 = vmatprep.subr.mxu0 0.0
          %1065 = vmatpush1.msra.mxu0 0.0
          %1066 = vmatprep.mubr.f32.mxu0 0.0
          %1067 = vmatmul.mubr.f32.gmra.mrb[0].mxu0 %v997
          %v1068 = vpop.f32.mrb[0].mxu0
          %v1069 = vadd.f32 %v995, %v1068
          %v1070 = vpop.f32.mrb[0].mxu0
          %1071 = vdwg.mxu0
          %v1072 = vld [vmem:[%s561] sm:$0xff]
          %v1073 = vld [vmem:[%s5] sm:$0xff]
          %v1074 = vld [vmem:[%s5 + $0x8] sm:$0xff]
          %v1075 = vld [vmem:[%s5 + $0x10] sm:$0xff]
          %v1076 = vld [vmem:[%s5 + $0x18] sm:$0xff]
          %v1077 = vld [vmem:[#allocation12] sm:$0x1]
          %v1079 = vlaneseq
          %v1080 = vshrl.u32 %v1079, 7
          %v1081 = vsub.s32 0, %v1080
          %v1082 = vrot.slane %v1077, %v1081
          %v1085 = vsel %vm675, %v1072, 0
          %1087 = vmatprep.subr.mxu0 0.0
          %1088 = vmatpush1.msra.mxu0 %v1073
          %1089 = vmatprep.subr.mxu0 0.0
          %1090 = vmatpush1.msra.mxu0 %v1074
          %1091 = vmatprep.subr.mxu0 0.0
          %1092 = vmatpush1.msra.mxu0 %v1075
          %1093 = vmatprep.subr.mxu0 0.0
          %1094 = vmatpush1.msra.mxu0 %v1076
          %1095 = vmatprep.subr.mxu0 0.0
          %1096 = vmatpush1.msra.mxu0 0.0
          %1097 = vmatprep.subr.mxu0 0.0
          %1098 = vmatpush1.msra.mxu0 0.0
          %1099 = vmatprep.subr.mxu0 0.0
          %1100 = vmatpush1.msra.mxu0 0.0
          %1101 = vmatprep.subr.mxu0 0.0
          %1102 = vmatpush1.msra.mxu0 0.0
          %1103 = vmatprep.subr.mxu0 0.0
          %1104 = vmatpush1.msra.mxu0 0.0
          %1105 = vmatprep.subr.mxu0 0.0
          %1106 = vmatpush1.msra.mxu0 0.0
          %1107 = vmatprep.subr.mxu0 0.0
          %1108 = vmatpush1.msra.mxu0 0.0
          %1109 = vmatprep.subr.mxu0 0.0
          %1110 = vmatpush1.msra.mxu0 0.0
          %1111 = vmatprep.subr.mxu0 0.0
          %1112 = vmatpush1.msra.mxu0 0.0
          %1113 = vmatprep.subr.mxu0 0.0
          %1114 = vmatpush1.msra.mxu0 0.0
          %1115 = vmatprep.subr.mxu0 0.0
          %1116 = vmatpush1.msra.mxu0 0.0
          %1117 = vmatprep.subr.mxu0 0.0
          %1118 = vmatpush1.msra.mxu0 0.0
          %1119 = vmatprep.subr.mxu0 0.0
          %1120 = vmatpush1.msra.mxu0 0.0
          %1121 = vmatprep.subr.mxu0 0.0
          %1122 = vmatpush1.msra.mxu0 0.0
          %1123 = vmatprep.subr.mxu0 0.0
          %1124 = vmatpush1.msra.mxu0 0.0
          %1125 = vmatprep.subr.mxu0 0.0
          %1126 = vmatpush1.msra.mxu0 0.0
          %1127 = vmatprep.subr.mxu0 0.0
          %1128 = vmatpush1.msra.mxu0 0.0
          %1129 = vmatprep.subr.mxu0 0.0
          %1130 = vmatpush1.msra.mxu0 0.0
          %1131 = vmatprep.subr.mxu0 0.0
          %1132 = vmatpush1.msra.mxu0 0.0
          %1133 = vmatprep.subr.mxu0 0.0
          %1134 = vmatpush1.msra.mxu0 0.0
          %1135 = vmatprep.subr.mxu0 0.0
          %1136 = vmatpush1.msra.mxu0 0.0
          %1137 = vmatprep.subr.mxu0 0.0
          %1138 = vmatpush1.msra.mxu0 0.0
          %1139 = vmatprep.subr.mxu0 0.0
          %1140 = vmatpush1.msra.mxu0 0.0
          %1141 = vmatprep.subr.mxu0 0.0
          %1142 = vmatpush1.msra.mxu0 0.0
          %1143 = vmatprep.subr.mxu0 0.0
          %1144 = vmatpush1.msra.mxu0 0.0
          %1145 = vmatprep.subr.mxu0 0.0
          %1146 = vmatpush1.msra.mxu0 0.0
          %1147 = vmatprep.subr.mxu0 0.0
          %1148 = vmatpush1.msra.mxu0 0.0
          %1149 = vmatprep.subr.mxu0 0.0
          %1150 = vmatpush1.msra.mxu0 0.0
          %1151 = vmatprep.mubr.f32.mxu0 0.0
          %1152 = vmatmul.mubr.f32.gmra.mrb[0].mxu0 %v1085
          %v1153 = vpop.f32.mrb[0].mxu0
          %v1154 = vadd.f32 %v1082, %v1153
          %v1155 = vpop.f32.mrb[0].mxu0
          %1156 = vdwg.mxu0
          %v1158 = vsel %vm675, %v1154, 0
          %1160 = vmatprep.subr.mxu0 0.0
          %1161 = vmatpush1.msra.mxu0 %v653
          %1162 = vmatprep.subr.mxu0 0.0
          %1163 = vmatpush1.msra.mxu0 %v654
          %1164 = vmatprep.subr.mxu0 0.0
          %1165 = vmatpush1.msra.mxu0 %v655
          %1166 = vmatprep.subr.mxu0 0.0
          %1167 = vmatpush1.msra.mxu0 %v656
          %1168 = vmatprep.subr.mxu0 0.0
          %1169 = vmatpush1.msra.mxu0 0.0
          %1170 = vmatprep.subr.mxu0 0.0
          %1171 = vmatpush1.msra.mxu0 0.0
          %1172 = vmatprep.subr.mxu0 0.0
          %1173 = vmatpush1.msra.mxu0 0.0
          %1174 = vmatprep.subr.mxu0 0.0
          %1175 = vmatpush1.msra.mxu0 0.0
          %1176 = vmatprep.subr.mxu0 0.0
          %1177 = vmatpush1.msra.mxu0 0.0
          %1178 = vmatprep.subr.mxu0 0.0
          %1179 = vmatpush1.msra.mxu0 0.0
          %1180 = vmatprep.subr.mxu0 0.0
          %1181 = vmatpush1.msra.mxu0 0.0
          %1182 = vmatprep.subr.mxu0 0.0
          %1183 = vmatpush1.msra.mxu0 0.0
          %1184 = vmatprep.subr.mxu0 0.0
          %1185 = vmatpush1.msra.mxu0 0.0
          %1186 = vmatprep.subr.mxu0 0.0
          %1187 = vmatpush1.msra.mxu0 0.0
          %1188 = vmatprep.subr.mxu0 0.0
          %1189 = vmatpush1.msra.mxu0 0.0
          %1190 = vmatprep.subr.mxu0 0.0
          %1191 = vmatpush1.msra.mxu0 0.0
          %1192 = vmatprep.subr.mxu0 0.0
          %1193 = vmatpush1.msra.mxu0 0.0
          %1194 = vmatprep.subr.mxu0 0.0
          %1195 = vmatpush1.msra.mxu0 0.0
          %1196 = vmatprep.subr.mxu0 0.0
          %1197 = vmatpush1.msra.mxu0 0.0
          %1198 = vmatprep.subr.mxu0 0.0
          %1199 = vmatpush1.msra.mxu0 0.0
          %1200 = vmatprep.subr.mxu0 0.0
          %1201 = vmatpush1.msra.mxu0 0.0
          %1202 = vmatprep.subr.mxu0 0.0
          %1203 = vmatpush1.msra.mxu0 0.0
          %1204 = vmatprep.subr.mxu0 0.0
          %1205 = vmatpush1.msra.mxu0 0.0
          %1206 = vmatprep.subr.mxu0 0.0
          %1207 = vmatpush1.msra.mxu0 0.0
          %1208 = vmatprep.subr.mxu0 0.0
          %1209 = vmatpush1.msra.mxu0 0.0
          %1210 = vmatprep.subr.mxu0 0.0
          %1211 = vmatpush1.msra.mxu0 0.0
          %1212 = vmatprep.subr.mxu0 0.0
          %1213 = vmatpush1.msra.mxu0 0.0
          %1214 = vmatprep.subr.mxu0 0.0
          %1215 = vmatpush1.msra.mxu0 0.0
          %1216 = vmatprep.subr.mxu0 0.0
          %1217 = vmatpush1.msra.mxu0 0.0
          %1218 = vmatprep.subr.mxu0 0.0
          %1219 = vmatpush1.msra.mxu0 0.0
          %1220 = vmatprep.subr.mxu0 0.0
          %1221 = vmatpush1.msra.mxu0 0.0
          %1222 = vmatprep.subr.mxu0 0.0
          %1223 = vmatpush1.msra.mxu0 0.0
          %1224 = vmatprep.mubr.f32.mxu0 0.0
          %1225 = vmatmul.mubr.f32.gmra.mrb[0].mxu0 %v1158
          %v1226 = vpop.f32.mrb[0].mxu0
          %v1227 = vadd.f32 0.0, %v1226
          %v1228 = vpop.f32.mrb[0].mxu0
          %1229 = vdwg.mxu0
          %v1230 = vmul.f32 %v1154, %v1154
          %v1232 = vsel %vm675, %v1230, 0
          %1234 = vmatprep.subr.mxu0 0.0
          %1235 = vmatpush1.msra.mxu0 %v657
          %1236 = vmatprep.subr.mxu0 0.0
          %1237 = vmatpush1.msra.mxu0 %v658
          %1238 = vmatprep.subr.mxu0 0.0
          %1239 = vmatpush1.msra.mxu0 %v659
          %1240 = vmatprep.subr.mxu0 0.0
          %1241 = vmatpush1.msra.mxu0 %v660
          %1242 = vmatprep.subr.mxu0 0.0
          %1243 = vmatpush1.msra.mxu0 0.0
          %1244 = vmatprep.subr.mxu0 0.0
          %1245 = vmatpush1.msra.mxu0 0.0
          %1246 = vmatprep.subr.mxu0 0.0
          %1247 = vmatpush1.msra.mxu0 0.0
          %1248 = vmatprep.subr.mxu0 0.0
          %1249 = vmatpush1.msra.mxu0 0.0
          %1250 = vmatprep.subr.mxu0 0.0
          %1251 = vmatpush1.msra.mxu0 0.0
          %1252 = vmatprep.subr.mxu0 0.0
          %1253 = vmatpush1.msra.mxu0 0.0
          %1254 = vmatprep.subr.mxu0 0.0
          %1255 = vmatpush1.msra.mxu0 0.0
          %1256 = vmatprep.subr.mxu0 0.0
          %1257 = vmatpush1.msra.mxu0 0.0
          %1258 = vmatprep.subr.mxu0 0.0
          %1259 = vmatpush1.msra.mxu0 0.0
          %1260 = vmatprep.subr.mxu0 0.0
          %1261 = vmatpush1.msra.mxu0 0.0
          %1262 = vmatprep.subr.mxu0 0.0
          %1263 = vmatpush1.msra.mxu0 0.0
          %1264 = vmatprep.subr.mxu0 0.0
          %1265 = vmatpush1.msra.mxu0 0.0
          %1266 = vmatprep.subr.mxu0 0.0
          %1267 = vmatpush1.msra.mxu0 0.0
          %1268 = vmatprep.subr.mxu0 0.0
          %1269 = vmatpush1.msra.mxu0 0.0
          %1270 = vmatprep.subr.mxu0 0.0
          %1271 = vmatpush1.msra.mxu0 0.0
          %1272 = vmatprep.subr.mxu0 0.0
          %1273 = vmatpush1.msra.mxu0 0.0
          %1274 = vmatprep.subr.mxu0 0.0
          %1275 = vmatpush1.msra.mxu0 0.0
          %1276 = vmatprep.subr.mxu0 0.0
          %1277 = vmatpush1.msra.mxu0 0.0
          %1278 = vmatprep.subr.mxu0 0.0
          %1279 = vmatpush1.msra.mxu0 0.0
          %1280 = vmatprep.subr.mxu0 0.0
          %1281 = vmatpush1.msra.mxu0 0.0
          %1282 = vmatprep.subr.mxu0 0.0
          %1283 = vmatpush1.msra.mxu0 0.0
          %1284 = vmatprep.subr.mxu0 0.0
          %1285 = vmatpush1.msra.mxu0 0.0
          %1286 = vmatprep.subr.mxu0 0.0
          %1287 = vmatpush1.msra.mxu0 0.0
          %1288 = vmatprep.subr.mxu0 0.0
          %1289 = vmatpush1.msra.mxu0 0.0
          %1290 = vmatprep.subr.mxu0 0.0
          %1291 = vmatpush1.msra.mxu0 0.0
          %1292 = vmatprep.subr.mxu0 0.0
          %1293 = vmatpush1.msra.mxu0 0.0
          %1294 = vmatprep.subr.mxu0 0.0
          %1295 = vmatpush1.msra.mxu0 0.0
          %1296 = vmatprep.subr.mxu0 0.0
          %1297 = vmatpush1.msra.mxu0 0.0
          %1298 = vmatprep.mubr.f32.mxu0 0.0
          %1299 = vmatmul.mubr.f32.gmra.mrb[0].mxu0 %v1232
          %v1300 = vpop.f32.mrb[0].mxu0
          %v1301 = vadd.f32 0.0, %v1300
          %v1302 = vpop.f32.mrb[0].mxu0
          %1303 = vdwg.mxu0
          %v1304 = vxor.u32 %v1227, 2147483648
          %v1305 = vmul.f32 %v1304, 1.442695
          %v1306 = vpow.pop %v1305
          %v1307 = vadd.f32 %v1306, 1.0
          %v1308 = vrcp.pop %v1307
          %v1309 = vmul.f32 1.0, %v1308
          %v1310 = vstv %s650
          %v1311 = vmul.f32 %v1309, %v1310
          %v1312 = vadd.f32 %v1311, 1.1
          %v1313 = vmul.f32 %v1312, %v1312
          %v1314 = vsub.f32 %v1313, 1.0
          %v1315 = vmax.f32 %v1301, 1e-08
          %v1316 = vrcp.pop %v1315
          %v1317 = vmul.f32 %v1314, %v1316
          %v1318 = vrsqrt.pop %v1317
          %v1319 = vmul.f32 %v1317, %v1318
          %vm1320 = vcmp.eq.f32.partialorder %v1317, inf
          %v1321 = vsel %vm1320, %v1317, %v1319
          %vm1322 = vcmp.eq.f32.partialorder %v1317, 0.0
          %v1323 = vand.u32 %v1317, 2147483648
          %v1324 = vsel %vm1322, %v1323, %v1321
          %v1326 = vsel %vm917, %v1324, 0
          %1328 = vmatprep.subr.mxu0 0.0
          %1329 = vmatpush1.msra.mxu0 %v923
          %1330 = vmatprep.subr.mxu0 0.0
          %1331 = vmatpush1.msra.mxu0 0.0
          %1332 = vmatprep.subr.mxu0 0.0
          %1333 = vmatpush1.msra.mxu0 0.0
          %1334 = vmatprep.subr.mxu0 0.0
          %1335 = vmatpush1.msra.mxu0 0.0
          %1336 = vmatprep.subr.mxu0 0.0
          %1337 = vmatpush1.msra.mxu0 0.0
          %1338 = vmatprep.subr.mxu0 0.0
          %1339 = vmatpush1.msra.mxu0 0.0
          %1340 = vmatprep.subr.mxu0 0.0
          %1341 = vmatpush1.msra.mxu0 0.0
          %1342 = vmatprep.subr.mxu0 0.0
          %1343 = vmatpush1.msra.mxu0 0.0
          %1344 = vmatprep.subr.mxu0 0.0
          %1345 = vmatpush1.msra.mxu0 0.0
          %1346 = vmatprep.subr.mxu0 0.0
          %1347 = vmatpush1.msra.mxu0 0.0
          %1348 = vmatprep.subr.mxu0 0.0
          %1349 = vmatpush1.msra.mxu0 0.0
          %1350 = vmatprep.subr.mxu0 0.0
          %1351 = vmatpush1.msra.mxu0 0.0
          %1352 = vmatprep.subr.mxu0 0.0
          %1353 = vmatpush1.msra.mxu0 0.0
          %1354 = vmatprep.subr.mxu0 0.0
          %1355 = vmatpush1.msra.mxu0 0.0
          %1356 = vmatprep.subr.mxu0 0.0
          %1357 = vmatpush1.msra.mxu0 0.0
          %1358 = vmatprep.subr.mxu0 0.0
          %1359 = vmatpush1.msra.mxu0 0.0
          %1360 = vmatprep.subr.mxu0 0.0
          %1361 = vmatpush1.msra.mxu0 0.0
          %1362 = vmatprep.subr.mxu0 0.0
          %1363 = vmatpush1.msra.mxu0 0.0
          %1364 = vmatprep.subr.mxu0 0.0
          %1365 = vmatpush1.msra.mxu0 0.0
          %1366 = vmatprep.subr.mxu0 0.0
          %1367 = vmatpush1.msra.mxu0 0.0
          %1368 = vmatprep.subr.mxu0 0.0
          %1369 = vmatpush1.msra.mxu0 0.0
          %1370 = vmatprep.subr.mxu0 0.0
          %1371 = vmatpush1.msra.mxu0 0.0
          %1372 = vmatprep.subr.mxu0 0.0
          %1373 = vmatpush1.msra.mxu0 0.0
          %1374 = vmatprep.subr.mxu0 0.0
          %1375 = vmatpush1.msra.mxu0 0.0
          %1376 = vmatprep.subr.mxu0 0.0
          %1377 = vmatpush1.msra.mxu0 0.0
          %1378 = vmatprep.subr.mxu0 0.0
          %1379 = vmatpush1.msra.mxu0 0.0
          %1380 = vmatprep.subr.mxu0 0.0
          %1381 = vmatpush1.msra.mxu0 0.0
          %1382 = vmatprep.subr.mxu0 0.0
          %1383 = vmatpush1.msra.mxu0 0.0
          %1384 = vmatprep.subr.mxu0 0.0
          %1385 = vmatpush1.msra.mxu0 0.0
          %1386 = vmatprep.subr.mxu0 0.0
          %1387 = vmatpush1.msra.mxu0 0.0
          %1388 = vmatprep.subr.mxu0 0.0
          %1389 = vmatpush1.msra.mxu0 0.0
          %1390 = vmatprep.subr.mxu0 0.0
          %1391 = vmatpush1.msra.mxu0 0.0
          %1392 = vmatprep.mubr.f32.mxu0 0.0
          %1393 = vmatmul.mubr.f32.gmra.mrb[0].mxu0 %v1326
          %v1394 = vpop.f32.mrb[0].mxu0
          %v1395 = vadd.f32 0.0, %v1394
          %v1396 = vpop.f32.mrb[0].mxu0
          %1397 = vdwg.mxu0
          %v1398 = vmul.f32 %v1154, %v1395
          %v1400 = vsel %vm917, %v1312, 0
          %1402 = vmatprep.subr.mxu0 0.0
          %1403 = vmatpush1.msra.mxu0 %v1000
          %1404 = vmatprep.subr.mxu0 0.0
          %1405 = vmatpush1.msra.mxu0 0.0
          %1406 = vmatprep.subr.mxu0 0.0
          %1407 = vmatpush1.msra.mxu0 0.0
          %1408 = vmatprep.subr.mxu0 0.0
          %1409 = vmatpush1.msra.mxu0 0.0
          %1410 = vmatprep.subr.mxu0 0.0
          %1411 = vmatpush1.msra.mxu0 0.0
          %1412 = vmatprep.subr.mxu0 0.0
          %1413 = vmatpush1.msra.mxu0 0.0
          %1414 = vmatprep.subr.mxu0 0.0
          %1415 = vmatpush1.msra.mxu0 0.0
          %1416 = vmatprep.subr.mxu0 0.0
          %1417 = vmatpush1.msra.mxu0 0.0
          %1418 = vmatprep.subr.mxu0 0.0
          %1419 = vmatpush1.msra.mxu0 0.0
          %1420 = vmatprep.subr.mxu0 0.0
          %1421 = vmatpush1.msra.mxu0 0.0
          %1422 = vmatprep.subr.mxu0 0.0
          %1423 = vmatpush1.msra.mxu0 0.0
          %1424 = vmatprep.subr.mxu0 0.0
          %1425 = vmatpush1.msra.mxu0 0.0
          %1426 = vmatprep.subr.mxu0 0.0
          %1427 = vmatpush1.msra.mxu0 0.0
          %1428 = vmatprep.subr.mxu0 0.0
          %1429 = vmatpush1.msra.mxu0 0.0
          %1430 = vmatprep.subr.mxu0 0.0
          %1431 = vmatpush1.msra.mxu0 0.0
          %1432 = vmatprep.subr.mxu0 0.0
          %1433 = vmatpush1.msra.mxu0 0.0
          %1434 = vmatprep.subr.mxu0 0.0
          %1435 = vmatpush1.msra.mxu0 0.0
          %1436 = vmatprep.subr.mxu0 0.0
          %1437 = vmatpush1.msra.mxu0 0.0
          %1438 = vmatprep.subr.mxu0 0.0
          %1439 = vmatpush1.msra.mxu0 0.0
          %1440 = vmatprep.subr.mxu0 0.0
          %1441 = vmatpush1.msra.mxu0 0.0
          %1442 = vmatprep.subr.mxu0 0.0
          %1443 = vmatpush1.msra.mxu0 0.0
          %1444 = vmatprep.subr.mxu0 0.0
          %1445 = vmatpush1.msra.mxu0 0.0
          %1446 = vmatprep.subr.mxu0 0.0
          %1447 = vmatpush1.msra.mxu0 0.0
          %1448 = vmatprep.subr.mxu0 0.0
          %1449 = vmatpush1.msra.mxu0 0.0
          %1450 = vmatprep.subr.mxu0 0.0
          %1451 = vmatpush1.msra.mxu0 0.0
          %1452 = vmatprep.subr.mxu0 0.0
          %1453 = vmatpush1.msra.mxu0 0.0
          %1454 = vmatprep.subr.mxu0 0.0
          %1455 = vmatpush1.msra.mxu0 0.0
          %1456 = vmatprep.subr.mxu0 0.0
          %1457 = vmatpush1.msra.mxu0 0.0
          %1458 = vmatprep.subr.mxu0 0.0
          %1459 = vmatpush1.msra.mxu0 0.0
          %1460 = vmatprep.subr.mxu0 0.0
          %1461 = vmatpush1.msra.mxu0 0.0
          %1462 = vmatprep.subr.mxu0 0.0
          %1463 = vmatpush1.msra.mxu0 0.0
          %1464 = vmatprep.subr.mxu0 0.0
          %1465 = vmatpush1.msra.mxu0 0.0
          %1466 = vmatprep.mubr.f32.mxu0 0.0
          %1467 = vmatmul.mubr.f32.gmra.mrb[0].mxu0 %v1400
          %v1468 = vpop.f32.mrb[0].mxu0
          %v1469 = vadd.f32 %v1398, %v1468
          %v1470 = vpop.f32.mrb[0].mxu0
          %1471 = vdwg.mxu0
          %v1472 = vld [vmem:[%s570] sm:$0xff]
          %v1473 = vld [vmem:[%s7] sm:$0xff]
          %v1474 = vld [vmem:[%s7 + $0x8] sm:$0xff]
          %v1475 = vld [vmem:[%s7 + $0x10] sm:$0xff]
          %v1476 = vld [vmem:[%s7 + $0x18] sm:$0xff]
          %v1477 = vld [vmem:[#allocation14] sm:$0x1]
          %v1479 = vlaneseq
          %v1480 = vshrl.u32 %v1479, 7
          %v1481 = vsub.s32 0, %v1480
          %v1482 = vrot.slane %v1477, %v1481
          %v1485 = vsel %vm675, %v1472, 0
          %1487 = vmatprep.subr.mxu0 0.0
          %1488 = vmatpush1.msra.mxu0 %v1473
          %1489 = vmatprep.subr.mxu0 0.0
          %1490 = vmatpush1.msra.mxu0 %v1474
          %1491 = vmatprep.subr.mxu0 0.0
          %1492 = vmatpush1.msra.mxu0 %v1475
          %1493 = vmatprep.subr.mxu0 0.0
          %1494 = vmatpush1.msra.mxu0 %v1476
          %1495 = vmatprep.subr.mxu0 0.0
          %1496 = vmatpush1.msra.mxu0 0.0
          %1497 = vmatprep.subr.mxu0 0.0
          %1498 = vmatpush1.msra.mxu0 0.0
          %1499 = vmatprep.subr.mxu0 0.0
          %1500 = vmatpush1.msra.mxu0 0.0
          %1501 = vmatprep.subr.mxu0 0.0
          %1502 = vmatpush1.msra.mxu0 0.0
          %1503 = vmatprep.subr.mxu0 0.0
          %1504 = vmatpush1.msra.mxu0 0.0
          %1505 = vmatprep.subr.mxu0 0.0
          %1506 = vmatpush1.msra.mxu0 0.0
          %1507 = vmatprep.subr.mxu0 0.0
          %1508 = vmatpush1.msra.mxu0 0.0
          %1509 = vmatprep.subr.mxu0 0.0
          %1510 = vmatpush1.msra.mxu0 0.0
          %1511 = vmatprep.subr.mxu0 0.0
          %1512 = vmatpush1.msra.mxu0 0.0
          %1513 = vmatprep.subr.mxu0 0.0
          %1514 = vmatpush1.msra.mxu0 0.0
          %1515 = vmatprep.subr.mxu0 0.0
          %1516 = vmatpush1.msra.mxu0 0.0
          %1517 = vmatprep.subr.mxu0 0.0
          %1518 = vmatpush1.msra.mxu0 0.0
          %1519 = vmatprep.subr.mxu0 0.0
          %1520 = vmatpush1.msra.mxu0 0.0
          %1521 = vmatprep.subr.mxu0 0.0
          %1522 = vmatpush1.msra.mxu0 0.0
          %1523 = vmatprep.subr.mxu0 0.0
          %1524 = vmatpush1.msra.mxu0 0.0
          %1525 = vmatprep.subr.mxu0 0.0
          %1526 = vmatpush1.msra.mxu0 0.0
          %1527 = vmatprep.subr.mxu0 0.0
          %1528 = vmatpush1.msra.mxu0 0.0
          %1529 = vmatprep.subr.mxu0 0.0
          %1530 = vmatpush1.msra.mxu0 0.0
          %1531 = vmatprep.subr.mxu0 0.0
          %1532 = vmatpush1.msra.mxu0 0.0
          %1533 = vmatprep.subr.mxu0 0.0
          %1534 = vmatpush1.msra.mxu0 0.0
          %1535 = vmatprep.subr.mxu0 0.0
          %1536 = vmatpush1.msra.mxu0 0.0
          %1537 = vmatprep.subr.mxu0 0.0
          %1538 = vmatpush1.msra.mxu0 0.0
          %1539 = vmatprep.subr.mxu0 0.0
          %1540 = vmatpush1.msra.mxu0 0.0
          %1541 = vmatprep.subr.mxu0 0.0
          %1542 = vmatpush1.msra.mxu0 0.0
          %1543 = vmatprep.subr.mxu0 0.0
          %1544 = vmatpush1.msra.mxu0 0.0
          %1545 = vmatprep.subr.mxu0 0.0
          %1546 = vmatpush1.msra.mxu0 0.0
          %1547 = vmatprep.subr.mxu0 0.0
          %1548 = vmatpush1.msra.mxu0 0.0
          %1549 = vmatprep.subr.mxu0 0.0
          %1550 = vmatpush1.msra.mxu0 0.0
          %1551 = vmatprep.mubr.f32.mxu0 0.0
          %1552 = vmatmul.mubr.f32.gmra.mrb[0].mxu0 %v1485
          %v1553 = vpop.f32.mrb[0].mxu0
          %v1554 = vadd.f32 %v1482, %v1553
          %v1555 = vpop.f32.mrb[0].mxu0
          %1556 = vdwg.mxu0
          %v1558 = vsel %vm675, %v1554, 0
          %1560 = vmatprep.subr.mxu0 0.0
          %1561 = vmatpush1.msra.mxu0 %v653
          %1562 = vmatprep.subr.mxu0 0.0
          %1563 = vmatpush1.msra.mxu0 %v654
          %1564 = vmatprep.subr.mxu0 0.0
          %1565 = vmatpush1.msra.mxu0 %v655
          %1566 = vmatprep.subr.mxu0 0.0
          %1567 = vmatpush1.msra.mxu0 %v656
          %1568 = vmatprep.subr.mxu0 0.0
          %1569 = vmatpush1.msra.mxu0 0.0
          %1570 = vmatprep.subr.mxu0 0.0
          %1571 = vmatpush1.msra.mxu0 0.0
          %1572 = vmatprep.subr.mxu0 0.0
          %1573 = vmatpush1.msra.mxu0 0.0
          %1574 = vmatprep.subr.mxu0 0.0
          %1575 = vmatpush1.msra.mxu0 0.0
          %1576 = vmatprep.subr.mxu0 0.0
          %1577 = vmatpush1.msra.mxu0 0.0
          %1578 = vmatprep.subr.mxu0 0.0
          %1579 = vmatpush1.msra.mxu0 0.0
          %1580 = vmatprep.subr.mxu0 0.0
          %1581 = vmatpush1.msra.mxu0 0.0
          %1582 = vmatprep.subr.mxu0 0.0
          %1583 = vmatpush1.msra.mxu0 0.0
          %1584 = vmatprep.subr.mxu0 0.0
          %1585 = vmatpush1.msra.mxu0 0.0
          %1586 = vmatprep.subr.mxu0 0.0
          %1587 = vmatpush1.msra.mxu0 0.0
          %1588 = vmatprep.subr.mxu0 0.0
          %1589 = vmatpush1.msra.mxu0 0.0
          %1590 = vmatprep.subr.mxu0 0.0
          %1591 = vmatpush1.msra.mxu0 0.0
          %1592 = vmatprep.subr.mxu0 0.0
          %1593 = vmatpush1.msra.mxu0 0.0
          %1594 = vmatprep.subr.mxu0 0.0
          %1595 = vmatpush1.msra.mxu0 0.0
          %1596 = vmatprep.subr.mxu0 0.0
          %1597 = vmatpush1.msra.mxu0 0.0
          %1598 = vmatprep.subr.mxu0 0.0
          %1599 = vmatpush1.msra.mxu0 0.0
          %1600 = vmatprep.subr.mxu0 0.0
          %1601 = vmatpush1.msra.mxu0 0.0
          %1602 = vmatprep.subr.mxu0 0.0
          %1603 = vmatpush1.msra.mxu0 0.0
          %1604 = vmatprep.subr.mxu0 0.0
          %1605 = vmatpush1.msra.mxu0 0.0
          %1606 = vmatprep.subr.mxu0 0.0
          %1607 = vmatpush1.msra.mxu0 0.0
          %1608 = vmatprep.subr.mxu0 0.0
          %1609 = vmatpush1.msra.mxu0 0.0
          %1610 = vmatprep.subr.mxu0 0.0
          %1611 = vmatpush1.msra.mxu0 0.0
          %1612 = vmatprep.subr.mxu0 0.0
          %1613 = vmatpush1.msra.mxu0 0.0
          %1614 = vmatprep.subr.mxu0 0.0
          %1615 = vmatpush1.msra.mxu0 0.0
          %1616 = vmatprep.subr.mxu0 0.0
          %1617 = vmatpush1.msra.mxu0 0.0
          %1618 = vmatprep.subr.mxu0 0.0
          %1619 = vmatpush1.msra.mxu0 0.0
          %1620 = vmatprep.subr.mxu0 0.0
          %1621 = vmatpush1.msra.mxu0 0.0
          %1622 = vmatprep.subr.mxu0 0.0
          %1623 = vmatpush1.msra.mxu0 0.0
          %1624 = vmatprep.mubr.f32.mxu0 0.0
          %1625 = vmatmul.mubr.f32.gmra.mrb[0].mxu0 %v1558
          %v1626 = vpop.f32.mrb[0].mxu0
          %v1627 = vadd.f32 0.0, %v1626
          %v1628 = vpop.f32.mrb[0].mxu0
          %1629 = vdwg.mxu0
          %v1630 = vmul.f32 %v1554, %v1554
          %v1632 = vsel %vm675, %v1630, 0
          %1634 = vmatprep.subr.mxu0 0.0
          %1635 = vmatpush1.msra.mxu0 %v657
          %1636 = vmatprep.subr.mxu0 0.0
          %1637 = vmatpush1.msra.mxu0 %v658
          %1638 = vmatprep.subr.mxu0 0.0
          %1639 = vmatpush1.msra.mxu0 %v659
          %1640 = vmatprep.subr.mxu0 0.0
          %1641 = vmatpush1.msra.mxu0 %v660
          %1642 = vmatprep.subr.mxu0 0.0
          %1643 = vmatpush1.msra.mxu0 0.0
          %1644 = vmatprep.subr.mxu0 0.0
          %1645 = vmatpush1.msra.mxu0 0.0
          %1646 = vmatprep.subr.mxu0 0.0
          %1647 = vmatpush1.msra.mxu0 0.0
          %1648 = vmatprep.subr.mxu0 0.0
          %1649 = vmatpush1.msra.mxu0 0.0
          %1650 = vmatprep.subr.mxu0 0.0
          %1651 = vmatpush1.msra.mxu0 0.0
          %1652 = vmatprep.subr.mxu0 0.0
          %1653 = vmatpush1.msra.mxu0 0.0
          %1654 = vmatprep.subr.mxu0 0.0
          %1655 = vmatpush1.msra.mxu0 0.0
          %1656 = vmatprep.subr.mxu0 0.0
          %1657 = vmatpush1.msra.mxu0 0.0
          %1658 = vmatprep.subr.mxu0 0.0
          %1659 = vmatpush1.msra.mxu0 0.0
          %1660 = vmatprep.subr.mxu0 0.0
          %1661 = vmatpush1.msra.mxu0 0.0
          %1662 = vmatprep.subr.mxu0 0.0
          %1663 = vmatpush1.msra.mxu0 0.0
          %1664 = vmatprep.subr.mxu0 0.0
          %1665 = vmatpush1.msra.mxu0 0.0
          %1666 = vmatprep.subr.mxu0 0.0
          %1667 = vmatpush1.msra.mxu0 0.0
          %1668 = vmatprep.subr.mxu0 0.0
          %1669 = vmatpush1.msra.mxu0 0.0
          %1670 = vmatprep.subr.mxu0 0.0
          %1671 = vmatpush1.msra.mxu0 0.0
          %1672 = vmatprep.subr.mxu0 0.0
          %1673 = vmatpush1.msra.mxu0 0.0
          %1674 = vmatprep.subr.mxu0 0.0
          %1675 = vmatpush1.msra.mxu0 0.0
          %1676 = vmatprep.subr.mxu0 0.0
          %1677 = vmatpush1.msra.mxu0 0.0
          %1678 = vmatprep.subr.mxu0 0.0
          %1679 = vmatpush1.msra.mxu0 0.0
          %1680 = vmatprep.subr.mxu0 0.0
          %1681 = vmatpush1.msra.mxu0 0.0
          %1682 = vmatprep.subr.mxu0 0.0
          %1683 = vmatpush1.msra.mxu0 0.0
          %1684 = vmatprep.subr.mxu0 0.0
          %1685 = vmatpush1.msra.mxu0 0.0
          %1686 = vmatprep.subr.mxu0 0.0
          %1687 = vmatpush1.msra.mxu0 0.0
          %1688 = vmatprep.subr.mxu0 0.0
          %1689 = vmatpush1.msra.mxu0 0.0
          %1690 = vmatprep.subr.mxu0 0.0
          %1691 = vmatpush1.msra.mxu0 0.0
          %1692 = vmatprep.subr.mxu0 0.0
          %1693 = vmatpush1.msra.mxu0 0.0
          %1694 = vmatprep.subr.mxu0 0.0
          %1695 = vmatpush1.msra.mxu0 0.0
          %1696 = vmatprep.subr.mxu0 0.0
          %1697 = vmatpush1.msra.mxu0 0.0
          %1698 = vmatprep.mubr.f32.mxu0 0.0
          %1699 = vmatmul.mubr.f32.gmra.mrb[0].mxu0 %v1632
          %v1700 = vpop.f32.mrb[0].mxu0
          %v1701 = vadd.f32 0.0, %v1700
          %v1702 = vpop.f32.mrb[0].mxu0
          %1703 = vdwg.mxu0
          %v1704 = vxor.u32 %v1627, 2147483648
          %v1705 = vmul.f32 %v1704, 1.442695
          %v1706 = vpow.pop %v1705
          %v1707 = vadd.f32 %v1706, 1.0
          %v1708 = vrcp.pop %v1707
          %v1709 = vmul.f32 1.0, %v1708
          %v1710 = vstv %s651
          %v1711 = vmul.f32 %v1709, %v1710
          %v1712 = vadd.f32 %v1711, 1.1
          %v1713 = vmul.f32 %v1712, %v1712
          %v1714 = vsub.f32 %v1713, 1.0
          %v1715 = vmax.f32 %v1701, 1e-08
          %v1716 = vrcp.pop %v1715
          %v1717 = vmul.f32 %v1714, %v1716
          %v1718 = vrsqrt.pop %v1717
          %v1719 = vmul.f32 %v1717, %v1718
          %vm1720 = vcmp.eq.f32.partialorder %v1717, inf
          %v1721 = vsel %vm1720, %v1717, %v1719
          %vm1722 = vcmp.eq.f32.partialorder %v1717, 0.0
          %v1723 = vand.u32 %v1717, 2147483648
          %v1724 = vsel %vm1722, %v1723, %v1721
          %v1726 = vsel %vm917, %v1724, 0
          %1728 = vmatprep.subr.mxu0 0.0
          %1729 = vmatpush1.msra.mxu0 %v923
          %1730 = vmatprep.subr.mxu0 0.0
          %1731 = vmatpush1.msra.mxu0 0.0
          %1732 = vmatprep.subr.mxu0 0.0
          %1733 = vmatpush1.msra.mxu0 0.0
          %1734 = vmatprep.subr.mxu0 0.0
          %1735 = vmatpush1.msra.mxu0 0.0
          %1736 = vmatprep.subr.mxu0 0.0
          %1737 = vmatpush1.msra.mxu0 0.0
          %1738 = vmatprep.subr.mxu0 0.0
          %1739 = vmatpush1.msra.mxu0 0.0
          %1740 = vmatprep.subr.mxu0 0.0
          %1741 = vmatpush1.msra.mxu0 0.0
          %1742 = vmatprep.subr.mxu0 0.0
          %1743 = vmatpush1.msra.mxu0 0.0
          %1744 = vmatprep.subr.mxu0 0.0
          %1745 = vmatpush1.msra.mxu0 0.0
          %1746 = vmatprep.subr.mxu0 0.0
          %1747 = vmatpush1.msra.mxu0 0.0
          %1748 = vmatprep.subr.mxu0 0.0
          %1749 = vmatpush1.msra.mxu0 0.0
          %1750 = vmatprep.subr.mxu0 0.0
          %1751 = vmatpush1.msra.mxu0 0.0
          %1752 = vmatprep.subr.mxu0 0.0
          %1753 = vmatpush1.msra.mxu0 0.0
          %1754 = vmatprep.subr.mxu0 0.0
          %1755 = vmatpush1.msra.mxu0 0.0
          %1756 = vmatprep.subr.mxu0 0.0
          %1757 = vmatpush1.msra.mxu0 0.0
          %1758 = vmatprep.subr.mxu0 0.0
          %1759 = vmatpush1.msra.mxu0 0.0
          %1760 = vmatprep.subr.mxu0 0.0
          %1761 = vmatpush1.msra.mxu0 0.0
          %1762 = vmatprep.subr.mxu0 0.0
          %1763 = vmatpush1.msra.mxu0 0.0
          %1764 = vmatprep.subr.mxu0 0.0
          %1765 = vmatpush1.msra.mxu0 0.0
          %1766 = vmatprep.subr.mxu0 0.0
          %1767 = vmatpush1.msra.mxu0 0.0
          %1768 = vmatprep.subr.mxu0 0.0
          %1769 = vmatpush1.msra.mxu0 0.0
          %1770 = vmatprep.subr.mxu0 0.0
          %1771 = vmatpush1.msra.mxu0 0.0
          %1772 = vmatprep.subr.mxu0 0.0
          %1773 = vmatpush1.msra.mxu0 0.0
          %1774 = vmatprep.subr.mxu0 0.0
          %1775 = vmatpush1.msra.mxu0 0.0
          %1776 = vmatprep.subr.mxu0 0.0
          %1777 = vmatpush1.msra.mxu0 0.0
          %1778 = vmatprep.subr.mxu0 0.0
          %1779 = vmatpush1.msra.mxu0 0.0
          %1780 = vmatprep.subr.mxu0 0.0
          %1781 = vmatpush1.msra.mxu0 0.0
          %1782 = vmatprep.subr.mxu0 0.0
          %1783 = vmatpush1.msra.mxu0 0.0
          %1784 = vmatprep.subr.mxu0 0.0
          %1785 = vmatpush1.msra.mxu0 0.0
          %1786 = vmatprep.subr.mxu0 0.0
          %1787 = vmatpush1.msra.mxu0 0.0
          %1788 = vmatprep.subr.mxu0 0.0
          %1789 = vmatpush1.msra.mxu0 0.0
          %1790 = vmatprep.subr.mxu0 0.0
          %1791 = vmatpush1.msra.mxu0 0.0
          %1792 = vmatprep.mubr.f32.mxu0 0.0
          %1793 = vmatmul.mubr.f32.gmra.mrb[0].mxu0 %v1726
          %v1794 = vpop.f32.mrb[0].mxu0
          %v1795 = vadd.f32 0.0, %v1794
          %v1796 = vpop.f32.mrb[0].mxu0
          %1797 = vdwg.mxu0
          %v1798 = vmul.f32 %v1554, %v1795
          %v1800 = vsel %vm917, %v1712, 0
          %1802 = vmatprep.subr.mxu0 0.0
          %1803 = vmatpush1.msra.mxu0 %v1000
          %1804 = vmatprep.subr.mxu0 0.0
          %1805 = vmatpush1.msra.mxu0 0.0
          %1806 = vmatprep.subr.mxu0 0.0
          %1807 = vmatpush1.msra.mxu0 0.0
          %1808 = vmatprep.subr.mxu0 0.0
          %1809 = vmatpush1.msra.mxu0 0.0
          %1810 = vmatprep.subr.mxu0 0.0
          %1811 = vmatpush1.msra.mxu0 0.0
          %1812 = vmatprep.subr.mxu0 0.0
          %1813 = vmatpush1.msra.mxu0 0.0
          %1814 = vmatprep.subr.mxu0 0.0
          %1815 = vmatpush1.msra.mxu0 0.0
          %1816 = vmatprep.subr.mxu0 0.0
          %1817 = vmatpush1.msra.mxu0 0.0
          %1818 = vmatprep.subr.mxu0 0.0
          %1819 = vmatpush1.msra.mxu0 0.0
          %1820 = vmatprep.subr.mxu0 0.0
          %1821 = vmatpush1.msra.mxu0 0.0
          %1822 = vmatprep.subr.mxu0 0.0
          %1823 = vmatpush1.msra.mxu0 0.0
          %1824 = vmatprep.subr.mxu0 0.0
          %1825 = vmatpush1.msra.mxu0 0.0
          %1826 = vmatprep.subr.mxu0 0.0
          %1827 = vmatpush1.msra.mxu0 0.0
          %1828 = vmatprep.subr.mxu0 0.0
          %1829 = vmatpush1.msra.mxu0 0.0
          %1830 = vmatprep.subr.mxu0 0.0
          %1831 = vmatpush1.msra.mxu0 0.0
          %1832 = vmatprep.subr.mxu0 0.0
          %1833 = vmatpush1.msra.mxu0 0.0
          %1834 = vmatprep.subr.mxu0 0.0
          %1835 = vmatpush1.msra.mxu0 0.0
          %1836 = vmatprep.subr.mxu0 0.0
          %1837 = vmatpush1.msra.mxu0 0.0
          %1838 = vmatprep.subr.mxu0 0.0
          %1839 = vmatpush1.msra.mxu0 0.0
          %1840 = vmatprep.subr.mxu0 0.0
          %1841 = vmatpush1.msra.mxu0 0.0
          %1842 = vmatprep.subr.mxu0 0.0
          %1843 = vmatpush1.msra.mxu0 0.0
          %1844 = vmatprep.subr.mxu0 0.0
          %1845 = vmatpush1.msra.mxu0 0.0
          %1846 = vmatprep.subr.mxu0 0.0
          %1847 = vmatpush1.msra.mxu0 0.0
          %1848 = vmatprep.subr.mxu0 0.0
          %1849 = vmatpush1.msra.mxu0 0.0
          %1850 = vmatprep.subr.mxu0 0.0
          %1851 = vmatpush1.msra.mxu0 0.0
          %1852 = vmatprep.subr.mxu0 0.0
          %1853 = vmatpush1.msra.mxu0 0.0
          %1854 = vmatprep.subr.mxu0 0.0
          %1855 = vmatpush1.msra.mxu0 0.0
          %1856 = vmatprep.subr.mxu0 0.0
          %1857 = vmatpush1.msra.mxu0 0.0
          %1858 = vmatprep.subr.mxu0 0.0
          %1859 = vmatpush1.msra.mxu0 0.0
          %1860 = vmatprep.subr.mxu0 0.0
          %1861 = vmatpush1.msra.mxu0 0.0
          %1862 = vmatprep.subr.mxu0 0.0
          %1863 = vmatpush1.msra.mxu0 0.0
          %1864 = vmatprep.subr.mxu0 0.0
          %1865 = vmatpush1.msra.mxu0 0.0
          %1866 = vmatprep.mubr.f32.mxu0 0.0
          %1867 = vmatmul.mubr.f32.gmra.mrb[0].mxu0 %v1800
          %v1868 = vpop.f32.mrb[0].mxu0
          %v1869 = vadd.f32 %v1798, %v1868
          %v1870 = vpop.f32.mrb[0].mxu0
          %1871 = vdwg.mxu0
          %vm1872 = vcmask 257024
          %v1873 = vsel %vm1872, %v661, 0.0
          %v1874 = vrot.slane %v1873, 4
          %v1875 = vadd.f32 %v1873, %v1874
          %v1876 = vrot.slane %v1875, 2
          %v1877 = vadd.f32 %v1875, %v1876
          %v1878 = vrot.slane %v1877, 1
          %v1879 = vadd.f32 %v1877, %v1878
          %v1880 = vmul.f32 %v1879, 2.0
          %v1881 = vsub.f32 1.0, %v1880
          %s1882 = smul.f32 %s652, 2.0
          %v1883 = vstv %s1882
          %v1884 = vmul.f32 %v1881, %v1883
          %v1885 = vmul.f32 %v1869, %v1884
          %vm1886 = vcmask 64512
          %1887 = vst.msk [vmem:[#allocation2] sm:$0xff] %vm1886, %v1885
          %1888 = vst.msk [vmem:[#allocation3] sm:$0xff] %vm1886, %v1069
          %1889 = vst.msk [vmem:[#allocation4] sm:$0xff] %vm1886, %v1469
          %1891 = vrot.lane.b32.xlu0 %v1885, 120
          %v1892 = vpop.permute.xlu0 %1891
          %s1894 = scalar_lea.vmem [#allocation2], 8
          %1895 = vst.msk [vmem:[%s1894] sm:$0xff] %vm1886, %v1892
          %1897 = vrot.lane.b32.xlu0 %v1069, 120
          %v1898 = vpop.permute.xlu0 %1897
          %s1900 = scalar_lea.vmem [#allocation3], 8
          %1901 = vst.msk [vmem:[%s1900] sm:$0xff] %vm1886, %v1898
          %1903 = vrot.lane.b32.xlu0 %v1469, 120
          %v1904 = vpop.permute.xlu0 %1903
          %s1906 = scalar_lea.vmem [#allocation4], 8
          %1907 = vst.msk [vmem:[%s1906] sm:$0xff] %vm1886, %v1904
          %1908 = vrot.lane.b32.xlu0 %v1885, 112
          %v1909 = vpop.permute.xlu0 %1908
          %s1911 = scalar_lea.vmem [#allocation2], 16
          %1912 = vst.msk [vmem:[%s1911] sm:$0xff] %vm1886, %v1909
          %1913 = vrot.lane.b32.xlu0 %v1069, 112
          %v1914 = vpop.permute.xlu0 %1913
          %s1916 = scalar_lea.vmem [#allocation3], 16
          %1917 = vst.msk [vmem:[%s1916] sm:$0xff] %vm1886, %v1914
          %1918 = vrot.lane.b32.xlu0 %v1469, 112
          %v1919 = vpop.permute.xlu0 %1918
          %s1921 = scalar_lea.vmem [#allocation4], 16
          %1922 = vst.msk [vmem:[%s1921] sm:$0xff] %vm1886, %v1919
          %1923 = vrot.lane.b32.xlu0 %v1885, 104
          %v1924 = vpop.permute.xlu0 %1923
          %s1926 = scalar_lea.vmem [#allocation2], 24
          %1927 = vst.msk [vmem:[%s1926] sm:$0xff] %vm1886, %v1924
          %1928 = vrot.lane.b32.xlu0 %v1069, 104
          %v1929 = vpop.permute.xlu0 %1928
          %s1931 = scalar_lea.vmem [#allocation3], 24
          %1932 = vst.msk [vmem:[%s1931] sm:$0xff] %vm1886, %v1929
          %1933 = vrot.lane.b32.xlu0 %v1469, 104
          %v1934 = vpop.permute.xlu0 %1933
          %s1936 = scalar_lea.vmem [#allocation4], 24
          %1937 = vst.msk [vmem:[%s1936] sm:$0xff] %vm1886, %v1934
        $region104: #{tpu_custom_call.1} parent=75 // pred_fallthru
          _
        %s1938 = smul.u32 %s46, 8
        %s1939 = scalar_lea.vmem [#allocation2], %s1938
        %v1940 = vld [vmem:[%s1939] sm:$0xff]
        %s1941 = scalar_lea.vmem [#allocation3], %s1938
        %v1942 = vld [vmem:[%s1941] sm:$0xff]
        %s1943 = scalar_lea.vmem [#allocation4], %s1938
        %v1944 = vld [vmem:[%s1943] sm:$0xff]
        %vm1945 = vcmask 64512
        %v1947 = vsel %vm1945, %v1940, 0
        %v1950 = vsel %vm1945, %v1942, 0
        %1952 = vmatprep.subr.mxu0 0.0
        %1953 = vmatpush1.xpose.msra.mxu0 %v1950
        %1954 = vmatprep.subr.mxu0 0.0
        %1955 = vmatpush1.xpose.msra.mxu0 0.0
        %1956 = vmatprep.subr.mxu0 0.0
        %1957 = vmatpush1.xpose.msra.mxu0 0.0
        %1958 = vmatprep.subr.mxu0 0.0
        %1959 = vmatpush1.xpose.msra.mxu0 0.0
        %1960 = vmatprep.subr.mxu0 0.0
        %1961 = vmatpush1.xpose.msra.mxu0 0.0
        %1962 = vmatprep.subr.mxu0 0.0
        %1963 = vmatpush1.xpose.msra.mxu0 0.0
        %1964 = vmatprep.subr.mxu0 0.0
        %1965 = vmatpush1.xpose.msra.mxu0 0.0
        %1966 = vmatprep.subr.mxu0 0.0
        %1967 = vmatpush1.xpose.msra.mxu0 0.0
        %1968 = vmatprep.subr.mxu0 0.0
        %1969 = vmatpush1.xpose.msra.mxu0 0.0
        %1970 = vmatprep.subr.mxu0 0.0
        %1971 = vmatpush1.xpose.msra.mxu0 0.0
        %1972 = vmatprep.subr.mxu0 0.0
        %1973 = vmatpush1.xpose.msra.mxu0 0.0
        %1974 = vmatprep.subr.mxu0 0.0
        %1975 = vmatpush1.xpose.msra.mxu0 0.0
        %1976 = vmatprep.subr.mxu0 0.0
        %1977 = vmatpush1.xpose.msra.mxu0 0.0
        %1978 = vmatprep.subr.mxu0 0.0
        %1979 = vmatpush1.xpose.msra.mxu0 0.0
        %1980 = vmatprep.subr.mxu0 0.0
        %1981 = vmatpush1.xpose.msra.mxu0 0.0
        %1982 = vmatprep.subr.mxu0 0.0
        %1983 = vmatpush1.xpose.msra.mxu0 0.0
        %1984 = vmatprep.subr.mxu0 0.0
        %1985 = vmatpush1.xpose.msra.mxu0 0.0
        %1986 = vmatprep.subr.mxu0 0.0
        %1987 = vmatpush1.xpose.msra.mxu0 0.0
        %1988 = vmatprep.subr.mxu0 0.0
        %1989 = vmatpush1.xpose.msra.mxu0 0.0
        %1990 = vmatprep.subr.mxu0 0.0
        %1991 = vmatpush1.xpose.msra.mxu0 0.0
        %1992 = vmatprep.subr.mxu0 0.0
        %1993 = vmatpush1.xpose.msra.mxu0 0.0
        %1994 = vmatprep.subr.mxu0 0.0
        %1995 = vmatpush1.xpose.msra.mxu0 0.0
        %1996 = vmatprep.subr.mxu0 0.0
        %1997 = vmatpush1.xpose.msra.mxu0 0.0
        %1998 = vmatprep.subr.mxu0 0.0
        %1999 = vmatpush1.xpose.msra.mxu0 0.0
        %2000 = vmatprep.subr.mxu0 0.0
        %2001 = vmatpush1.xpose.msra.mxu0 0.0
        %2002 = vmatprep.subr.mxu0 0.0
        %2003 = vmatpush1.xpose.msra.mxu0 0.0
        %2004 = vmatprep.subr.mxu0 0.0
        %2005 = vmatpush1.xpose.msra.mxu0 0.0
        %2006 = vmatprep.subr.mxu0 0.0
        %2007 = vmatpush1.xpose.msra.mxu0 0.0
        %2008 = vmatprep.subr.mxu0 0.0
        %2009 = vmatpush1.xpose.msra.mxu0 0.0
        %2010 = vmatprep.subr.mxu0 0.0
        %2011 = vmatpush1.xpose.msra.mxu0 0.0
        %2012 = vmatprep.subr.mxu0 0.0
        %2013 = vmatpush1.xpose.msra.mxu0 0.0
        %2014 = vmatprep.subr.mxu0 0.0
        %2015 = vmatpush1.xpose.msra.mxu0 0.0
        %2016 = vmatprep.mubr.f32.mxu0 0.0
        %2017 = vmatmul.mubr.f32.gmra.mrb[0].mxu0 %v1947
        %v2018 = vpop.f32.mrb[0].mxu0
        %v2019 = vadd.f32 0.0, %v2018
        %v2020 = vpop.f32.mrb[0].mxu0
        %2021 = vdwg.mxu0
        %v2022 = vsel %vm1945, %v2019, -inf
        %2023 = vmax.xlane.f32.xlu0 %v2022
        %v2024 = vpop.xlane.xlu0 %2023
        %v2025 = vsub.f32 %v2019, %v2024
        %v2026 = vmul.f32 %v2025, 1.442695
        %v2027 = vpow.pop %v2026
        %v2028 = vsel %vm1945, %v2027, 0.0
        %2029 = vadd.xlane.f32.xlu0 %v2028
        %v2030 = vpop.xlane.xlu0 %2029
        %v2031 = vrcp.pop %v2030
        %v2032 = vmul.f32 %v2027, %v2031
        %2033 = vst.msk [vmem:[%s644] sm:$0xff] %vm1945, %v2032
        %v2035 = vsel %vm1945, %v2032, 0
        %2037 = vmatprep.subr.mxu0 0.0
        %2038 = vmatpush1.msra.mxu0 %v1944
        %2039 = vmatprep.subr.mxu0 0.0
        %2040 = vmatpush1.msra.mxu0 0.0
        %2041 = vmatprep.subr.mxu0 0.0
        %2042 = vmatpush1.msra.mxu0 0.0
        %2043 = vmatprep.subr.mxu0 0.0
        %2044 = vmatpush1.msra.mxu0 0.0
        %2045 = vmatprep.subr.mxu0 0.0
        %2046 = vmatpush1.msra.mxu0 0.0
        %2047 = vmatprep.subr.mxu0 0.0
        %2048 = vmatpush1.msra.mxu0 0.0
        %2049 = vmatprep.subr.mxu0 0.0
        %2050 = vmatpush1.msra.mxu0 0.0
        %2051 = vmatprep.subr.mxu0 0.0
        %2052 = vmatpush1.msra.mxu0 0.0
        %2053 = vmatprep.subr.mxu0 0.0
        %2054 = vmatpush1.msra.mxu0 0.0
        %2055 = vmatprep.subr.mxu0 0.0
        %2056 = vmatpush1.msra.mxu0 0.0
        %2057 = vmatprep.subr.mxu0 0.0
        %2058 = vmatpush1.msra.mxu0 0.0
        %2059 = vmatprep.subr.mxu0 0.0
        %2060 = vmatpush1.msra.mxu0 0.0
        %2061 = vmatprep.subr.mxu0 0.0
        %2062 = vmatpush1.msra.mxu0 0.0
        %2063 = vmatprep.subr.mxu0 0.0
        %2064 = vmatpush1.msra.mxu0 0.0
        %2065 = vmatprep.subr.mxu0 0.0
        %2066 = vmatpush1.msra.mxu0 0.0
        %2067 = vmatprep.subr.mxu0 0.0
        %2068 = vmatpush1.msra.mxu0 0.0
        %2069 = vmatprep.subr.mxu0 0.0
        %2070 = vmatpush1.msra.mxu0 0.0
        %2071 = vmatprep.subr.mxu0 0.0
        %2072 = vmatpush1.msra.mxu0 0.0
        %2073 = vmatprep.subr.mxu0 0.0
        %2074 = vmatpush1.msra.mxu0 0.0
        %2075 = vmatprep.subr.mxu0 0.0
        %2076 = vmatpush1.msra.mxu0 0.0
        %2077 = vmatprep.subr.mxu0 0.0
        %2078 = vmatpush1.msra.mxu0 0.0
        %2079 = vmatprep.subr.mxu0 0.0
        %2080 = vmatpush1.msra.mxu0 0.0
        %2081 = vmatprep.subr.mxu0 0.0
        %2082 = vmatpush1.msra.mxu0 0.0
        %2083 = vmatprep.subr.mxu0 0.0
        %2084 = vmatpush1.msra.mxu0 0.0
        %2085 = vmatprep.subr.mxu0 0.0
        %2086 = vmatpush1.msra.mxu0 0.0
        %2087 = vmatprep.subr.mxu0 0.0
        %2088 = vmatpush1.msra.mxu0 0.0
        %2089 = vmatprep.subr.mxu0 0.0
        %2090 = vmatpush1.msra.mxu0 0.0
        %2091 = vmatprep.subr.mxu0 0.0
        %2092 = vmatpush1.msra.mxu0 0.0
        %2093 = vmatprep.subr.mxu0 0.0
        %2094 = vmatpush1.msra.mxu0 0.0
        %2095 = vmatprep.subr.mxu0 0.0
        %2096 = vmatpush1.msra.mxu0 0.0
        %2097 = vmatprep.subr.mxu0 0.0
        %2098 = vmatpush1.msra.mxu0 0.0
        %2099 = vmatprep.subr.mxu0 0.0
        %2100 = vmatpush1.msra.mxu0 0.0
        %2101 = vmatprep.mubr.f32.mxu0 0.0
        %2102 = vmatmul.mubr.f32.gmra.mrb[0].mxu0 %v2035
        %v2103 = vpop.f32.mrb[0].mxu0
        %v2104 = vadd.f32 0.0, %v2103
        %v2105 = vpop.f32.mrb[0].mxu0
        %2106 = vdwg.mxu0
        %v2107 = vlaneseq
        %v2108 = vand.u32 %v2107, 127
        %vm2109 = vcmp.eq.s32.totalorder %v2108, 0
        %v2110 = vsel %vm2109, -1.0, 1.0
        %v2111 = vmul.f32 %v2110, %v2104
        %v2112 = vmul.f32 %v2111, %v2104
        %v2113 = vsel %vm1945, %v2112, 0.0
        %2114 = vadd.xlane.f32.xlu0 %v2113
        %v2115 = vpop.xlane.xlu0 %2114
        %v2116 = vand.u32 2147483647, %v2115
        %v2117 = vmax.f32 %v2116, 1e-08
        %v2118 = vrsqrt.pop %v2117
        %v2119 = vmul.f32 %v2104, %v2118
        // Predicated region
        $region105: #{tpu_custom_call.1} parent=75 // pred_check
          %p2120 = pneg %p645
        $region106: #{tpu_custom_call.1} parent=75 // pred_check_branch
          %2122 = sbr.rel (%p2120) target = $region108
        $region107: #{tpu_custom_call.1} parent=75 // pred_region
          %2123 = vst.msk [vmem:[%s637] sm:$0xff] %vm1945, %v2119
        $region108: #{tpu_custom_call.1} parent=75 // pred_fallthru
          _
        %p2124 = scmp.eq.s32.totalorder %s46, 1
        // Predicated region
        $region109: #{tpu_custom_call.1} parent=75 // pred_check
          %p2125 = pneg %p2124
        $region110: #{tpu_custom_call.1} parent=75 // pred_check_branch
          %2127 = sbr.rel (%p2125) target = $region112
        $region111: #{tpu_custom_call.1} parent=75 // pred_region
          %2129 = vrot.lane.b32.xlu0 %v2119, 8
          %v2130 = vpop.permute.xlu0 %2129
          %vm2132 = vcmask 130112
          %2133 = vst.msk [vmem:[%s637] sm:$0xff] %vm2132, %v2130
        $region112: #{tpu_custom_call.1} parent=75 // pred_fallthru
          _
        %p2134 = scmp.eq.s32.totalorder %s46, 2
        // Predicated region
        $region113: #{tpu_custom_call.1} parent=75 // pred_check
          %p2135 = pneg %p2134
        $region114: #{tpu_custom_call.1} parent=75 // pred_check_branch
          %2137 = sbr.rel (%p2135) target = $region116
        $region115: #{tpu_custom_call.1} parent=75 // pred_region
          %2139 = vrot.lane.b32.xlu0 %v2119, 16
          %v2140 = vpop.permute.xlu0 %2139
          %vm2142 = vcmask 195712
          %2143 = vst.msk [vmem:[%s637] sm:$0xff] %vm2142, %v2140
        $region116: #{tpu_custom_call.1} parent=75 // pred_fallthru
          _
        %p2144 = scmp.eq.s32.totalorder %s46, 3
        // Predicated region
        $region117: #{tpu_custom_call.1} parent=75 // pred_check
          %p2145 = pneg %p2144
        $region118: #{tpu_custom_call.1} parent=75 // pred_check_branch
          %2147 = sbr.rel (%p2145) target = $region120
        $region119: #{tpu_custom_call.1} parent=75 // pred_region
          %2149 = vrot.lane.b32.xlu0 %v2119, 24
          %v2150 = vpop.permute.xlu0 %2149
          %vm2152 = vcmask 261312
          %2153 = vst.msk [vmem:[%s637] sm:$0xff] %vm2152, %v2150
        $region120: #{tpu_custom_call.1} parent=75 // pred_fallthru
          _
        %s2154 = sand.u32 %s370, 1
        %s2155 = scalar_lea.sflag [#allocation7], %s2154
        %s2156 = sand.u32 %s370, 1
        %s2157 = smul.addr %s2156, 8
        %s2158 = scalar_lea.vmem [#allocation16], %s2157
        %s2159 = sand.u32 %s398, 1
        %s2160 = scalar_lea.sflag [#allocation18], %s2159
        %s2161 = sand.u32 %s398, 1
        %s2162 = smul.addr %s2161, 8
        %s2163 = scalar_lea.vmem [#allocation17], %s2162
        // Predicated region
        $region121: #{tpu_custom_call.1} parent=75 // pred_check
          %p2164 = pneg %p380
        $region122: #{tpu_custom_call.1} parent=75 // pred_check_branch
          %2166 = sbr.rel (%p2164) target = $region124
        $region123: #{tpu_custom_call.1} parent=75 // pred_region
          %s2168 = ssub.s32 128, 128
          %2169 = vsyncadd %s2155, %s2168
          %s2170 = smul.addr %s45, 128
          %s2171 = scalar_lea.hbm %s14, %s2170
          %s2173 = sshll.u32 %s2158, 4
          %s2174 = int_to_ptr.vmem [resolvable:$true] %s2173
          %2176 = dma.vmem_to_hbm [thread:$0]  %s2174, 128, %s2171, %s2155
        $region124: #{tpu_custom_call.1} parent=75 // pred_fallthru
          _
        // Predicated region
        $region125: #{tpu_custom_call.1} parent=75 // pred_check
          %p2177 = pneg %p408
        $region126: #{tpu_custom_call.1} parent=75 // pred_check_branch
          %2179 = sbr.rel (%p2177) target = $region128
        $region127: #{tpu_custom_call.1} parent=75 // pred_region
          %s2181 = ssub.s32 128, 128
          %2182 = vsyncadd %s2160, %s2181
          %s2183 = smul.addr %s45, 4
          %s2184 = sadd.s32 %s46, %s2183
          %s2185 = smul.addr %s2184, 128
          %s2186 = scalar_lea.hbm %s15, %s2185
          %s2188 = sshll.u32 %s2163, 4
          %s2189 = int_to_ptr.vmem [resolvable:$true] %s2188
          %2191 = dma.vmem_to_hbm [thread:$0]  %s2189, 128, %s2186, %s2160
        $region128: #{tpu_custom_call.1} parent=75 // pred_fallthru
          _
      $region76: #{tpu_custom_call.1} parent=5 // pred_fallthru
        _
      %p2192 = scmp.le.s32.totalorder 2, %s36
      // Predicated region
      $region129: #{tpu_custom_call.1} parent=5 // pred_check
        %p2193 = pneg %p2192
      $region130: #{tpu_custom_call.1} parent=5 // pred_check_branch
        %2195 = sbr.rel (%p2193) target = $region132
      $region131: #{tpu_custom_call.1} parent=5 // pred_region
        %s2196 = ssub.s32 %s36, 2
        // Predicated region
        $region133: #{tpu_custom_call.1} parent=131 // pred_check
          %p2197 = pneg %p386
        $region134: #{tpu_custom_call.1} parent=131 // pred_check_branch
          %2199 = sbr.rel (%p2197) target = $region136
        $region135: #{tpu_custom_call.1} parent=131 // pred_region
          %s2200 = sand.u32 %s371, 1
          %s2201 = scalar_lea.sflag [#allocation7], %s2200
          %s2202 = sand.u32 %s371, 1
          %s2203 = smul.addr %s2202, 8
          %s2204 = scalar_lea.vmem [#allocation16], %s2203
          %2205 = dma.done %s2201, 128
        $region136: #{tpu_custom_call.1} parent=131 // pred_fallthru
          _
        // Predicated region
        $region137: #{tpu_custom_call.1} parent=131 // pred_check
          %p2206 = pneg %p414
        $region138: #{tpu_custom_call.1} parent=131 // pred_check_branch
          %2208 = sbr.rel (%p2206) target = $region140
        $region139: #{tpu_custom_call.1} parent=131 // pred_region
          %s2209 = sand.u32 %s399, 1
          %s2210 = scalar_lea.sflag [#allocation18], %s2209
          %s2211 = sand.u32 %s399, 1
          %s2212 = smul.addr %s2211, 8
          %s2213 = scalar_lea.vmem [#allocation17], %s2212
          %2214 = dma.done %s2210, 128
        $region140: #{tpu_custom_call.1} parent=131 // pred_fallthru
          _
      $region132: #{tpu_custom_call.1} parent=5 // pred_fallthru
        _
    $region6: #{tpu_custom_call.1} parent=1 // loop_footer
      %s40 = sadd.s32 1, %s36
    $region7: #{tpu_custom_call.1} parent=1 // loop_footer_branch
      %35 = sbr.rel target = $region3
    $region8: #{tpu_custom_call.1} parent=1 // loop_exit
      _
    %2215 = vsyncpa [#allocation6], 1
    %s2216 = scalar_lea.sflag [#allocation6], 1
    %2217 = vsyncpa %s2216, 1
    %2218 = vsyncpa [#allocation10], 1
    %s2219 = scalar_lea.sflag [#allocation10], 1
    %2220 = vsyncpa %s2219, 1
    %2221 = vsyncpa [#allocation13], 1
    %2222 = vsyncpa [#allocation7], 1
    %s2223 = scalar_lea.sflag [#allocation7], 1
    %2224 = vsyncpa %s2223, 1
    %2225 = vsyncpa [#allocation18], 1
    %s2226 = scalar_lea.sflag [#allocation18], 1
    %2227 = vsyncpa %s2226, 1
    %2228 = vsyncpa [#allocation8], 1
    %s2229 = scalar_lea.sflag [#allocation8], 1
    %2230 = vsyncpa %s2229, 1

</llo_original>
